<compile_context>
chip_gen: v5e
topology: v5e:2x2
jax: 0.10.0
libtpu: 0.0.40
codegen_flags: <defaults>
</compile_context>

<pallas_src>
import functools
import math

import jax
import jax.numpy as jnp
from jax.experimental import pallas as pl
from jax.experimental.pallas import tpu as pltpu

LANE = 128  # TPU lane width; each gate is zero-padded to a multiple of this.


def _round_up(x, m):
    return (x + m - 1) // m * m


# ----------------------------- Pallas kernel --------------------------------

def _gru_kernel(num_layer, hp, tc, total_t, mask_tail, *refs):
    """One grid step = `tc` timesteps for one batch tile, all layers.

    refs layout:
      inputs : gx0   (tc, Bt, 3*hp) bf16  precomputed layer-0 x-gates (+ biases)
               h0    (L,  Bt, hp)   f32
               w_hh0 (hp, 3*hp) f32, b_hn0 (1, hp) f32
               per layer l>=1: w_ih (hp,3hp) f32, w_hh (hp,3hp) f32,
                               b_rzn (1,3hp) f32, b_hn (1,hp) f32
               w_dense (hp, O) f32, b_dense (1, O) f32
      outputs: out (Bt, O) f32
               ht  (L, Bt, hp) f32  (also the resident hidden-state accumulator)
    """
    n_in = 4 + 4 * (num_layer - 1) + 2
    gx0_ref, h0_ref, w_hh0_ref, b_hn0_ref = refs[:4]
    layer_refs = refs[4:4 + 4 * (num_layer - 1)]
    wd_ref, bd_ref = refs[n_in - 2], refs[n_in - 1]
    out_ref, ht_ref = refs[n_in], refs[n_in + 1]

    c = pl.program_id(1)                  # time-chunk index (innermost axis)
    bt = ht_ref.shape[1]

    @pl.when(c == 0)
    def _():
        ht_ref[...] = h0_ref[...]

    # Per-layer refs; bias broadcasts hoisted once per chunk (JAX does not CSE
    # broadcast_in_dim, so leaving them inline repeats them every timestep).
    w_hh = [w_hh0_ref]
    w_ih = [None]
    b_rzn = [None]
    b_hn = [jnp.broadcast_to(b_hn0_ref[...], (bt, hp))]
    for l in range(1, num_layer):
        w_ih_r, w_hh_r, b_rzn_r, b_hn_r = layer_refs[4 * (l - 1):4 * l]
        w_ih.append(w_ih_r)
        w_hh.append(w_hh_r)
        b_rzn.append(jnp.broadcast_to(b_rzn_r[...], (bt, 3 * hp)))
        b_hn.append(jnp.broadcast_to(b_hn_r[...], (bt, hp)))

    # Hidden state carried in registers across the whole chunk: one VMEM read
    # here, one write at the end, no per-timestep ht_ref round trips.
    h = [ht_ref[l] for l in range(num_layer)]

    def cell(gx, gh_l, h_prev, b_hn_l):
        # gx already contains the input projection + (b_ir+b_hr | b_iz+b_hz | b_in).
        r = jax.nn.sigmoid(gx[:, 0 * hp:1 * hp] + gh_l[:, 0 * hp:1 * hp])
        z = jax.nn.sigmoid(gx[:, 1 * hp:2 * hp] + gh_l[:, 1 * hp:2 * hp])
        n = jnp.tanh(gx[:, 2 * hp:3 * hp] + r * (gh_l[:, 2 * hp:3 * hp] + b_hn_l))
        return z * h_prev + (1.0 - z) * n

    # Statically unrolled time loop (tc is a small compile-time constant, so all
    # slice offsets stay static for Mosaic).
    for ts in range(tc):
        # All h-dependent matmuls for this timestep depend only on the PREVIOUS
        # timestep's state -> issue them up front so later layers' MXU latency
        # hides under earlier layers' gate nonlinearities.
        gh = [jnp.dot(h[l], w_hh[l][...], preferred_element_type=jnp.float32)
              for l in range(num_layer)]

        # ---- layer 0: input projection precomputed in the wrapper (bf16 slab) ----
        gx0 = gx0_ref[ts].astype(jnp.float32)
        h_new = [cell(gx0, gh[0], h[0], b_hn[0])]
        inp = h_new[0]
        # ---- layers 1 .. L-1 ----
        for l in range(1, num_layer):
            gx = jnp.dot(inp, w_ih[l][...],
                         preferred_element_type=jnp.float32) + b_rzn[l]
            h_new.append(cell(gx, gh[l], h[l], b_hn[l]))
            inp = h_new[-1]

        if mask_tail:
            valid = (c * tc + ts) < total_t   # hold state on padded tail steps
            h = [jnp.where(valid, h_new[l], h[l]) for l in range(num_layer)]
        else:
            h = h_new

    for l in range(num_layer):
        ht_ref[l] = h[l]

    @pl.when(c == pl.num_programs(1) - 1)
    def _():
        # dense(h_top at the final timestep); uses the register copy of h.
        out_ref[...] = (
            jnp.dot(h[num_layer - 1], wd_ref[...],
                    preferred_element_type=jnp.float32) + bd_ref[...]
        ).astype(out_ref.dtype)


# ------------------------------- wrapper -------------------------------------

def _const_spec(shape):
    # Grid-invariant (weight/bias) block: whole array, constant index map.
    nd = len(shape)
    return pl.BlockSpec(shape, lambda b, c, _nd=nd: (0,) * _nd)


def _prepare_params(params, hidden_dim, hp):
    """Pad per gate to hp lanes and fold biases (all f32)."""
    H = hidden_dim

    def pad_cols_per_gate(w):              # (K, 3H) -> (K, 3*hp)
        parts = [jnp.pad(w[:, g * H:(g + 1) * H], ((0, 0), (0, hp - H)))
                 for g in range(3)]
        return jnp.concatenate(parts, axis=1)

    def pad_rows(w):                        # (H, N) -> (hp, N)
        return jnp.pad(w, ((0, hp - H), (0, 0)))

    layers = []
    for l, (w_ih, w_hh, b_ih, b_hh) in enumerate(params["layers"]):
        # fold r/z biases of ih and hh; keep b_hn separate (it sits inside r*(...))
        b_rzn = jnp.concatenate(
            [b_ih[:, :2 * H] + b_hh[:, :2 * H], b_ih[:, 2 * H:]], axis=1)
        b_rzn_p = pad_cols_per_gate(b_rzn)                          # (1, 3hp)
        b_hn_p = jnp.pad(b_hh[:, 2 * H:], ((0, 0), (0, hp - H)))    # (1, hp)
        w_hh_p = pad_rows(pad_cols_per_gate(w_hh))                  # (hp, 3hp)
        if l == 0:
            w_ih_p = pad_cols_per_gate(w_ih)                        # (D, 3hp)
        else:
            w_ih_p = pad_rows(pad_cols_per_gate(w_ih))              # (hp, 3hp)
        layers.append((w_ih_p, w_hh_p, b_rzn_p, b_hn_p))

    w_dense_p = jnp.pad(params["w_dense"], ((0, hp - H), (0, 0)))   # (hp, O)
    return layers, w_dense_p, params["b_dense"]


def gru_pallas(x, h0, params, *, max_time_chunk=16, num_cores=1):
    """x: (B, T, D) f32, h0: (L, B, H) f32. Returns (out (B, O), ht (L, B, H)).

    num_cores: number of TensorCores to shard the batch over (2 on v7x,
    1 on v5e/v6e).  Default 1 keeps the whole batch in a single tile.
    """
    B, T, D = x.shape
    L, _, H = h0.shape
    O = params["w_dense"].shape[1]
    Hp = _round_up(H, LANE)

    layers, w_dense_p, b_dense = _prepare_params(params, H, Hp)
    w_ih0, w_hh0, b_rzn0, b_hn0 = layers[0]

    # Layer-0 input projection for ALL timesteps as one large f32 matmul, fused
    # with the batch-major -> time-major transpose.  Result (the only streamed
    # tensor) is stored in bf16 to halve its HBM write + per-chunk DMA.
    gx0 = (jnp.einsum("btd,dg->tbg", x, w_ih0,
                      preferred_element_type=jnp.float32)
           + b_rzn0[None]).astype(jnp.bfloat16)                     # (T, B, 3Hp)

    # Robust time chunking: pad T to a multiple of tc and mask the tail steps,
    # so awkward/prime T doesn't collapse to one timestep per grid step.
    tc = max(1, min(max_time_chunk, T))
    T_pad = _round_up(T, tc)
    mask_tail = (T_pad != T)
    if mask_tail:
        gx0 = jnp.pad(gx0, ((0, T_pad - T), (0, 0), (0, 0)))
    n_chunks = T_pad // tc

    h0_p = jnp.pad(h0, ((0, 0), (0, 0), (0, Hp - H)))               # (L, B, Hp)

    # Batch tiling: only split across TensorCores when the chip has >1 TC (v7x).
    # On 1-TC chips a split just reruns the latency-bound time loop per tile.
    bt, n_btiles = B, 1
    if num_cores > 1 and B % (8 * num_cores) == 0:
        bt, n_btiles = B // num_cores, num_cores

    args = [gx0, h0_p, w_hh0, b_hn0]
    in_specs = [
        pl.BlockSpec((tc, bt, 3 * Hp), lambda b, c: (c, b, 0)),
        pl.BlockSpec((L, bt, Hp), lambda b, c: (0, b, 0)),
        _const_spec(w_hh0.shape),
        _const_spec(b_hn0.shape),
    ]
    for l in range(1, L):
        for w in layers[l]:
            args.append(w)
            in_specs.append(_const_spec(w.shape))
    args += [w_dense_p, b_dense]
    in_specs += [_const_spec(w_dense_p.shape), _const_spec(b_dense.shape)]

    # VMEM budget from the actual (double-buffered) block sizes, clamped to a
    # range that also fits v7x's smaller physical VMEM.
    block_bytes = (
        tc * bt * 3 * Hp * 2                 # gx0 block (bf16)
        + 2 * L * bt * Hp * 4                # h0 block + resident ht block
        + bt * O * 4                         # out block
        + sum(math.prod(a.shape) * a.dtype.itemsize for a in args[2:])
    )
    vmem_limit = int(min(96 << 20, max(16 << 20, 2 * block_bytes + (4 << 20))))

    kernel = functools.partial(_gru_kernel, L, Hp, tc, T, mask_tail)

    out, ht_p = pl.pallas_call(
        kernel,
        out_shape=(
            jax.ShapeDtypeStruct((B, O), jnp.float32),
            jax.ShapeDtypeStruct((L, B, Hp), jnp.float32),
        ),
        grid=(n_btiles, n_chunks),
        in_specs=in_specs,
        out_specs=(
            pl.BlockSpec((bt, O), lambda b, c: (b, 0)),
            pl.BlockSpec((L, bt, Hp), lambda b, c: (0, b, 0)),
        ),
        compiler_params=pltpu.CompilerParams(
            dimension_semantics=("parallel", "arbitrary"),
            vmem_limit_bytes=vmem_limit,
        ),
    )(*args)
    return out, ht_p[:, :, :H]


# --------------------------- parameter init ----------------------------------

def init_gru_params(key, input_dim, output_dim, hidden_dim, num_layer):
    """Deterministic init mimicking PyTorch's U(-1/sqrt(H), 1/sqrt(H))."""
    k = 1.0 / jnp.sqrt(hidden_dim)
    layers = []
    for l in range(num_layer):
        din = input_dim if l == 0 else hidden_dim
        key, k1, k2, k3, k4 = jax.random.split(key, 5)
        # stored pre-transposed: (Din, 3H) / (H, 3H); biases kept 2D (1, 3H)
        w_ih = jax.random.uniform(k1, (din, 3 * hidden_dim), jnp.float32, -k, k)
        w_hh = jax.random.uniform(k2, (hidden_dim, 3 * hidden_dim), jnp.float32, -k, k)
        b_ih = jax.random.uniform(k3, (1, 3 * hidden_dim), jnp.float32, -k, k)
        b_hh = jax.random.uniform(k4, (1, 3 * hidden_dim), jnp.float32, -k, k)
        layers.append((w_ih, w_hh, b_ih, b_hh))
    key, k1, k2 = jax.random.split(key, 3)
    w_dense = jax.random.uniform(k1, (hidden_dim, output_dim), jnp.float32, -k, k)
    b_dense = jax.random.uniform(k2, (1, output_dim), jnp.float32, -k, k)
    return {"layers": layers, "w_dense": w_dense, "b_dense": b_dense}


# ----------------------------- pure-JAX ref -----------------------------------

def gru_ref(x, h0, params):
    """Pure-JAX f32 reference for nn.GRU(batch_first=True) + nn.Linear.
    Mirrors the kernel's one storage quantization: the precomputed layer-0
    input gates (x @ W_ih0 + folded r/z/n biases) are rounded to bf16.  With
    f32 storage this is exactly the PyTorch forward."""
    B, T, D = x.shape
    L, _, H = h0.shape
    h = [h0[l] for l in range(L)]
    inp_last = None
    for t in range(T):
        inp = x[:, t, :]
        for l in range(L):
            w_ih, w_hh, b_ih, b_hh = params["layers"][l]
            if l == 0:
                b_fold = jnp.concatenate(
                    [b_ih[:, :2 * H] + b_hh[:, :2 * H], b_ih[:, 2 * H:]], axis=1)
                gx = (inp @ w_ih + b_fold).astype(jnp.bfloat16).astype(jnp.float32)
                gh = h[l] @ w_hh
                r = jax.nn.sigmoid(gx[:, :H] + gh[:, :H])
                z = jax.nn.sigmoid(gx[:, H:2 * H] + gh[:, H:2 * H])
                n = jnp.tanh(gx[:, 2 * H:] + r * (gh[:, 2 * H:] + b_hh[:, 2 * H:]))
            else:
                gx = inp @ w_ih + b_ih
                gh = h[l] @ w_hh + b_hh
                r = jax.nn.sigmoid(gx[:, :H] + gh[:, :H])
                z = jax.nn.sigmoid(gx[:, H:2 * H] + gh[:, H:2 * H])
                n = jnp.tanh(gx[:, 2 * H:] + r * gh[:, 2 * H:])
            h[l] = (1.0 - z) * n + z * h[l]
            inp = h[l]
        inp_last = inp
    out = inp_last @ params["w_dense"] + params["b_dense"]
    return out, jnp.stack(h)


# ---------------------------------- main --------------------------------------

if __name__ == "__main__":
    # Small shapes consistent with GRU(input_dim, output_dim, hidden_dim, num_layer, dropout)
    B, T = 8, 8
    input_dim, output_dim, hidden_dim, num_layer = 16, 4, 32, 2

    key = jax.random.PRNGKey(0)
    key, kx, kh = jax.random.split(key, 3)
    x = jax.random.normal(kx, (B, T, input_dim), jnp.float32)
    h0 = jax.random.normal(kh, (num_layer, B, hidden_dim), jnp.float32)
    params = init_gru_params(key, input_dim, output_dim, hidden_dim, num_layer)

    out, ht = jax.jit(gru_pallas)(x, h0, params)
    out = jax.block_until_ready(out)
    ht = jax.block_until_ready(ht)

    out_ref, ht_ref = gru_ref(x, h0, params)
    # Tolerance covers matmul accumulation-order and transcendental differences.
    assert jnp.allclose(out, out_ref, atol=2e-3, rtol=2e-3), "out mismatch"
    assert jnp.allclose(ht, ht_ref, atol=2e-3, rtol=2e-3), "ht mismatch"

    print("KERNEL_OK")
</pallas_src>

<mosaic_0001>
module attributes {stable_mosaic.version = 11 : i64} {
  func.func @_gru_kernel(%arg0: i32, %arg1: i32, %arg2: memref<8x8x384xbf16, #tpu.memory_space<vmem>>, %arg3: memref<2x8x128xf32, #tpu.memory_space<vmem>>, %arg4: memref<128x384xf32, #tpu.memory_space<vmem>>, %arg5: memref<1x128xf32, #tpu.memory_space<vmem>>, %arg6: memref<128x384xf32, #tpu.memory_space<vmem>>, %arg7: memref<128x384xf32, #tpu.memory_space<vmem>>, %arg8: memref<1x384xf32, #tpu.memory_space<vmem>>, %arg9: memref<1x128xf32, #tpu.memory_space<vmem>>, %arg10: memref<128x4xf32, #tpu.memory_space<vmem>>, %arg11: memref<1x4xf32, #tpu.memory_space<vmem>>, %arg12: memref<8x4xf32, #tpu.memory_space<vmem>>, %arg13: memref<2x8x128xf32, #tpu.memory_space<vmem>>) attributes {dimension_semantics = [#tpu.dimension_semantics<parallel>, #tpu.dimension_semantics<arbitrary>], iteration_bounds = array<i64: 1, 1>, scalar_prefetch = 0 : i64, scratch_operands = 0 : i64, tpu.core_type = #tpu.core_type<tc>, window_params = [{transform_indices = @transform_0, window_bounds = array<i64: 8, 8, 384>}, {transform_indices = @transform_1, window_bounds = array<i64: 2, 8, 128>}, {pipeline_mode = #tpu.pipeline_mode<synchronous>, transform_indices = @transform_2, window_bounds = array<i64: 128, 384>}, {pipeline_mode = #tpu.pipeline_mode<synchronous>, transform_indices = @transform_3, window_bounds = array<i64: 1, 128>}, {pipeline_mode = #tpu.pipeline_mode<synchronous>, transform_indices = @transform_4, window_bounds = array<i64: 128, 384>}, {pipeline_mode = #tpu.pipeline_mode<synchronous>, transform_indices = @transform_5, window_bounds = array<i64: 128, 384>}, {pipeline_mode = #tpu.pipeline_mode<synchronous>, transform_indices = @transform_6, window_bounds = array<i64: 1, 384>}, {pipeline_mode = #tpu.pipeline_mode<synchronous>, transform_indices = @transform_7, window_bounds = array<i64: 1, 128>}, {pipeline_mode = #tpu.pipeline_mode<synchronous>, transform_indices = @transform_8, window_bounds = array<i64: 128, 4>}, {pipeline_mode = #tpu.pipeline_mode<synchronous>, transform_indices = @transform_9, window_bounds = array<i64: 1, 4>}, {transform_indices = @transform_10, window_bounds = array<i64: 8, 4>}, {transform_indices = @transform_11, window_bounds = array<i64: 2, 8, 128>}]} {
    %c0_i32 = arith.constant 0 : i32
    %0 = arith.cmpi eq, %arg1, %c0_i32 : i32
    %1 = arith.extui %0 : i1 to i32
    %c0_i32_0 = arith.constant 0 : i32
    %2 = arith.cmpi ne, %1, %c0_i32_0 : i32
    scf.if %2 {
      %c0_156 = arith.constant 0 : index
      %c0_157 = arith.constant 0 : index
      %c0_158 = arith.constant 0 : index
      %537 = vector.load %arg3[%c0_156, %c0_157, %c0_158] : memref<2x8x128xf32, #tpu.memory_space<vmem>>, vector<2x8x128xf32>
      %c0_159 = arith.constant 0 : index
      %c0_160 = arith.constant 0 : index
      %c0_161 = arith.constant 0 : index
      %538 = vector.load %arg13[%c0_159, %c0_160, %c0_161] : memref<2x8x128xf32, #tpu.memory_space<vmem>>, vector<2x8x128xf32>
      tpu.vector_store %arg13[%c0_159, %c0_160, %c0_161], %537 {strides = array<i32>} : memref<2x8x128xf32, #tpu.memory_space<vmem>>, vector<2x8x128xf32>,
    } else {
    }
    %c0 = arith.constant 0 : index
    %c0_1 = arith.constant 0 : index
    %3 = vector.load %arg5[%c0, %c0_1] : memref<1x128xf32, #tpu.memory_space<vmem>>, vector<1x128xf32>
    %4 = vector.shape_cast %3 : vector<1x128xf32> to vector<1x128xf32>
    %5 = vector.broadcast %4 : vector<1x128xf32> to vector<8x128xf32>
    %c0_2 = arith.constant 0 : index
    %c0_3 = arith.constant 0 : index
    %6 = vector.load %arg8[%c0_2, %c0_3] : memref<1x384xf32, #tpu.memory_space<vmem>>, vector<1x384xf32>
    %7 = vector.shape_cast %6 : vector<1x384xf32> to vector<1x384xf32>
    %8 = vector.broadcast %7 : vector<1x384xf32> to vector<8x384xf32>
    %c0_4 = arith.constant 0 : index
    %c0_5 = arith.constant 0 : index
    %9 = vector.load %arg9[%c0_4, %c0_5] : memref<1x128xf32, #tpu.memory_space<vmem>>, vector<1x128xf32>
    %10 = vector.shape_cast %9 : vector<1x128xf32> to vector<1x128xf32>
    %11 = vector.broadcast %10 : vector<1x128xf32> to vector<8x128xf32>
    %c0_6 = arith.constant 0 : index
    %c0_7 = arith.constant 0 : index
    %c0_8 = arith.constant 0 : index
    %12 = vector.load %arg13[%c0_6, %c0_7, %c0_8] : memref<2x8x128xf32, #tpu.memory_space<vmem>>, vector<1x8x128xf32>
    %13 = vector.shape_cast %12 : vector<1x8x128xf32> to vector<8x128xf32>
    %c1 = arith.constant 1 : index
    %c0_9 = arith.constant 0 : index
    %c0_10 = arith.constant 0 : index
    %14 = vector.load %arg13[%c1, %c0_9, %c0_10] : memref<2x8x128xf32, #tpu.memory_space<vmem>>, vector<1x8x128xf32>
    %15 = vector.shape_cast %14 : vector<1x8x128xf32> to vector<8x128xf32>
    %c0_11 = arith.constant 0 : index
    %c0_12 = arith.constant 0 : index
    %16 = vector.load %arg4[%c0_11, %c0_12] : memref<128x384xf32, #tpu.memory_space<vmem>>, vector<128x384xf32>
    %cst = arith.constant dense<0.000000e+00> : vector<8x384xf32>
    %17 = tpu.matmul %13, %16, %cst {dimension_numbers = #tpu.dot_dimension_numbers<[1], [0], [0], [1], [0, 0, 1, 1], [], []>} : vector<8x128xf32>, vector<128x384xf32>, vector<8x384xf32> -> vector<8x384xf32>
    %c0_13 = arith.constant 0 : index
    %c0_14 = arith.constant 0 : index
    %18 = vector.load %arg7[%c0_13, %c0_14] : memref<128x384xf32, #tpu.memory_space<vmem>>, vector<128x384xf32>
    %cst_15 = arith.constant dense<0.000000e+00> : vector<8x384xf32>
    %19 = tpu.matmul %15, %18, %cst_15 {dimension_numbers = #tpu.dot_dimension_numbers<[1], [0], [0], [1], [0, 0, 1, 1], [], []>} : vector<8x128xf32>, vector<128x384xf32>, vector<8x384xf32> -> vector<8x384xf32>
    %c0_16 = arith.constant 0 : index
    %c0_17 = arith.constant 0 : index
    %c0_18 = arith.constant 0 : index
    %20 = vector.load %arg2[%c0_16, %c0_17, %c0_18] : memref<8x8x384xbf16, #tpu.memory_space<vmem>>, vector<1x8x384xbf16>
    %21 = vector.shape_cast %20 : vector<1x8x384xbf16> to vector<8x384xbf16>
    %22 = arith.extf %21 : vector<8x384xbf16> to vector<8x384xf32>
    %23 = vector.extract_strided_slice %22 {offsets = [0, 0], sizes = [8, 128], strides = [1, 1]} : vector<8x384xf32> to vector<8x128xf32>
    %24 = vector.extract_strided_slice %17 {offsets = [0, 0], sizes = [8, 128], strides = [1, 1]} : vector<8x384xf32> to vector<8x128xf32>
    %25 = arith.addf %23, %24 : vector<8x128xf32>
    %26 = arith.negf %25 : vector<8x128xf32>
    %27 = math.exp %26 : vector<8x128xf32>
    %cst_19 = arith.constant 1.000000e+00 : f32
    %28 = vector.broadcast %cst_19 : f32 to vector<8x128xf32>
    %29 = arith.addf %28, %27 : vector<8x128xf32>
    %30 = arith.divf %28, %29 : vector<8x128xf32>
    %31 = vector.extract_strided_slice %22 {offsets = [0, 128], sizes = [8, 128], strides = [1, 1]} : vector<8x384xf32> to vector<8x128xf32>
    %32 = vector.extract_strided_slice %17 {offsets = [0, 128], sizes = [8, 128], strides = [1, 1]} : vector<8x384xf32> to vector<8x128xf32>
    %33 = arith.addf %31, %32 : vector<8x128xf32>
    %34 = arith.negf %33 : vector<8x128xf32>
    %35 = math.exp %34 : vector<8x128xf32>
    %cst_20 = arith.constant 1.000000e+00 : f32
    %36 = vector.broadcast %cst_20 : f32 to vector<8x128xf32>
    %37 = arith.addf %36, %35 : vector<8x128xf32>
    %38 = arith.divf %36, %37 : vector<8x128xf32>
    %39 = vector.extract_strided_slice %22 {offsets = [0, 256], sizes = [8, 128], strides = [1, 1]} : vector<8x384xf32> to vector<8x128xf32>
    %40 = vector.extract_strided_slice %17 {offsets = [0, 256], sizes = [8, 128], strides = [1, 1]} : vector<8x384xf32> to vector<8x128xf32>
    %41 = arith.addf %40, %5 : vector<8x128xf32>
    %42 = arith.mulf %30, %41 : vector<8x128xf32>
    %43 = arith.addf %39, %42 : vector<8x128xf32>
    %44 = math.tanh %43 : vector<8x128xf32>
    %45 = arith.mulf %38, %13 : vector<8x128xf32>
    %cst_21 = arith.constant 1.000000e+00 : f32
    %46 = vector.broadcast %cst_21 : f32 to vector<8x128xf32>
    %47 = arith.subf %46, %38 : vector<8x128xf32>
    %48 = arith.mulf %47, %44 : vector<8x128xf32>
    %49 = arith.addf %45, %48 : vector<8x128xf32>
    %c0_22 = arith.constant 0 : index
    %c0_23 = arith.constant 0 : index
    %50 = vector.load %arg6[%c0_22, %c0_23] : memref<128x384xf32, #tpu.memory_space<vmem>>, vector<128x384xf32>
    %cst_24 = arith.constant dense<0.000000e+00> : vector<8x384xf32>
    %51 = tpu.matmul %49, %50, %cst_24 {dimension_numbers = #tpu.dot_dimension_numbers<[1], [0], [0], [1], [0, 0, 1, 1], [], []>} : vector<8x128xf32>, vector<128x384xf32>, vector<8x384xf32> -> vector<8x384xf32>
    %52 = arith.addf %51, %8 : vector<8x384xf32>
    %53 = vector.extract_strided_slice %52 {offsets = [0, 0], sizes = [8, 128], strides = [1, 1]} : vector<8x384xf32> to vector<8x128xf32>
    %54 = vector.extract_strided_slice %19 {offsets = [0, 0], sizes = [8, 128], strides = [1, 1]} : vector<8x384xf32> to vector<8x128xf32>
    %55 = arith.addf %53, %54 : vector<8x128xf32>
    %56 = arith.negf %55 : vector<8x128xf32>
    %57 = math.exp %56 : vector<8x128xf32>
    %cst_25 = arith.constant 1.000000e+00 : f32
    %58 = vector.broadcast %cst_25 : f32 to vector<8x128xf32>
    %59 = arith.addf %58, %57 : vector<8x128xf32>
    %60 = arith.divf %58, %59 : vector<8x128xf32>
    %61 = vector.extract_strided_slice %52 {offsets = [0, 128], sizes = [8, 128], strides = [1, 1]} : vector<8x384xf32> to vector<8x128xf32>
    %62 = vector.extract_strided_slice %19 {offsets = [0, 128], sizes = [8, 128], strides = [1, 1]} : vector<8x384xf32> to vector<8x128xf32>
    %63 = arith.addf %61, %62 : vector<8x128xf32>
    %64 = arith.negf %63 : vector<8x128xf32>
    %65 = math.exp %64 : vector<8x128xf32>
    %cst_26 = arith.constant 1.000000e+00 : f32
    %66 = vector.broadcast %cst_26 : f32 to vector<8x128xf32>
    %67 = arith.addf %66, %65 : vector<8x128xf32>
    %68 = arith.divf %66, %67 : vector<8x128xf32>
    %69 = vector.extract_strided_slice %52 {offsets = [0, 256], sizes = [8, 128], strides = [1, 1]} : vector<8x384xf32> to vector<8x128xf32>
    %70 = vector.extract_strided_slice %19 {offsets = [0, 256], sizes = [8, 128], strides = [1, 1]} : vector<8x384xf32> to vector<8x128xf32>
    %71 = arith.addf %70, %11 : vector<8x128xf32>
    %72 = arith.mulf %60, %71 : vector<8x128xf32>
    %73 = arith.addf %69, %72 : vector<8x128xf32>
    %74 = math.tanh %73 : vector<8x128xf32>
    %75 = arith.mulf %68, %15 : vector<8x128xf32>
    %cst_27 = arith.constant 1.000000e+00 : f32
    %76 = vector.broadcast %cst_27 : f32 to vector<8x128xf32>
    %77 = arith.subf %76, %68 : vector<8x128xf32>
    %78 = arith.mulf %77, %74 : vector<8x128xf32>
    %79 = arith.addf %75, %78 : vector<8x128xf32>
    %c0_28 = arith.constant 0 : index
    %c0_29 = arith.constant 0 : index
    %80 = vector.load %arg4[%c0_28, %c0_29] : memref<128x384xf32, #tpu.memory_space<vmem>>, vector<128x384xf32>
    %cst_30 = arith.constant dense<0.000000e+00> : vector<8x384xf32>
    %81 = tpu.matmul %49, %80, %cst_30 {dimension_numbers = #tpu.dot_dimension_numbers<[1], [0], [0], [1], [0, 0, 1, 1], [], []>} : vector<8x128xf32>, vector<128x384xf32>, vector<8x384xf32> -> vector<8x384xf32>
    %c0_31 = arith.constant 0 : index
    %c0_32 = arith.constant 0 : index
    %82 = vector.load %arg7[%c0_31, %c0_32] : memref<128x384xf32, #tpu.memory_space<vmem>>, vector<128x384xf32>
    %cst_33 = arith.constant dense<0.000000e+00> : vector<8x384xf32>
    %83 = tpu.matmul %79, %82, %cst_33 {dimension_numbers = #tpu.dot_dimension_numbers<[1], [0], [0], [1], [0, 0, 1, 1], [], []>} : vector<8x128xf32>, vector<128x384xf32>, vector<8x384xf32> -> vector<8x384xf32>
    %c1_34 = arith.constant 1 : index
    %c0_35 = arith.constant 0 : index
    %c0_36 = arith.constant 0 : index
    %84 = vector.load %arg2[%c1_34, %c0_35, %c0_36] : memref<8x8x384xbf16, #tpu.memory_space<vmem>>, vector<1x8x384xbf16>
    %85 = vector.shape_cast %84 : vector<1x8x384xbf16> to vector<8x384xbf16>
    %86 = arith.extf %85 : vector<8x384xbf16> to vector<8x384xf32>
    %87 = vector.extract_strided_slice %86 {offsets = [0, 0], sizes = [8, 128], strides = [1, 1]} : vector<8x384xf32> to vector<8x128xf32>
    %88 = vector.extract_strided_slice %81 {offsets = [0, 0], sizes = [8, 128], strides = [1, 1]} : vector<8x384xf32> to vector<8x128xf32>
    %89 = arith.addf %87, %88 : vector<8x128xf32>
    %90 = arith.negf %89 : vector<8x128xf32>
    %91 = math.exp %90 : vector<8x128xf32>
    %cst_37 = arith.constant 1.000000e+00 : f32
    %92 = vector.broadcast %cst_37 : f32 to vector<8x128xf32>
    %93 = arith.addf %92, %91 : vector<8x128xf32>
    %94 = arith.divf %92, %93 : vector<8x128xf32>
    %95 = vector.extract_strided_slice %86 {offsets = [0, 128], sizes = [8, 128], strides = [1, 1]} : vector<8x384xf32> to vector<8x128xf32>
    %96 = vector.extract_strided_slice %81 {offsets = [0, 128], sizes = [8, 128], strides = [1, 1]} : vector<8x384xf32> to vector<8x128xf32>
    %97 = arith.addf %95, %96 : vector<8x128xf32>
    %98 = arith.negf %97 : vector<8x128xf32>
    %99 = math.exp %98 : vector<8x128xf32>
    %cst_38 = arith.constant 1.000000e+00 : f32
    %100 = vector.broadcast %cst_38 : f32 to vector<8x128xf32>
    %101 = arith.addf %100, %99 : vector<8x128xf32>
    %102 = arith.divf %100, %101 : vector<8x128xf32>
    %103 = vector.extract_strided_slice %86 {offsets = [0, 256], sizes = [8, 128], strides = [1, 1]} : vector<8x384xf32> to vector<8x128xf32>
    %104 = vector.extract_strided_slice %81 {offsets = [0, 256], sizes = [8, 128], strides = [1, 1]} : vector<8x384xf32> to vector<8x128xf32>
    %105 = arith.addf %104, %5 : vector<8x128xf32>
    %106 = arith.mulf %94, %105 : vector<8x128xf32>
    %107 = arith.addf %103, %106 : vector<8x128xf32>
    %108 = math.tanh %107 : vector<8x128xf32>
    %109 = arith.mulf %102, %49 : vector<8x128xf32>
    %cst_39 = arith.constant 1.000000e+00 : f32
    %110 = vector.broadcast %cst_39 : f32 to vector<8x128xf32>
    %111 = arith.subf %110, %102 : vector<8x128xf32>
    %112 = arith.mulf %111, %108 : vector<8x128xf32>
    %113 = arith.addf %109, %112 : vector<8x128xf32>
    %c0_40 = arith.constant 0 : index
    %c0_41 = arith.constant 0 : index
    %114 = vector.load %arg6[%c0_40, %c0_41] : memref<128x384xf32, #tpu.memory_space<vmem>>, vector<128x384xf32>
    %cst_42 = arith.constant dense<0.000000e+00> : vector<8x384xf32>
    %115 = tpu.matmul %113, %114, %cst_42 {dimension_numbers = #tpu.dot_dimension_numbers<[1], [0], [0], [1], [0, 0, 1, 1], [], []>} : vector<8x128xf32>, vector<128x384xf32>, vector<8x384xf32> -> vector<8x384xf32>
    %116 = arith.addf %115, %8 : vector<8x384xf32>
    %117 = vector.extract_strided_slice %116 {offsets = [0, 0], sizes = [8, 128], strides = [1, 1]} : vector<8x384xf32> to vector<8x128xf32>
    %118 = vector.extract_strided_slice %83 {offsets = [0, 0], sizes = [8, 128], strides = [1, 1]} : vector<8x384xf32> to vector<8x128xf32>
    %119 = arith.addf %117, %118 : vector<8x128xf32>
    %120 = arith.negf %119 : vector<8x128xf32>
    %121 = math.exp %120 : vector<8x128xf32>
    %cst_43 = arith.constant 1.000000e+00 : f32
    %122 = vector.broadcast %cst_43 : f32 to vector<8x128xf32>
    %123 = arith.addf %122, %121 : vector<8x128xf32>
    %124 = arith.divf %122, %123 : vector<8x128xf32>
    %125 = vector.extract_strided_slice %116 {offsets = [0, 128], sizes = [8, 128], strides = [1, 1]} : vector<8x384xf32> to vector<8x128xf32>
    %126 = vector.extract_strided_slice %83 {offsets = [0, 128], sizes = [8, 128], strides = [1, 1]} : vector<8x384xf32> to vector<8x128xf32>
    %127 = arith.addf %125, %126 : vector<8x128xf32>
    %128 = arith.negf %127 : vector<8x128xf32>
    %129 = math.exp %128 : vector<8x128xf32>
    %cst_44 = arith.constant 1.000000e+00 : f32
    %130 = vector.broadcast %cst_44 : f32 to vector<8x128xf32>
    %131 = arith.addf %130, %129 : vector<8x128xf32>
    %132 = arith.divf %130, %131 : vector<8x128xf32>
    %133 = vector.extract_strided_slice %116 {offsets = [0, 256], sizes = [8, 128], strides = [1, 1]} : vector<8x384xf32> to vector<8x128xf32>
    %134 = vector.extract_strided_slice %83 {offsets = [0, 256], sizes = [8, 128], strides = [1, 1]} : vector<8x384xf32> to vector<8x128xf32>
    %135 = arith.addf %134, %11 : vector<8x128xf32>
    %136 = arith.mulf %124, %135 : vector<8x128xf32>
    %137 = arith.addf %133, %136 : vector<8x128xf32>
    %138 = math.tanh %137 : vector<8x128xf32>
    %139 = arith.mulf %132, %79 : vector<8x128xf32>
    %cst_45 = arith.constant 1.000000e+00 : f32
    %140 = vector.broadcast %cst_45 : f32 to vector<8x128xf32>
    %141 = arith.subf %140, %132 : vector<8x128xf32>
    %142 = arith.mulf %141, %138 : vector<8x128xf32>
    %143 = arith.addf %139, %142 : vector<8x128xf32>
    %c0_46 = arith.constant 0 : index
    %c0_47 = arith.constant 0 : index
    %144 = vector.load %arg4[%c0_46, %c0_47] : memref<128x384xf32, #tpu.memory_space<vmem>>, vector<128x384xf32>
    %cst_48 = arith.constant dense<0.000000e+00> : vector<8x384xf32>
    %145 = tpu.matmul %113, %144, %cst_48 {dimension_numbers = #tpu.dot_dimension_numbers<[1], [0], [0], [1], [0, 0, 1, 1], [], []>} : vector<8x128xf32>, vector<128x384xf32>, vector<8x384xf32> -> vector<8x384xf32>
    %c0_49 = arith.constant 0 : index
    %c0_50 = arith.constant 0 : index
    %146 = vector.load %arg7[%c0_49, %c0_50] : memref<128x384xf32, #tpu.memory_space<vmem>>, vector<128x384xf32>
    %cst_51 = arith.constant dense<0.000000e+00> : vector<8x384xf32>
    %147 = tpu.matmul %143, %146, %cst_51 {dimension_numbers = #tpu.dot_dimension_numbers<[1], [0], [0], [1], [0, 0, 1, 1], [], []>} : vector<8x128xf32>, vector<128x384xf32>, vector<8x384xf32> -> vector<8x384xf32>
    %c2 = arith.constant 2 : index
    %c0_52 = arith.constant 0 : index
    %c0_53 = arith.constant 0 : index
    %148 = vector.load %arg2[%c2, %c0_52, %c0_53] : memref<8x8x384xbf16, #tpu.memory_space<vmem>>, vector<1x8x384xbf16>
    %149 = vector.shape_cast %148 : vector<1x8x384xbf16> to vector<8x384xbf16>
    %150 = arith.extf %149 : vector<8x384xbf16> to vector<8x384xf32>
    %151 = vector.extract_strided_slice %150 {offsets = [0, 0], sizes = [8, 128], strides = [1, 1]} : vector<8x384xf32> to vector<8x128xf32>
    %152 = vector.extract_strided_slice %145 {offsets = [0, 0], sizes = [8, 128], strides = [1, 1]} : vector<8x384xf32> to vector<8x128xf32>
    %153 = arith.addf %151, %152 : vector<8x128xf32>
    %154 = arith.negf %153 : vector<8x128xf32>
    %155 = math.exp %154 : vector<8x128xf32>
    %cst_54 = arith.constant 1.000000e+00 : f32
    %156 = vector.broadcast %cst_54 : f32 to vector<8x128xf32>
    %157 = arith.addf %156, %155 : vector<8x128xf32>
    %158 = arith.divf %156, %157 : vector<8x128xf32>
    %159 = vector.extract_strided_slice %150 {offsets = [0, 128], sizes = [8, 128], strides = [1, 1]} : vector<8x384xf32> to vector<8x128xf32>
    %160 = vector.extract_strided_slice %145 {offsets = [0, 128], sizes = [8, 128], strides = [1, 1]} : vector<8x384xf32> to vector<8x128xf32>
    %161 = arith.addf %159, %160 : vector<8x128xf32>
    %162 = arith.negf %161 : vector<8x128xf32>
    %163 = math.exp %162 : vector<8x128xf32>
    %cst_55 = arith.constant 1.000000e+00 : f32
    %164 = vector.broadcast %cst_55 : f32 to vector<8x128xf32>
    %165 = arith.addf %164, %163 : vector<8x128xf32>
    %166 = arith.divf %164, %165 : vector<8x128xf32>
    %167 = vector.extract_strided_slice %150 {offsets = [0, 256], sizes = [8, 128], strides = [1, 1]} : vector<8x384xf32> to vector<8x128xf32>
    %168 = vector.extract_strided_slice %145 {offsets = [0, 256], sizes = [8, 128], strides = [1, 1]} : vector<8x384xf32> to vector<8x128xf32>
    %169 = arith.addf %168, %5 : vector<8x128xf32>
    %170 = arith.mulf %158, %169 : vector<8x128xf32>
    %171 = arith.addf %167, %170 : vector<8x128xf32>
    %172 = math.tanh %171 : vector<8x128xf32>
    %173 = arith.mulf %166, %113 : vector<8x128xf32>
    %cst_56 = arith.constant 1.000000e+00 : f32
    %174 = vector.broadcast %cst_56 : f32 to vector<8x128xf32>
    %175 = arith.subf %174, %166 : vector<8x128xf32>
    %176 = arith.mulf %175, %172 : vector<8x128xf32>
    %177 = arith.addf %173, %176 : vector<8x128xf32>
    %c0_57 = arith.constant 0 : index
    %c0_58 = arith.constant 0 : index
    %178 = vector.load %arg6[%c0_57, %c0_58] : memref<128x384xf32, #tpu.memory_space<vmem>>, vector<128x384xf32>
    %cst_59 = arith.constant dense<0.000000e+00> : vector<8x384xf32>
    %179 = tpu.matmul %177, %178, %cst_59 {dimension_numbers = #tpu.dot_dimension_numbers<[1], [0], [0], [1], [0, 0, 1, 1], [], []>} : vector<8x128xf32>, vector<128x384xf32>, vector<8x384xf32> -> vector<8x384xf32>
    %180 = arith.addf %179, %8 : vector<8x384xf32>
    %181 = vector.extract_strided_slice %180 {offsets = [0, 0], sizes = [8, 128], strides = [1, 1]} : vector<8x384xf32> to vector<8x128xf32>
    %182 = vector.extract_strided_slice %147 {offsets = [0, 0], sizes = [8, 128], strides = [1, 1]} : vector<8x384xf32> to vector<8x128xf32>
    %183 = arith.addf %181, %182 : vector<8x128xf32>
    %184 = arith.negf %183 : vector<8x128xf32>
    %185 = math.exp %184 : vector<8x128xf32>
    %cst_60 = arith.constant 1.000000e+00 : f32
    %186 = vector.broadcast %cst_60 : f32 to vector<8x128xf32>
    %187 = arith.addf %186, %185 : vector<8x128xf32>
    %188 = arith.divf %186, %187 : vector<8x128xf32>
    %189 = vector.extract_strided_slice %180 {offsets = [0, 128], sizes = [8, 128], strides = [1, 1]} : vector<8x384xf32> to vector<8x128xf32>
    %190 = vector.extract_strided_slice %147 {offsets = [0, 128], sizes = [8, 128], strides = [1, 1]} : vector<8x384xf32> to vector<8x128xf32>
    %191 = arith.addf %189, %190 : vector<8x128xf32>
    %192 = arith.negf %191 : vector<8x128xf32>
    %193 = math.exp %192 : vector<8x128xf32>
    %cst_61 = arith.constant 1.000000e+00 : f32
    %194 = vector.broadcast %cst_61 : f32 to vector<8x128xf32>
    %195 = arith.addf %194, %193 : vector<8x128xf32>
    %196 = arith.divf %194, %195 : vector<8x128xf32>
    %197 = vector.extract_strided_slice %180 {offsets = [0, 256], sizes = [8, 128], strides = [1, 1]} : vector<8x384xf32> to vector<8x128xf32>
    %198 = vector.extract_strided_slice %147 {offsets = [0, 256], sizes = [8, 128], strides = [1, 1]} : vector<8x384xf32> to vector<8x128xf32>
    %199 = arith.addf %198, %11 : vector<8x128xf32>
    %200 = arith.mulf %188, %199 : vector<8x128xf32>
    %201 = arith.addf %197, %200 : vector<8x128xf32>
    %202 = math.tanh %201 : vector<8x128xf32>
    %203 = arith.mulf %196, %143 : vector<8x128xf32>
    %cst_62 = arith.constant 1.000000e+00 : f32
    %204 = vector.broadcast %cst_62 : f32 to vector<8x128xf32>
    %205 = arith.subf %204, %196 : vector<8x128xf32>
    %206 = arith.mulf %205, %202 : vector<8x128xf32>
    %207 = arith.addf %203, %206 : vector<8x128xf32>
    %c0_63 = arith.constant 0 : index
    %c0_64 = arith.constant 0 : index
    %208 = vector.load %arg4[%c0_63, %c0_64] : memref<128x384xf32, #tpu.memory_space<vmem>>, vector<128x384xf32>
    %cst_65 = arith.constant dense<0.000000e+00> : vector<8x384xf32>
    %209 = tpu.matmul %177, %208, %cst_65 {dimension_numbers = #tpu.dot_dimension_numbers<[1], [0], [0], [1], [0, 0, 1, 1], [], []>} : vector<8x128xf32>, vector<128x384xf32>, vector<8x384xf32> -> vector<8x384xf32>
    %c0_66 = arith.constant 0 : index
    %c0_67 = arith.constant 0 : index
    %210 = vector.load %arg7[%c0_66, %c0_67] : memref<128x384xf32, #tpu.memory_space<vmem>>, vector<128x384xf32>
    %cst_68 = arith.constant dense<0.000000e+00> : vector<8x384xf32>
    %211 = tpu.matmul %207, %210, %cst_68 {dimension_numbers = #tpu.dot_dimension_numbers<[1], [0], [0], [1], [0, 0, 1, 1], [], []>} : vector<8x128xf32>, vector<128x384xf32>, vector<8x384xf32> -> vector<8x384xf32>
    %c3 = arith.constant 3 : index
    %c0_69 = arith.constant 0 : index
    %c0_70 = arith.constant 0 : index
    %212 = vector.load %arg2[%c3, %c0_69, %c0_70] : memref<8x8x384xbf16, #tpu.memory_space<vmem>>, vector<1x8x384xbf16>
    %213 = vector.shape_cast %212 : vector<1x8x384xbf16> to vector<8x384xbf16>
    %214 = arith.extf %213 : vector<8x384xbf16> to vector<8x384xf32>
    %215 = vector.extract_strided_slice %214 {offsets = [0, 0], sizes = [8, 128], strides = [1, 1]} : vector<8x384xf32> to vector<8x128xf32>
    %216 = vector.extract_strided_slice %209 {offsets = [0, 0], sizes = [8, 128], strides = [1, 1]} : vector<8x384xf32> to vector<8x128xf32>
    %217 = arith.addf %215, %216 : vector<8x128xf32>
    %218 = arith.negf %217 : vector<8x128xf32>
    %219 = math.exp %218 : vector<8x128xf32>
    %cst_71 = arith.constant 1.000000e+00 : f32
    %220 = vector.broadcast %cst_71 : f32 to vector<8x128xf32>
    %221 = arith.addf %220, %219 : vector<8x128xf32>
    %222 = arith.divf %220, %221 : vector<8x128xf32>
    %223 = vector.extract_strided_slice %214 {offsets = [0, 128], sizes = [8, 128], strides = [1, 1]} : vector<8x384xf32> to vector<8x128xf32>
    %224 = vector.extract_strided_slice %209 {offsets = [0, 128], sizes = [8, 128], strides = [1, 1]} : vector<8x384xf32> to vector<8x128xf32>
    %225 = arith.addf %223, %224 : vector<8x128xf32>
    %226 = arith.negf %225 : vector<8x128xf32>
    %227 = math.exp %226 : vector<8x128xf32>
    %cst_72 = arith.constant 1.000000e+00 : f32
    %228 = vector.broadcast %cst_72 : f32 to vector<8x128xf32>
    %229 = arith.addf %228, %227 : vector<8x128xf32>
    %230 = arith.divf %228, %229 : vector<8x128xf32>
    %231 = vector.extract_strided_slice %214 {offsets = [0, 256], sizes = [8, 128], strides = [1, 1]} : vector<8x384xf32> to vector<8x128xf32>
    %232 = vector.extract_strided_slice %209 {offsets = [0, 256], sizes = [8, 128], strides = [1, 1]} : vector<8x384xf32> to vector<8x128xf32>
    %233 = arith.addf %232, %5 : vector<8x128xf32>
    %234 = arith.mulf %222, %233 : vector<8x128xf32>
    %235 = arith.addf %231, %234 : vector<8x128xf32>
    %236 = math.tanh %235 : vector<8x128xf32>
    %237 = arith.mulf %230, %177 : vector<8x128xf32>
    %cst_73 = arith.constant 1.000000e+00 : f32
    %238 = vector.broadcast %cst_73 : f32 to vector<8x128xf32>
    %239 = arith.subf %238, %230 : vector<8x128xf32>
    %240 = arith.mulf %239, %236 : vector<8x128xf32>
    %241 = arith.addf %237, %240 : vector<8x128xf32>
    %c0_74 = arith.constant 0 : index
    %c0_75 = arith.constant 0 : index
    %242 = vector.load %arg6[%c0_74, %c0_75] : memref<128x384xf32, #tpu.memory_space<vmem>>, vector<128x384xf32>
    %cst_76 = arith.constant dense<0.000000e+00> : vector<8x384xf32>
    %243 = tpu.matmul %241, %242, %cst_76 {dimension_numbers = #tpu.dot_dimension_numbers<[1], [0], [0], [1], [0, 0, 1, 1], [], []>} : vector<8x128xf32>, vector<128x384xf32>, vector<8x384xf32> -> vector<8x384xf32>
    %244 = arith.addf %243, %8 : vector<8x384xf32>
    %245 = vector.extract_strided_slice %244 {offsets = [0, 0], sizes = [8, 128], strides = [1, 1]} : vector<8x384xf32> to vector<8x128xf32>
    %246 = vector.extract_strided_slice %211 {offsets = [0, 0], sizes = [8, 128], strides = [1, 1]} : vector<8x384xf32> to vector<8x128xf32>
    %247 = arith.addf %245, %246 : vector<8x128xf32>
    %248 = arith.negf %247 : vector<8x128xf32>
    %249 = math.exp %248 : vector<8x128xf32>
    %cst_77 = arith.constant 1.000000e+00 : f32
    %250 = vector.broadcast %cst_77 : f32 to vector<8x128xf32>
    %251 = arith.addf %250, %249 : vector<8x128xf32>
    %252 = arith.divf %250, %251 : vector<8x128xf32>
    %253 = vector.extract_strided_slice %244 {offsets = [0, 128], sizes = [8, 128], strides = [1, 1]} : vector<8x384xf32> to vector<8x128xf32>
    %254 = vector.extract_strided_slice %211 {offsets = [0, 128], sizes = [8, 128], strides = [1, 1]} : vector<8x384xf32> to vector<8x128xf32>
    %255 = arith.addf %253, %254 : vector<8x128xf32>
    %256 = arith.negf %255 : vector<8x128xf32>
    %257 = math.exp %256 : vector<8x128xf32>
    %cst_78 = arith.constant 1.000000e+00 : f32
    %258 = vector.broadcast %cst_78 : f32 to vector<8x128xf32>
    %259 = arith.addf %258, %257 : vector<8x128xf32>
    %260 = arith.divf %258, %259 : vector<8x128xf32>
    %261 = vector.extract_strided_slice %244 {offsets = [0, 256], sizes = [8, 128], strides = [1, 1]} : vector<8x384xf32> to vector<8x128xf32>
    %262 = vector.extract_strided_slice %211 {offsets = [0, 256], sizes = [8, 128], strides = [1, 1]} : vector<8x384xf32> to vector<8x128xf32>
    %263 = arith.addf %262, %11 : vector<8x128xf32>
    %264 = arith.mulf %252, %263 : vector<8x128xf32>
    %265 = arith.addf %261, %264 : vector<8x128xf32>
    %266 = math.tanh %265 : vector<8x128xf32>
    %267 = arith.mulf %260, %207 : vector<8x128xf32>
    %cst_79 = arith.constant 1.000000e+00 : f32
    %268 = vector.broadcast %cst_79 : f32 to vector<8x128xf32>
    %269 = arith.subf %268, %260 : vector<8x128xf32>
    %270 = arith.mulf %269, %266 : vector<8x128xf32>
    %271 = arith.addf %267, %270 : vector<8x128xf32>
    %c0_80 = arith.constant 0 : index
    %c0_81 = arith.constant 0 : index
    %272 = vector.load %arg4[%c0_80, %c0_81] : memref<128x384xf32, #tpu.memory_space<vmem>>, vector<128x384xf32>
    %cst_82 = arith.constant dense<0.000000e+00> : vector<8x384xf32>
    %273 = tpu.matmul %241, %272, %cst_82 {dimension_numbers = #tpu.dot_dimension_numbers<[1], [0], [0], [1], [0, 0, 1, 1], [], []>} : vector<8x128xf32>, vector<128x384xf32>, vector<8x384xf32> -> vector<8x384xf32>
    %c0_83 = arith.constant 0 : index
    %c0_84 = arith.constant 0 : index
    %274 = vector.load %arg7[%c0_83, %c0_84] : memref<128x384xf32, #tpu.memory_space<vmem>>, vector<128x384xf32>
    %cst_85 = arith.constant dense<0.000000e+00> : vector<8x384xf32>
    %275 = tpu.matmul %271, %274, %cst_85 {dimension_numbers = #tpu.dot_dimension_numbers<[1], [0], [0], [1], [0, 0, 1, 1], [], []>} : vector<8x128xf32>, vector<128x384xf32>, vector<8x384xf32> -> vector<8x384xf32>
    %c4 = arith.constant 4 : index
    %c0_86 = arith.constant 0 : index
    %c0_87 = arith.constant 0 : index
    %276 = vector.load %arg2[%c4, %c0_86, %c0_87] : memref<8x8x384xbf16, #tpu.memory_space<vmem>>, vector<1x8x384xbf16>
    %277 = vector.shape_cast %276 : vector<1x8x384xbf16> to vector<8x384xbf16>
    %278 = arith.extf %277 : vector<8x384xbf16> to vector<8x384xf32>
    %279 = vector.extract_strided_slice %278 {offsets = [0, 0], sizes = [8, 128], strides = [1, 1]} : vector<8x384xf32> to vector<8x128xf32>
    %280 = vector.extract_strided_slice %273 {offsets = [0, 0], sizes = [8, 128], strides = [1, 1]} : vector<8x384xf32> to vector<8x128xf32>
    %281 = arith.addf %279, %280 : vector<8x128xf32>
    %282 = arith.negf %281 : vector<8x128xf32>
    %283 = math.exp %282 : vector<8x128xf32>
    %cst_88 = arith.constant 1.000000e+00 : f32
    %284 = vector.broadcast %cst_88 : f32 to vector<8x128xf32>
    %285 = arith.addf %284, %283 : vector<8x128xf32>
    %286 = arith.divf %284, %285 : vector<8x128xf32>
    %287 = vector.extract_strided_slice %278 {offsets = [0, 128], sizes = [8, 128], strides = [1, 1]} : vector<8x384xf32> to vector<8x128xf32>
    %288 = vector.extract_strided_slice %273 {offsets = [0, 128], sizes = [8, 128], strides = [1, 1]} : vector<8x384xf32> to vector<8x128xf32>
    %289 = arith.addf %287, %288 : vector<8x128xf32>
    %290 = arith.negf %289 : vector<8x128xf32>
    %291 = math.exp %290 : vector<8x128xf32>
    %cst_89 = arith.constant 1.000000e+00 : f32
    %292 = vector.broadcast %cst_89 : f32 to vector<8x128xf32>
    %293 = arith.addf %292, %291 : vector<8x128xf32>
    %294 = arith.divf %292, %293 : vector<8x128xf32>
    %295 = vector.extract_strided_slice %278 {offsets = [0, 256], sizes = [8, 128], strides = [1, 1]} : vector<8x384xf32> to vector<8x128xf32>
    %296 = vector.extract_strided_slice %273 {offsets = [0, 256], sizes = [8, 128], strides = [1, 1]} : vector<8x384xf32> to vector<8x128xf32>
    %297 = arith.addf %296, %5 : vector<8x128xf32>
    %298 = arith.mulf %286, %297 : vector<8x128xf32>
    %299 = arith.addf %295, %298 : vector<8x128xf32>
    %300 = math.tanh %299 : vector<8x128xf32>
    %301 = arith.mulf %294, %241 : vector<8x128xf32>
    %cst_90 = arith.constant 1.000000e+00 : f32
    %302 = vector.broadcast %cst_90 : f32 to vector<8x128xf32>
    %303 = arith.subf %302, %294 : vector<8x128xf32>
    %304 = arith.mulf %303, %300 : vector<8x128xf32>
    %305 = arith.addf %301, %304 : vector<8x128xf32>
    %c0_91 = arith.constant 0 : index
    %c0_92 = arith.constant 0 : index
    %306 = vector.load %arg6[%c0_91, %c0_92] : memref<128x384xf32, #tpu.memory_space<vmem>>, vector<128x384xf32>
    %cst_93 = arith.constant dense<0.000000e+00> : vector<8x384xf32>
    %307 = tpu.matmul %305, %306, %cst_93 {dimension_numbers = #tpu.dot_dimension_numbers<[1], [0], [0], [1], [0, 0, 1, 1], [], []>} : vector<8x128xf32>, vector<128x384xf32>, vector<8x384xf32> -> vector<8x384xf32>
    %308 = arith.addf %307, %8 : vector<8x384xf32>
    %309 = vector.extract_strided_slice %308 {offsets = [0, 0], sizes = [8, 128], strides = [1, 1]} : vector<8x384xf32> to vector<8x128xf32>
    %310 = vector.extract_strided_slice %275 {offsets = [0, 0], sizes = [8, 128], strides = [1, 1]} : vector<8x384xf32> to vector<8x128xf32>
    %311 = arith.addf %309, %310 : vector<8x128xf32>
    %312 = arith.negf %311 : vector<8x128xf32>
    %313 = math.exp %312 : vector<8x128xf32>
    %cst_94 = arith.constant 1.000000e+00 : f32
    %314 = vector.broadcast %cst_94 : f32 to vector<8x128xf32>
    %315 = arith.addf %314, %313 : vector<8x128xf32>
    %316 = arith.divf %314, %315 : vector<8x128xf32>
    %317 = vector.extract_strided_slice %308 {offsets = [0, 128], sizes = [8, 128], strides = [1, 1]} : vector<8x384xf32> to vector<8x128xf32>
    %318 = vector.extract_strided_slice %275 {offsets = [0, 128], sizes = [8, 128], strides = [1, 1]} : vector<8x384xf32> to vector<8x128xf32>
    %319 = arith.addf %317, %318 : vector<8x128xf32>
    %320 = arith.negf %319 : vector<8x128xf32>
    %321 = math.exp %320 : vector<8x128xf32>
    %cst_95 = arith.constant 1.000000e+00 : f32
    %322 = vector.broadcast %cst_95 : f32 to vector<8x128xf32>
    %323 = arith.addf %322, %321 : vector<8x128xf32>
    %324 = arith.divf %322, %323 : vector<8x128xf32>
    %325 = vector.extract_strided_slice %308 {offsets = [0, 256], sizes = [8, 128], strides = [1, 1]} : vector<8x384xf32> to vector<8x128xf32>
    %326 = vector.extract_strided_slice %275 {offsets = [0, 256], sizes = [8, 128], strides = [1, 1]} : vector<8x384xf32> to vector<8x128xf32>
    %327 = arith.addf %326, %11 : vector<8x128xf32>
    %328 = arith.mulf %316, %327 : vector<8x128xf32>
    %329 = arith.addf %325, %328 : vector<8x128xf32>
    %330 = math.tanh %329 : vector<8x128xf32>
    %331 = arith.mulf %324, %271 : vector<8x128xf32>
    %cst_96 = arith.constant 1.000000e+00 : f32
    %332 = vector.broadcast %cst_96 : f32 to vector<8x128xf32>
    %333 = arith.subf %332, %324 : vector<8x128xf32>
    %334 = arith.mulf %333, %330 : vector<8x128xf32>
    %335 = arith.addf %331, %334 : vector<8x128xf32>
    %c0_97 = arith.constant 0 : index
    %c0_98 = arith.constant 0 : index
    %336 = vector.load %arg4[%c0_97, %c0_98] : memref<128x384xf32, #tpu.memory_space<vmem>>, vector<128x384xf32>
    %cst_99 = arith.constant dense<0.000000e+00> : vector<8x384xf32>
    %337 = tpu.matmul %305, %336, %cst_99 {dimension_numbers = #tpu.dot_dimension_numbers<[1], [0], [0], [1], [0, 0, 1, 1], [], []>} : vector<8x128xf32>, vector<128x384xf32>, vector<8x384xf32> -> vector<8x384xf32>
    %c0_100 = arith.constant 0 : index
    %c0_101 = arith.constant 0 : index
    %338 = vector.load %arg7[%c0_100, %c0_101] : memref<128x384xf32, #tpu.memory_space<vmem>>, vector<128x384xf32>
    %cst_102 = arith.constant dense<0.000000e+00> : vector<8x384xf32>
    %339 = tpu.matmul %335, %338, %cst_102 {dimension_numbers = #tpu.dot_dimension_numbers<[1], [0], [0], [1], [0, 0, 1, 1], [], []>} : vector<8x128xf32>, vector<128x384xf32>, vector<8x384xf32> -> vector<8x384xf32>
    %c5 = arith.constant 5 : index
    %c0_103 = arith.constant 0 : index
    %c0_104 = arith.constant 0 : index
    %340 = vector.load %arg2[%c5, %c0_103, %c0_104] : memref<8x8x384xbf16, #tpu.memory_space<vmem>>, vector<1x8x384xbf16>
    %341 = vector.shape_cast %340 : vector<1x8x384xbf16> to vector<8x384xbf16>
    %342 = arith.extf %341 : vector<8x384xbf16> to vector<8x384xf32>
    %343 = vector.extract_strided_slice %342 {offsets = [0, 0], sizes = [8, 128], strides = [1, 1]} : vector<8x384xf32> to vector<8x128xf32>
    %344 = vector.extract_strided_slice %337 {offsets = [0, 0], sizes = [8, 128], strides = [1, 1]} : vector<8x384xf32> to vector<8x128xf32>
    %345 = arith.addf %343, %344 : vector<8x128xf32>
    %346 = arith.negf %345 : vector<8x128xf32>
    %347 = math.exp %346 : vector<8x128xf32>
    %cst_105 = arith.constant 1.000000e+00 : f32
    %348 = vector.broadcast %cst_105 : f32 to vector<8x128xf32>
    %349 = arith.addf %348, %347 : vector<8x128xf32>
    %350 = arith.divf %348, %349 : vector<8x128xf32>
    %351 = vector.extract_strided_slice %342 {offsets = [0, 128], sizes = [8, 128], strides = [1, 1]} : vector<8x384xf32> to vector<8x128xf32>
    %352 = vector.extract_strided_slice %337 {offsets = [0, 128], sizes = [8, 128], strides = [1, 1]} : vector<8x384xf32> to vector<8x128xf32>
    %353 = arith.addf %351, %352 : vector<8x128xf32>
    %354 = arith.negf %353 : vector<8x128xf32>
    %355 = math.exp %354 : vector<8x128xf32>
    %cst_106 = arith.constant 1.000000e+00 : f32
    %356 = vector.broadcast %cst_106 : f32 to vector<8x128xf32>
    %357 = arith.addf %356, %355 : vector<8x128xf32>
    %358 = arith.divf %356, %357 : vector<8x128xf32>
    %359 = vector.extract_strided_slice %342 {offsets = [0, 256], sizes = [8, 128], strides = [1, 1]} : vector<8x384xf32> to vector<8x128xf32>
    %360 = vector.extract_strided_slice %337 {offsets = [0, 256], sizes = [8, 128], strides = [1, 1]} : vector<8x384xf32> to vector<8x128xf32>
    %361 = arith.addf %360, %5 : vector<8x128xf32>
    %362 = arith.mulf %350, %361 : vector<8x128xf32>
    %363 = arith.addf %359, %362 : vector<8x128xf32>
    %364 = math.tanh %363 : vector<8x128xf32>
    %365 = arith.mulf %358, %305 : vector<8x128xf32>
    %cst_107 = arith.constant 1.000000e+00 : f32
    %366 = vector.broadcast %cst_107 : f32 to vector<8x128xf32>
    %367 = arith.subf %366, %358 : vector<8x128xf32>
    %368 = arith.mulf %367, %364 : vector<8x128xf32>
    %369 = arith.addf %365, %368 : vector<8x128xf32>
    %c0_108 = arith.constant 0 : index
    %c0_109 = arith.constant 0 : index
    %370 = vector.load %arg6[%c0_108, %c0_109] : memref<128x384xf32, #tpu.memory_space<vmem>>, vector<128x384xf32>
    %cst_110 = arith.constant dense<0.000000e+00> : vector<8x384xf32>
    %371 = tpu.matmul %369, %370, %cst_110 {dimension_numbers = #tpu.dot_dimension_numbers<[1], [0], [0], [1], [0, 0, 1, 1], [], []>} : vector<8x128xf32>, vector<128x384xf32>, vector<8x384xf32> -> vector<8x384xf32>
    %372 = arith.addf %371, %8 : vector<8x384xf32>
    %373 = vector.extract_strided_slice %372 {offsets = [0, 0], sizes = [8, 128], strides = [1, 1]} : vector<8x384xf32> to vector<8x128xf32>
    %374 = vector.extract_strided_slice %339 {offsets = [0, 0], sizes = [8, 128], strides = [1, 1]} : vector<8x384xf32> to vector<8x128xf32>
    %375 = arith.addf %373, %374 : vector<8x128xf32>
    %376 = arith.negf %375 : vector<8x128xf32>
    %377 = math.exp %376 : vector<8x128xf32>
    %cst_111 = arith.constant 1.000000e+00 : f32
    %378 = vector.broadcast %cst_111 : f32 to vector<8x128xf32>
    %379 = arith.addf %378, %377 : vector<8x128xf32>
    %380 = arith.divf %378, %379 : vector<8x128xf32>
    %381 = vector.extract_strided_slice %372 {offsets = [0, 128], sizes = [8, 128], strides = [1, 1]} : vector<8x384xf32> to vector<8x128xf32>
    %382 = vector.extract_strided_slice %339 {offsets = [0, 128], sizes = [8, 128], strides = [1, 1]} : vector<8x384xf32> to vector<8x128xf32>
    %383 = arith.addf %381, %382 : vector<8x128xf32>
    %384 = arith.negf %383 : vector<8x128xf32>
    %385 = math.exp %384 : vector<8x128xf32>
    %cst_112 = arith.constant 1.000000e+00 : f32
    %386 = vector.broadcast %cst_112 : f32 to vector<8x128xf32>
    %387 = arith.addf %386, %385 : vector<8x128xf32>
    %388 = arith.divf %386, %387 : vector<8x128xf32>
    %389 = vector.extract_strided_slice %372 {offsets = [0, 256], sizes = [8, 128], strides = [1, 1]} : vector<8x384xf32> to vector<8x128xf32>
    %390 = vector.extract_strided_slice %339 {offsets = [0, 256], sizes = [8, 128], strides = [1, 1]} : vector<8x384xf32> to vector<8x128xf32>
    %391 = arith.addf %390, %11 : vector<8x128xf32>
    %392 = arith.mulf %380, %391 : vector<8x128xf32>
    %393 = arith.addf %389, %392 : vector<8x128xf32>
    %394 = math.tanh %393 : vector<8x128xf32>
    %395 = arith.mulf %388, %335 : vector<8x128xf32>
    %cst_113 = arith.constant 1.000000e+00 : f32
    %396 = vector.broadcast %cst_113 : f32 to vector<8x128xf32>
    %397 = arith.subf %396, %388 : vector<8x128xf32>
    %398 = arith.mulf %397, %394 : vector<8x128xf32>
    %399 = arith.addf %395, %398 : vector<8x128xf32>
    %c0_114 = arith.constant 0 : index
    %c0_115 = arith.constant 0 : index
    %400 = vector.load %arg4[%c0_114, %c0_115] : memref<128x384xf32, #tpu.memory_space<vmem>>, vector<128x384xf32>
    %cst_116 = arith.constant dense<0.000000e+00> : vector<8x384xf32>
    %401 = tpu.matmul %369, %400, %cst_116 {dimension_numbers = #tpu.dot_dimension_numbers<[1], [0], [0], [1], [0, 0, 1, 1], [], []>} : vector<8x128xf32>, vector<128x384xf32>, vector<8x384xf32> -> vector<8x384xf32>
    %c0_117 = arith.constant 0 : index
    %c0_118 = arith.constant 0 : index
    %402 = vector.load %arg7[%c0_117, %c0_118] : memref<128x384xf32, #tpu.memory_space<vmem>>, vector<128x384xf32>
    %cst_119 = arith.constant dense<0.000000e+00> : vector<8x384xf32>
    %403 = tpu.matmul %399, %402, %cst_119 {dimension_numbers = #tpu.dot_dimension_numbers<[1], [0], [0], [1], [0, 0, 1, 1], [], []>} : vector<8x128xf32>, vector<128x384xf32>, vector<8x384xf32> -> vector<8x384xf32>
    %c6 = arith.constant 6 : index
    %c0_120 = arith.constant 0 : index
    %c0_121 = arith.constant 0 : index
    %404 = vector.load %arg2[%c6, %c0_120, %c0_121] : memref<8x8x384xbf16, #tpu.memory_space<vmem>>, vector<1x8x384xbf16>
    %405 = vector.shape_cast %404 : vector<1x8x384xbf16> to vector<8x384xbf16>
    %406 = arith.extf %405 : vector<8x384xbf16> to vector<8x384xf32>
    %407 = vector.extract_strided_slice %406 {offsets = [0, 0], sizes = [8, 128], strides = [1, 1]} : vector<8x384xf32> to vector<8x128xf32>
    %408 = vector.extract_strided_slice %401 {offsets = [0, 0], sizes = [8, 128], strides = [1, 1]} : vector<8x384xf32> to vector<8x128xf32>
    %409 = arith.addf %407, %408 : vector<8x128xf32>
    %410 = arith.negf %409 : vector<8x128xf32>
    %411 = math.exp %410 : vector<8x128xf32>
    %cst_122 = arith.constant 1.000000e+00 : f32
    %412 = vector.broadcast %cst_122 : f32 to vector<8x128xf32>
    %413 = arith.addf %412, %411 : vector<8x128xf32>
    %414 = arith.divf %412, %413 : vector<8x128xf32>
    %415 = vector.extract_strided_slice %406 {offsets = [0, 128], sizes = [8, 128], strides = [1, 1]} : vector<8x384xf32> to vector<8x128xf32>
    %416 = vector.extract_strided_slice %401 {offsets = [0, 128], sizes = [8, 128], strides = [1, 1]} : vector<8x384xf32> to vector<8x128xf32>
    %417 = arith.addf %415, %416 : vector<8x128xf32>
    %418 = arith.negf %417 : vector<8x128xf32>
    %419 = math.exp %418 : vector<8x128xf32>
    %cst_123 = arith.constant 1.000000e+00 : f32
    %420 = vector.broadcast %cst_123 : f32 to vector<8x128xf32>
    %421 = arith.addf %420, %419 : vector<8x128xf32>
    %422 = arith.divf %420, %421 : vector<8x128xf32>
    %423 = vector.extract_strided_slice %406 {offsets = [0, 256], sizes = [8, 128], strides = [1, 1]} : vector<8x384xf32> to vector<8x128xf32>
    %424 = vector.extract_strided_slice %401 {offsets = [0, 256], sizes = [8, 128], strides = [1, 1]} : vector<8x384xf32> to vector<8x128xf32>
    %425 = arith.addf %424, %5 : vector<8x128xf32>
    %426 = arith.mulf %414, %425 : vector<8x128xf32>
    %427 = arith.addf %423, %426 : vector<8x128xf32>
    %428 = math.tanh %427 : vector<8x128xf32>
    %429 = arith.mulf %422, %369 : vector<8x128xf32>
    %cst_124 = arith.constant 1.000000e+00 : f32
    %430 = vector.broadcast %cst_124 : f32 to vector<8x128xf32>
    %431 = arith.subf %430, %422 : vector<8x128xf32>
    %432 = arith.mulf %431, %428 : vector<8x128xf32>
    %433 = arith.addf %429, %432 : vector<8x128xf32>
    %c0_125 = arith.constant 0 : index
    %c0_126 = arith.constant 0 : index
    %434 = vector.load %arg6[%c0_125, %c0_126] : memref<128x384xf32, #tpu.memory_space<vmem>>, vector<128x384xf32>
    %cst_127 = arith.constant dense<0.000000e+00> : vector<8x384xf32>
    %435 = tpu.matmul %433, %434, %cst_127 {dimension_numbers = #tpu.dot_dimension_numbers<[1], [0], [0], [1], [0, 0, 1, 1], [], []>} : vector<8x128xf32>, vector<128x384xf32>, vector<8x384xf32> -> vector<8x384xf32>
    %436 = arith.addf %435, %8 : vector<8x384xf32>
    %437 = vector.extract_strided_slice %436 {offsets = [0, 0], sizes = [8, 128], strides = [1, 1]} : vector<8x384xf32> to vector<8x128xf32>
    %438 = vector.extract_strided_slice %403 {offsets = [0, 0], sizes = [8, 128], strides = [1, 1]} : vector<8x384xf32> to vector<8x128xf32>
    %439 = arith.addf %437, %438 : vector<8x128xf32>
    %440 = arith.negf %439 : vector<8x128xf32>
    %441 = math.exp %440 : vector<8x128xf32>
    %cst_128 = arith.constant 1.000000e+00 : f32
    %442 = vector.broadcast %cst_128 : f32 to vector<8x128xf32>
    %443 = arith.addf %442, %441 : vector<8x128xf32>
    %444 = arith.divf %442, %443 : vector<8x128xf32>
    %445 = vector.extract_strided_slice %436 {offsets = [0, 128], sizes = [8, 128], strides = [1, 1]} : vector<8x384xf32> to vector<8x128xf32>
    %446 = vector.extract_strided_slice %403 {offsets = [0, 128], sizes = [8, 128], strides = [1, 1]} : vector<8x384xf32> to vector<8x128xf32>
    %447 = arith.addf %445, %446 : vector<8x128xf32>
    %448 = arith.negf %447 : vector<8x128xf32>
    %449 = math.exp %448 : vector<8x128xf32>
    %cst_129 = arith.constant 1.000000e+00 : f32
    %450 = vector.broadcast %cst_129 : f32 to vector<8x128xf32>
    %451 = arith.addf %450, %449 : vector<8x128xf32>
    %452 = arith.divf %450, %451 : vector<8x128xf32>
    %453 = vector.extract_strided_slice %436 {offsets = [0, 256], sizes = [8, 128], strides = [1, 1]} : vector<8x384xf32> to vector<8x128xf32>
    %454 = vector.extract_strided_slice %403 {offsets = [0, 256], sizes = [8, 128], strides = [1, 1]} : vector<8x384xf32> to vector<8x128xf32>
    %455 = arith.addf %454, %11 : vector<8x128xf32>
    %456 = arith.mulf %444, %455 : vector<8x128xf32>
    %457 = arith.addf %453, %456 : vector<8x128xf32>
    %458 = math.tanh %457 : vector<8x128xf32>
    %459 = arith.mulf %452, %399 : vector<8x128xf32>
    %cst_130 = arith.constant 1.000000e+00 : f32
    %460 = vector.broadcast %cst_130 : f32 to vector<8x128xf32>
    %461 = arith.subf %460, %452 : vector<8x128xf32>
    %462 = arith.mulf %461, %458 : vector<8x128xf32>
    %463 = arith.addf %459, %462 : vector<8x128xf32>
    %c0_131 = arith.constant 0 : index
    %c0_132 = arith.constant 0 : index
    %464 = vector.load %arg4[%c0_131, %c0_132] : memref<128x384xf32, #tpu.memory_space<vmem>>, vector<128x384xf32>
    %cst_133 = arith.constant dense<0.000000e+00> : vector<8x384xf32>
    %465 = tpu.matmul %433, %464, %cst_133 {dimension_numbers = #tpu.dot_dimension_numbers<[1], [0], [0], [1], [0, 0, 1, 1], [], []>} : vector<8x128xf32>, vector<128x384xf32>, vector<8x384xf32> -> vector<8x384xf32>
    %c0_134 = arith.constant 0 : index
    %c0_135 = arith.constant 0 : index
    %466 = vector.load %arg7[%c0_134, %c0_135] : memref<128x384xf32, #tpu.memory_space<vmem>>, vector<128x384xf32>
    %cst_136 = arith.constant dense<0.000000e+00> : vector<8x384xf32>
    %467 = tpu.matmul %463, %466, %cst_136 {dimension_numbers = #tpu.dot_dimension_numbers<[1], [0], [0], [1], [0, 0, 1, 1], [], []>} : vector<8x128xf32>, vector<128x384xf32>, vector<8x384xf32> -> vector<8x384xf32>
    %c7 = arith.constant 7 : index
    %c0_137 = arith.constant 0 : index
    %c0_138 = arith.constant 0 : index
    %468 = vector.load %arg2[%c7, %c0_137, %c0_138] : memref<8x8x384xbf16, #tpu.memory_space<vmem>>, vector<1x8x384xbf16>
    %469 = vector.shape_cast %468 : vector<1x8x384xbf16> to vector<8x384xbf16>
    %470 = arith.extf %469 : vector<8x384xbf16> to vector<8x384xf32>
    %471 = vector.extract_strided_slice %470 {offsets = [0, 0], sizes = [8, 128], strides = [1, 1]} : vector<8x384xf32> to vector<8x128xf32>
    %472 = vector.extract_strided_slice %465 {offsets = [0, 0], sizes = [8, 128], strides = [1, 1]} : vector<8x384xf32> to vector<8x128xf32>
    %473 = arith.addf %471, %472 : vector<8x128xf32>
    %474 = arith.negf %473 : vector<8x128xf32>
    %475 = math.exp %474 : vector<8x128xf32>
    %cst_139 = arith.constant 1.000000e+00 : f32
    %476 = vector.broadcast %cst_139 : f32 to vector<8x128xf32>
    %477 = arith.addf %476, %475 : vector<8x128xf32>
    %478 = arith.divf %476, %477 : vector<8x128xf32>
    %479 = vector.extract_strided_slice %470 {offsets = [0, 128], sizes = [8, 128], strides = [1, 1]} : vector<8x384xf32> to vector<8x128xf32>
    %480 = vector.extract_strided_slice %465 {offsets = [0, 128], sizes = [8, 128], strides = [1, 1]} : vector<8x384xf32> to vector<8x128xf32>
    %481 = arith.addf %479, %480 : vector<8x128xf32>
    %482 = arith.negf %481 : vector<8x128xf32>
    %483 = math.exp %482 : vector<8x128xf32>
    %cst_140 = arith.constant 1.000000e+00 : f32
    %484 = vector.broadcast %cst_140 : f32 to vector<8x128xf32>
    %485 = arith.addf %484, %483 : vector<8x128xf32>
    %486 = arith.divf %484, %485 : vector<8x128xf32>
    %487 = vector.extract_strided_slice %470 {offsets = [0, 256], sizes = [8, 128], strides = [1, 1]} : vector<8x384xf32> to vector<8x128xf32>
    %488 = vector.extract_strided_slice %465 {offsets = [0, 256], sizes = [8, 128], strides = [1, 1]} : vector<8x384xf32> to vector<8x128xf32>
    %489 = arith.addf %488, %5 : vector<8x128xf32>
    %490 = arith.mulf %478, %489 : vector<8x128xf32>
    %491 = arith.addf %487, %490 : vector<8x128xf32>
    %492 = math.tanh %491 : vector<8x128xf32>
    %493 = arith.mulf %486, %433 : vector<8x128xf32>
    %cst_141 = arith.constant 1.000000e+00 : f32
    %494 = vector.broadcast %cst_141 : f32 to vector<8x128xf32>
    %495 = arith.subf %494, %486 : vector<8x128xf32>
    %496 = arith.mulf %495, %492 : vector<8x128xf32>
    %497 = arith.addf %493, %496 : vector<8x128xf32>
    %c0_142 = arith.constant 0 : index
    %c0_143 = arith.constant 0 : index
    %498 = vector.load %arg6[%c0_142, %c0_143] : memref<128x384xf32, #tpu.memory_space<vmem>>, vector<128x384xf32>
    %cst_144 = arith.constant dense<0.000000e+00> : vector<8x384xf32>
    %499 = tpu.matmul %497, %498, %cst_144 {dimension_numbers = #tpu.dot_dimension_numbers<[1], [0], [0], [1], [0, 0, 1, 1], [], []>} : vector<8x128xf32>, vector<128x384xf32>, vector<8x384xf32> -> vector<8x384xf32>
    %500 = arith.addf %499, %8 : vector<8x384xf32>
    %501 = vector.extract_strided_slice %500 {offsets = [0, 0], sizes = [8, 128], strides = [1, 1]} : vector<8x384xf32> to vector<8x128xf32>
    %502 = vector.extract_strided_slice %467 {offsets = [0, 0], sizes = [8, 128], strides = [1, 1]} : vector<8x384xf32> to vector<8x128xf32>
    %503 = arith.addf %501, %502 : vector<8x128xf32>
    %504 = arith.negf %503 : vector<8x128xf32>
    %505 = math.exp %504 : vector<8x128xf32>
    %cst_145 = arith.constant 1.000000e+00 : f32
    %506 = vector.broadcast %cst_145 : f32 to vector<8x128xf32>
    %507 = arith.addf %506, %505 : vector<8x128xf32>
    %508 = arith.divf %506, %507 : vector<8x128xf32>
    %509 = vector.extract_strided_slice %500 {offsets = [0, 128], sizes = [8, 128], strides = [1, 1]} : vector<8x384xf32> to vector<8x128xf32>
    %510 = vector.extract_strided_slice %467 {offsets = [0, 128], sizes = [8, 128], strides = [1, 1]} : vector<8x384xf32> to vector<8x128xf32>
    %511 = arith.addf %509, %510 : vector<8x128xf32>
    %512 = arith.negf %511 : vector<8x128xf32>
    %513 = math.exp %512 : vector<8x128xf32>
    %cst_146 = arith.constant 1.000000e+00 : f32
    %514 = vector.broadcast %cst_146 : f32 to vector<8x128xf32>
    %515 = arith.addf %514, %513 : vector<8x128xf32>
    %516 = arith.divf %514, %515 : vector<8x128xf32>
    %517 = vector.extract_strided_slice %500 {offsets = [0, 256], sizes = [8, 128], strides = [1, 1]} : vector<8x384xf32> to vector<8x128xf32>
    %518 = vector.extract_strided_slice %467 {offsets = [0, 256], sizes = [8, 128], strides = [1, 1]} : vector<8x384xf32> to vector<8x128xf32>
    %519 = arith.addf %518, %11 : vector<8x128xf32>
    %520 = arith.mulf %508, %519 : vector<8x128xf32>
    %521 = arith.addf %517, %520 : vector<8x128xf32>
    %522 = math.tanh %521 : vector<8x128xf32>
    %523 = arith.mulf %516, %463 : vector<8x128xf32>
    %cst_147 = arith.constant 1.000000e+00 : f32
    %524 = vector.broadcast %cst_147 : f32 to vector<8x128xf32>
    %525 = arith.subf %524, %516 : vector<8x128xf32>
    %526 = arith.mulf %525, %522 : vector<8x128xf32>
    %527 = arith.addf %523, %526 : vector<8x128xf32>
    %c0_148 = arith.constant 0 : index
    %c0_149 = arith.constant 0 : index
    %c0_150 = arith.constant 0 : index
    %528 = vector.load %arg13[%c0_148, %c0_149, %c0_150] : memref<2x8x128xf32, #tpu.memory_space<vmem>>, vector<1x8x128xf32>
    %529 = vector.shape_cast %528 : vector<1x8x128xf32> to vector<8x128xf32>
    %530 = vector.shape_cast %497 : vector<8x128xf32> to vector<1x8x128xf32>
    tpu.vector_store %arg13[%c0_148, %c0_149, %c0_150], %530 {strides = array<i32>} : memref<2x8x128xf32, #tpu.memory_space<vmem>>, vector<1x8x128xf32>,
    %c1_151 = arith.constant 1 : index
    %c0_152 = arith.constant 0 : index
    %c0_153 = arith.constant 0 : index
    %531 = vector.load %arg13[%c1_151, %c0_152, %c0_153] : memref<2x8x128xf32, #tpu.memory_space<vmem>>, vector<1x8x128xf32>
    %532 = vector.shape_cast %531 : vector<1x8x128xf32> to vector<8x128xf32>
    %533 = vector.shape_cast %527 : vector<8x128xf32> to vector<1x8x128xf32>
    tpu.vector_store %arg13[%c1_151, %c0_152, %c0_153], %533 {strides = array<i32>} : memref<2x8x128xf32, #tpu.memory_space<vmem>>, vector<1x8x128xf32>,
    %c0_i32_154 = arith.constant 0 : i32
    %534 = arith.cmpi eq, %arg1, %c0_i32_154 : i32
    %535 = arith.extui %534 : i1 to i32
    %c0_i32_155 = arith.constant 0 : i32
    %536 = arith.cmpi ne, %535, %c0_i32_155 : i32
    scf.if %536 {
      %c0_156 = arith.constant 0 : index
      %c0_157 = arith.constant 0 : index
      %537 = vector.load %arg10[%c0_156, %c0_157] : memref<128x4xf32, #tpu.memory_space<vmem>>, vector<128x4xf32>
      %cst_158 = arith.constant dense<0.000000e+00> : vector<8x4xf32>
      %538 = tpu.matmul %527, %537, %cst_158 {dimension_numbers = #tpu.dot_dimension_numbers<[1], [0], [0], [1], [0, 0, 1, 1], [], []>} : vector<8x128xf32>, vector<128x4xf32>, vector<8x4xf32> -> vector<8x4xf32>
      %c0_159 = arith.constant 0 : index
      %c0_160 = arith.constant 0 : index
      %539 = vector.load %arg11[%c0_159, %c0_160] : memref<1x4xf32, #tpu.memory_space<vmem>>, vector<1x4xf32>
      %540 = vector.broadcast %539 : vector<1x4xf32> to vector<8x4xf32>
      %541 = arith.addf %538, %540 : vector<8x4xf32>
      %c0_161 = arith.constant 0 : index
      %c0_162 = arith.constant 0 : index
      %542 = vector.load %arg12[%c0_161, %c0_162] : memref<8x4xf32, #tpu.memory_space<vmem>>, vector<8x4xf32>
      tpu.vector_store %arg12[%c0_161, %c0_162], %541 {strides = array<i32>} : memref<8x4xf32, #tpu.memory_space<vmem>>, vector<8x4xf32>,
    } else {
    }
    return
  }
  func.func @transform_0(%arg0: i32, %arg1: i32) -> (i32, i32, i32) {
    %c0_i32 = arith.constant 0 : i32
    %c0_i32_0 = arith.constant 0 : i32
    return %arg1, %arg0, %c0_i32 : i32, i32, i32
  }
  func.func @transform_1(%arg0: i32, %arg1: i32) -> (i32, i32, i32) {
    %c0_i32 = arith.constant 0 : i32
    %c0_i32_0 = arith.constant 0 : i32
    %c0_i32_1 = arith.constant 0 : i32
    return %c0_i32, %arg0, %c0_i32_0 : i32, i32, i32
  }
  func.func @transform_2(%arg0: i32, %arg1: i32) -> (i32, i32) {
    %c0_i32 = arith.constant 0 : i32
    %c0_i32_0 = arith.constant 0 : i32
    %c0_i32_1 = arith.constant 0 : i32
    return %c0_i32, %c0_i32_0 : i32, i32
  }
  func.func @transform_3(%arg0: i32, %arg1: i32) -> (i32, i32) {
    %c0_i32 = arith.constant 0 : i32
    %c0_i32_0 = arith.constant 0 : i32
    %c0_i32_1 = arith.constant 0 : i32
    return %c0_i32, %c0_i32_0 : i32, i32
  }
  func.func @transform_4(%arg0: i32, %arg1: i32) -> (i32, i32) {
    %c0_i32 = arith.constant 0 : i32
    %c0_i32_0 = arith.constant 0 : i32
    %c0_i32_1 = arith.constant 0 : i32
    return %c0_i32, %c0_i32_0 : i32, i32
  }
  func.func @transform_5(%arg0: i32, %arg1: i32) -> (i32, i32) {
    %c0_i32 = arith.constant 0 : i32
    %c0_i32_0 = arith.constant 0 : i32
    %c0_i32_1 = arith.constant 0 : i32
    return %c0_i32, %c0_i32_0 : i32, i32
  }
  func.func @transform_6(%arg0: i32, %arg1: i32) -> (i32, i32) {
    %c0_i32 = arith.constant 0 : i32
    %c0_i32_0 = arith.constant 0 : i32
    %c0_i32_1 = arith.constant 0 : i32
    return %c0_i32, %c0_i32_0 : i32, i32
  }
  func.func @transform_7(%arg0: i32, %arg1: i32) -> (i32, i32) {
    %c0_i32 = arith.constant 0 : i32
    %c0_i32_0 = arith.constant 0 : i32
    %c0_i32_1 = arith.constant 0 : i32
    return %c0_i32, %c0_i32_0 : i32, i32
  }
  func.func @transform_8(%arg0: i32, %arg1: i32) -> (i32, i32) {
    %c0_i32 = arith.constant 0 : i32
    %c0_i32_0 = arith.constant 0 : i32
    %c0_i32_1 = arith.constant 0 : i32
    return %c0_i32, %c0_i32_0 : i32, i32
  }
  func.func @transform_9(%arg0: i32, %arg1: i32) -> (i32, i32) {
    %c0_i32 = arith.constant 0 : i32
    %c0_i32_0 = arith.constant 0 : i32
    %c0_i32_1 = arith.constant 0 : i32
    return %c0_i32, %c0_i32_0 : i32, i32
  }
  func.func @transform_10(%arg0: i32, %arg1: i32) -> (i32, i32) {
    %c0_i32 = arith.constant 0 : i32
    %c0_i32_0 = arith.constant 0 : i32
    return %arg0, %c0_i32 : i32, i32
  }
  func.func @transform_11(%arg0: i32, %arg1: i32) -> (i32, i32, i32) {
    %c0_i32 = arith.constant 0 : i32
    %c0_i32_0 = arith.constant 0 : i32
    %c0_i32_1 = arith.constant 0 : i32
    return %c0_i32, %arg0, %c0_i32_0 : i32, i32, i32
  }
}

</mosaic_0001>

<llo_original>
// kernel: gru_pallas.1
$region0: #{gru_pallas.1}
  #allocation0 [shape = 'u32[]', space=smem, size = 0x4, offset = 0x4, fixed_abs, tag = 'smem constant byte address 0x4 - core index']
  #allocation1 [shape = 'u32[72,128]{1,0:T(1,128)}', space=vmem, size = 0x9000, scoped, tag = 'internal scratch']
  %s0 = inlined_call_operand.vmem [shape: bf16[8,8,384], index: 0, kind: input, shape index: {}]
  %s1 = inlined_call_operand.vmem [shape: f32[2,8,128], index: 1, kind: input, shape index: {}]
  %s2 = inlined_call_operand.vmem [shape: f32[128,384], index: 2, kind: input, shape index: {}]
  %s3 = inlined_call_operand.vmem [shape: f32[1,128], index: 3, kind: input, shape index: {}]
  %s4 = inlined_call_operand.vmem [shape: f32[128,384], index: 4, kind: input, shape index: {}]
  %s5 = inlined_call_operand.vmem [shape: f32[128,384], index: 5, kind: input, shape index: {}]
  %s6 = inlined_call_operand.vmem [shape: f32[1,384], index: 6, kind: input, shape index: {}]
  %s7 = inlined_call_operand.vmem [shape: f32[1,128], index: 7, kind: input, shape index: {}]
  %s8 = inlined_call_operand.vmem [shape: f32[128,4], index: 8, kind: input, shape index: {}]
  %s9 = inlined_call_operand.vmem [shape: f32[1,4], index: 9, kind: input, shape index: {}]
  %s10 = inlined_call_operand.vmem [shape: f32[8,4], index: 10, kind: output, shape index: {0}]
  %s11 = inlined_call_operand.hbm [shape: f32[2,8,128], index: 11, kind: output, shape index: {1}]
  %12 = xla_tuple %s10, %s11
  %s13 = sld [smem:[#allocation0]]
  $region66: #{gru_pallas.1} parent=0
    _
  %s15 = ssub.s32 1, %s13
  %s16 = scalar_select 0, %s15, %s13
  $region1: #{gru_pallas.1} parent=0
    #allocation2 [shape = 'u8[8192]{0}', space=vmem, size = 0x2000, scoped, tag = 'output window, operand 1, single buffered']
    #allocation3 [shape = 's32[1]{0}', space=sflag, size = 0x4, scoped, tag = 'scoped memory for gru_pallas.1']
    %17 = vsyncpa [#allocation3], 0
    // Predicated region
    $region2: #{gru_pallas.1} parent=1 // pred_check
      _
    $region3: #{gru_pallas.1} parent=1 // pred_check_branch
      %19 = sbr.rel (0) target = $region5
    $region4: #{gru_pallas.1} parent=1 // pred_region
      _
    $region5: #{gru_pallas.1} parent=1 // pred_fallthru
      _
    // Predicated region
    $region6: #{gru_pallas.1} parent=1 // pred_check
      _
    $region7: #{gru_pallas.1} parent=1 // pred_check_branch
      %21 = sbr.rel (0) target = $region9
    $region8: #{gru_pallas.1} parent=1 // pred_region
      _
    $region9: #{gru_pallas.1} parent=1 // pred_fallthru
      _
    // Predicated region
    $region10: #{gru_pallas.1} parent=1 // pred_check
      _
    $region11: #{gru_pallas.1} parent=1 // pred_check_branch
      %23 = sbr.rel (0) target = $region13
    $region12: #{gru_pallas.1} parent=1 // pred_region
      _
    $region13: #{gru_pallas.1} parent=1 // pred_fallthru
      _
    // Predicated region
    $region14: #{gru_pallas.1} parent=1 // pred_check
      _
    $region15: #{gru_pallas.1} parent=1 // pred_check_branch
      %25 = sbr.rel (0) target = $region17
    $region16: #{gru_pallas.1} parent=1 // pred_region
      _
    $region17: #{gru_pallas.1} parent=1 // pred_fallthru
      _
    // Predicated region
    $region18: #{gru_pallas.1} parent=1 // pred_check
      _
    $region19: #{gru_pallas.1} parent=1 // pred_check_branch
      %27 = sbr.rel (0) target = $region21
    $region20: #{gru_pallas.1} parent=1 // pred_region
      _
    $region21: #{gru_pallas.1} parent=1 // pred_fallthru
      _
    // Predicated region
    $region22: #{gru_pallas.1} parent=1 // pred_check
      _
    $region23: #{gru_pallas.1} parent=1 // pred_check_branch
      %29 = sbr.rel (0) target = $region25
    $region24: #{gru_pallas.1} parent=1 // pred_region
      _
    $region25: #{gru_pallas.1} parent=1 // pred_fallthru
      _
    // Predicated region
    $region26: #{gru_pallas.1} parent=1 // pred_check
      _
    $region27: #{gru_pallas.1} parent=1 // pred_check_branch
      %31 = sbr.rel (0) target = $region29
    $region28: #{gru_pallas.1} parent=1 // pred_region
      _
    $region29: #{gru_pallas.1} parent=1 // pred_fallthru
      _
    // Predicated region
    $region30: #{gru_pallas.1} parent=1 // pred_check
      _
    $region31: #{gru_pallas.1} parent=1 // pred_check_branch
      %33 = sbr.rel (0) target = $region33
    $region32: #{gru_pallas.1} parent=1 // pred_region
      _
    $region33: #{gru_pallas.1} parent=1 // pred_fallthru
      _
    // Predicated region
    $region34: #{gru_pallas.1} parent=1 // pred_check
      _
    $region35: #{gru_pallas.1} parent=1 // pred_check_branch
      %35 = sbr.rel (0) target = $region37
    $region36: #{gru_pallas.1} parent=1 // pred_region
      _
    $region37: #{gru_pallas.1} parent=1 // pred_fallthru
      _
    // Predicated region
    $region38: #{gru_pallas.1} parent=1 // pred_check
      _
    $region39: #{gru_pallas.1} parent=1 // pred_check_branch
      %37 = sbr.rel (0) target = $region41
    $region40: #{gru_pallas.1} parent=1 // pred_region
      _
    $region41: #{gru_pallas.1} parent=1 // pred_fallthru
      _
    %p38 = scmp.eq.s32.totalorder 0, 0
    // Predicated region
    $region42: #{gru_pallas.1} parent=1 // pred_check
      %p39 = pneg %p38
    $region43: #{gru_pallas.1} parent=1 // pred_check_branch
      %41 = sbr.rel (%p39) target = $region45
    $region44: #{gru_pallas.1} parent=1 // pred_region
      %v42 = vld [vmem:[%s1] sm:$0xff]
      %v43 = vld [vmem:[%s1 + $0x8] sm:$0xff]
      %44 = vst [vmem:[#allocation2] sm:$0xff] %v42
      %45 = vst [vmem:[#allocation2 + $0x8] sm:$0xff] %v43
    $region45: #{gru_pallas.1} parent=1 // pred_fallthru
      _
    %v46 = vld [vmem:[%s3] sm:$0x1]
    %v48 = vperm.slane %v46, 0
    %v50 = vld [vmem:[%s6] sm:$0x7]
    %v52 = vperm.slane %v50, 0
    %v53 = vperm.slane %v50, 1
    %v54 = vperm.slane %v50, 2
    %v58 = vld [vmem:[%s7] sm:$0x1]
    %v60 = vperm.slane %v58, 0
    %v62 = vld [vmem:[#allocation2] sm:$0xff]
    %s63 = scalar_lea.vmem [#allocation2], 8
    %v64 = vld [vmem:[%s63] sm:$0xff]
    %v65 = vld [vmem:[%s2] sm:$0xff]
    %v66 = vld [vmem:[%s2 + $0x8] sm:$0xff]
    %v67 = vld [vmem:[%s2 + $0x10] sm:$0xff]
    %v68 = vld [vmem:[%s2 + $0x18] sm:$0xff]
    %v69 = vld [vmem:[%s2 + $0x20] sm:$0xff]
    %v70 = vld [vmem:[%s2 + $0x28] sm:$0xff]
    %v71 = vld [vmem:[%s2 + $0x30] sm:$0xff]
    %v72 = vld [vmem:[%s2 + $0x38] sm:$0xff]
    %v73 = vld [vmem:[%s2 + $0x40] sm:$0xff]
    %v74 = vld [vmem:[%s2 + $0x48] sm:$0xff]
    %v75 = vld [vmem:[%s2 + $0x50] sm:$0xff]
    %v76 = vld [vmem:[%s2 + $0x58] sm:$0xff]
    %v77 = vld [vmem:[%s2 + $0x60] sm:$0xff]
    %v78 = vld [vmem:[%s2 + $0x68] sm:$0xff]
    %v79 = vld [vmem:[%s2 + $0x70] sm:$0xff]
    %v80 = vld [vmem:[%s2 + $0x78] sm:$0xff]
    %v81 = vld [vmem:[%s2 + $0x80] sm:$0xff]
    %v82 = vld [vmem:[%s2 + $0x88] sm:$0xff]
    %v83 = vld [vmem:[%s2 + $0x90] sm:$0xff]
    %v84 = vld [vmem:[%s2 + $0x98] sm:$0xff]
    %v85 = vld [vmem:[%s2 + $0xa0] sm:$0xff]
    %v86 = vld [vmem:[%s2 + $0xa8] sm:$0xff]
    %v87 = vld [vmem:[%s2 + $0xb0] sm:$0xff]
    %v88 = vld [vmem:[%s2 + $0xb8] sm:$0xff]
    %v89 = vld [vmem:[%s2 + $0xc0] sm:$0xff]
    %v90 = vld [vmem:[%s2 + $0xc8] sm:$0xff]
    %v91 = vld [vmem:[%s2 + $0xd0] sm:$0xff]
    %v92 = vld [vmem:[%s2 + $0xd8] sm:$0xff]
    %v93 = vld [vmem:[%s2 + $0xe0] sm:$0xff]
    %v94 = vld [vmem:[%s2 + $0xe8] sm:$0xff]
    %v95 = vld [vmem:[%s2 + $0xf0] sm:$0xff]
    %v96 = vld [vmem:[%s2 + $0xf8] sm:$0xff]
    %v97 = vld [vmem:[%s2 + $0x100] sm:$0xff]
    %v98 = vld [vmem:[%s2 + $0x108] sm:$0xff]
    %v99 = vld [vmem:[%s2 + $0x110] sm:$0xff]
    %v100 = vld [vmem:[%s2 + $0x118] sm:$0xff]
    %v101 = vld [vmem:[%s2 + $0x120] sm:$0xff]
    %v102 = vld [vmem:[%s2 + $0x128] sm:$0xff]
    %v103 = vld [vmem:[%s2 + $0x130] sm:$0xff]
    %v104 = vld [vmem:[%s2 + $0x138] sm:$0xff]
    %v105 = vld [vmem:[%s2 + $0x140] sm:$0xff]
    %v106 = vld [vmem:[%s2 + $0x148] sm:$0xff]
    %v107 = vld [vmem:[%s2 + $0x150] sm:$0xff]
    %v108 = vld [vmem:[%s2 + $0x158] sm:$0xff]
    %v109 = vld [vmem:[%s2 + $0x160] sm:$0xff]
    %v110 = vld [vmem:[%s2 + $0x168] sm:$0xff]
    %v111 = vld [vmem:[%s2 + $0x170] sm:$0xff]
    %v112 = vld [vmem:[%s2 + $0x178] sm:$0xff]
    %113 = vmatpush.msra.mxu0 %v110
    %114 = vmatpush.msra.mxu0 %v107
    %115 = vmatpush.msra.mxu0 %v104
    %116 = vmatpush.msra.mxu0 %v101
    %117 = vmatpush.msra.mxu0 %v98
    %118 = vmatpush.msra.mxu0 %v95
    %119 = vmatpush.msra.mxu0 %v92
    %120 = vmatpush.msra.mxu0 %v89
    %121 = vmatpush.msra.mxu0 %v86
    %122 = vmatpush.msra.mxu0 %v83
    %123 = vmatpush.msra.mxu0 %v80
    %124 = vmatpush.msra.mxu0 %v77
    %125 = vmatpush.msra.mxu0 %v74
    %126 = vmatpush.msra.mxu0 %v71
    %127 = vmatpush.msra.mxu0 %v68
    %128 = vmatpush.msra.mxu0 %v65
    %129 = vmatmul.f32.gmra.mxu0 %v62
    %v130 = vpop.f32.mrf.mxu0
    %v131 = vadd.f32 0.0, %v130
    %132 = vdwg.mxu0
    %133 = vmatpush.msra.mxu0 %v111
    %134 = vmatpush.msra.mxu0 %v108
    %135 = vmatpush.msra.mxu0 %v105
    %136 = vmatpush.msra.mxu0 %v102
    %137 = vmatpush.msra.mxu0 %v99
    %138 = vmatpush.msra.mxu0 %v96
    %139 = vmatpush.msra.mxu0 %v93
    %140 = vmatpush.msra.mxu0 %v90
    %141 = vmatpush.msra.mxu0 %v87
    %142 = vmatpush.msra.mxu0 %v84
    %143 = vmatpush.msra.mxu0 %v81
    %144 = vmatpush.msra.mxu0 %v78
    %145 = vmatpush.msra.mxu0 %v75
    %146 = vmatpush.msra.mxu0 %v72
    %147 = vmatpush.msra.mxu0 %v69
    %148 = vmatpush.msra.mxu0 %v66
    %149 = vmatmul.f32.gmra.mxu0 %v62
    %v150 = vpop.f32.mrf.mxu0
    %v151 = vadd.f32 0.0, %v150
    %152 = vdwg.mxu0
    %153 = vmatpush.msra.mxu0 %v112
    %154 = vmatpush.msra.mxu0 %v109
    %155 = vmatpush.msra.mxu0 %v106
    %156 = vmatpush.msra.mxu0 %v103
    %157 = vmatpush.msra.mxu0 %v100
    %158 = vmatpush.msra.mxu0 %v97
    %159 = vmatpush.msra.mxu0 %v94
    %160 = vmatpush.msra.mxu0 %v91
    %161 = vmatpush.msra.mxu0 %v88
    %162 = vmatpush.msra.mxu0 %v85
    %163 = vmatpush.msra.mxu0 %v82
    %164 = vmatpush.msra.mxu0 %v79
    %165 = vmatpush.msra.mxu0 %v76
    %166 = vmatpush.msra.mxu0 %v73
    %167 = vmatpush.msra.mxu0 %v70
    %168 = vmatpush.msra.mxu0 %v67
    %169 = vmatmul.f32.gmra.mxu0 %v62
    %v170 = vpop.f32.mrf.mxu0
    %v171 = vadd.f32 0.0, %v170
    %172 = vdwg.mxu0
    %v173 = vld [vmem:[%s5] sm:$0xff]
    %v174 = vld [vmem:[%s5 + $0x8] sm:$0xff]
    %v175 = vld [vmem:[%s5 + $0x10] sm:$0xff]
    %v176 = vld [vmem:[%s5 + $0x18] sm:$0xff]
    %v177 = vld [vmem:[%s5 + $0x20] sm:$0xff]
    %v178 = vld [vmem:[%s5 + $0x28] sm:$0xff]
    %v179 = vld [vmem:[%s5 + $0x30] sm:$0xff]
    %v180 = vld [vmem:[%s5 + $0x38] sm:$0xff]
    %v181 = vld [vmem:[%s5 + $0x40] sm:$0xff]
    %v182 = vld [vmem:[%s5 + $0x48] sm:$0xff]
    %v183 = vld [vmem:[%s5 + $0x50] sm:$0xff]
    %v184 = vld [vmem:[%s5 + $0x58] sm:$0xff]
    %v185 = vld [vmem:[%s5 + $0x60] sm:$0xff]
    %v186 = vld [vmem:[%s5 + $0x68] sm:$0xff]
    %v187 = vld [vmem:[%s5 + $0x70] sm:$0xff]
    %v188 = vld [vmem:[%s5 + $0x78] sm:$0xff]
    %v189 = vld [vmem:[%s5 + $0x80] sm:$0xff]
    %v190 = vld [vmem:[%s5 + $0x88] sm:$0xff]
    %v191 = vld [vmem:[%s5 + $0x90] sm:$0xff]
    %v192 = vld [vmem:[%s5 + $0x98] sm:$0xff]
    %v193 = vld [vmem:[%s5 + $0xa0] sm:$0xff]
    %v194 = vld [vmem:[%s5 + $0xa8] sm:$0xff]
    %v195 = vld [vmem:[%s5 + $0xb0] sm:$0xff]
    %v196 = vld [vmem:[%s5 + $0xb8] sm:$0xff]
    %v197 = vld [vmem:[%s5 + $0xc0] sm:$0xff]
    %v198 = vld [vmem:[%s5 + $0xc8] sm:$0xff]
    %v199 = vld [vmem:[%s5 + $0xd0] sm:$0xff]
    %v200 = vld [vmem:[%s5 + $0xd8] sm:$0xff]
    %v201 = vld [vmem:[%s5 + $0xe0] sm:$0xff]
    %v202 = vld [vmem:[%s5 + $0xe8] sm:$0xff]
    %v203 = vld [vmem:[%s5 + $0xf0] sm:$0xff]
    %v204 = vld [vmem:[%s5 + $0xf8] sm:$0xff]
    %v205 = vld [vmem:[%s5 + $0x100] sm:$0xff]
    %v206 = vld [vmem:[%s5 + $0x108] sm:$0xff]
    %v207 = vld [vmem:[%s5 + $0x110] sm:$0xff]
    %v208 = vld [vmem:[%s5 + $0x118] sm:$0xff]
    %v209 = vld [vmem:[%s5 + $0x120] sm:$0xff]
    %v210 = vld [vmem:[%s5 + $0x128] sm:$0xff]
    %v211 = vld [vmem:[%s5 + $0x130] sm:$0xff]
    %v212 = vld [vmem:[%s5 + $0x138] sm:$0xff]
    %v213 = vld [vmem:[%s5 + $0x140] sm:$0xff]
    %v214 = vld [vmem:[%s5 + $0x148] sm:$0xff]
    %v215 = vld [vmem:[%s5 + $0x150] sm:$0xff]
    %v216 = vld [vmem:[%s5 + $0x158] sm:$0xff]
    %v217 = vld [vmem:[%s5 + $0x160] sm:$0xff]
    %v218 = vld [vmem:[%s5 + $0x168] sm:$0xff]
    %v219 = vld [vmem:[%s5 + $0x170] sm:$0xff]
    %v220 = vld [vmem:[%s5 + $0x178] sm:$0xff]
    %221 = vmatpush.msra.mxu0 %v218
    %222 = vmatpush.msra.mxu0 %v215
    %223 = vmatpush.msra.mxu0 %v212
    %224 = vmatpush.msra.mxu0 %v209
    %225 = vmatpush.msra.mxu0 %v206
    %226 = vmatpush.msra.mxu0 %v203
    %227 = vmatpush.msra.mxu0 %v200
    %228 = vmatpush.msra.mxu0 %v197
    %229 = vmatpush.msra.mxu0 %v194
    %230 = vmatpush.msra.mxu0 %v191
    %231 = vmatpush.msra.mxu0 %v188
    %232 = vmatpush.msra.mxu0 %v185
    %233 = vmatpush.msra.mxu0 %v182
    %234 = vmatpush.msra.mxu0 %v179
    %235 = vmatpush.msra.mxu0 %v176
    %236 = vmatpush.msra.mxu0 %v173
    %237 = vmatmul.f32.gmra.mxu0 %v64
    %v238 = vpop.f32.mrf.mxu0
    %v239 = vadd.f32 0.0, %v238
    %240 = vdwg.mxu0
    %241 = vmatpush.msra.mxu0 %v219
    %242 = vmatpush.msra.mxu0 %v216
    %243 = vmatpush.msra.mxu0 %v213
    %244 = vmatpush.msra.mxu0 %v210
    %245 = vmatpush.msra.mxu0 %v207
    %246 = vmatpush.msra.mxu0 %v204
    %247 = vmatpush.msra.mxu0 %v201
    %248 = vmatpush.msra.mxu0 %v198
    %249 = vmatpush.msra.mxu0 %v195
    %250 = vmatpush.msra.mxu0 %v192
    %251 = vmatpush.msra.mxu0 %v189
    %252 = vmatpush.msra.mxu0 %v186
    %253 = vmatpush.msra.mxu0 %v183
    %254 = vmatpush.msra.mxu0 %v180
    %255 = vmatpush.msra.mxu0 %v177
    %256 = vmatpush.msra.mxu0 %v174
    %257 = vmatmul.f32.gmra.mxu0 %v64
    %v258 = vpop.f32.mrf.mxu0
    %v259 = vadd.f32 0.0, %v258
    %260 = vdwg.mxu0
    %261 = vmatpush.msra.mxu0 %v220
    %262 = vmatpush.msra.mxu0 %v217
    %263 = vmatpush.msra.mxu0 %v214
    %264 = vmatpush.msra.mxu0 %v211
    %265 = vmatpush.msra.mxu0 %v208
    %266 = vmatpush.msra.mxu0 %v205
    %267 = vmatpush.msra.mxu0 %v202
    %268 = vmatpush.msra.mxu0 %v199
    %269 = vmatpush.msra.mxu0 %v196
    %270 = vmatpush.msra.mxu0 %v193
    %271 = vmatpush.msra.mxu0 %v190
    %272 = vmatpush.msra.mxu0 %v187
    %273 = vmatpush.msra.mxu0 %v184
    %274 = vmatpush.msra.mxu0 %v181
    %275 = vmatpush.msra.mxu0 %v178
    %276 = vmatpush.msra.mxu0 %v175
    %277 = vmatmul.f32.gmra.mxu0 %v64
    %v278 = vpop.f32.mrf.mxu0
    %v279 = vadd.f32 0.0, %v278
    %280 = vdwg.mxu0
    %v281 = vld [vmem:[%s0] sm:$0xff]
    %v282 = vld [vmem:[%s0 + $0x8] sm:$0xf]
    %v283 = vunpack.c.l.bf16 %v281
    %v284 = vunpack.c.h.bf16 %v281
    %v285 = vunpack.c.l.bf16 %v282
    %v286 = vadd.f32 %v283, %v131
    %v287 = vxor.u32 %v286, 2147483648
    %v288 = vmul.f32 %v287, 1.442695
    %v289 = vpow.pop %v288
    %v290 = vadd.f32 %v289, 1.0
    %v291 = vrcp.pop %v290
    %v292 = vmul.f32 %v290, %v291
    %v293 = vsub.f32 1.0, %v292
    %v294 = vmul.f32 %v291, %v293
    %v295 = vadd.f32 %v291, %v294
    %vm296 = vweird.f32 %v290
    %vm297 = vweird.f32 %v291
    %vm298 = vmor %vm296, %vm297
    %v299 = vsel %vm298, %v291, %v295
    %v300 = vand.u32 2147483647, %v290
    %vm301 = vcmp.eq.f32.partialorder %v300, 8.507059e+37
    %v302 = vand.u32 %v290, 2147483648
    %v303 = vor.u32 1.1754944e-38, %v302
    %v304 = vsel %vm301, %v303, %v299
    %v305 = vmul.f32 1.0, %v304
    %v306 = vadd.f32 %v284, %v151
    %v307 = vxor.u32 %v306, 2147483648
    %v308 = vmul.f32 %v307, 1.442695
    %v309 = vpow.pop %v308
    %v310 = vadd.f32 %v309, 1.0
    %v311 = vrcp.pop %v310
    %v312 = vmul.f32 %v310, %v311
    %v313 = vsub.f32 1.0, %v312
    %v314 = vmul.f32 %v311, %v313
    %v315 = vadd.f32 %v311, %v314
    %vm316 = vweird.f32 %v310
    %vm317 = vweird.f32 %v311
    %vm318 = vmor %vm316, %vm317
    %v319 = vsel %vm318, %v311, %v315
    %v320 = vand.u32 2147483647, %v310
    %vm321 = vcmp.eq.f32.partialorder %v320, 8.507059e+37
    %v322 = vand.u32 %v310, 2147483648
    %v323 = vor.u32 1.1754944e-38, %v322
    %v324 = vsel %vm321, %v323, %v319
    %v325 = vmul.f32 1.0, %v324
    %v326 = vadd.f32 %v171, %v48
    %v327 = vmul.f32 %v305, %v326
    %v328 = vadd.f32 %v285, %v327
    %v329 = vtanh.pop %v328
    %v330 = vmul.f32 %v325, %v62
    %v331 = vsub.f32 1.0, %v325
    %v332 = vmul.f32 %v331, %v329
    %v333 = vadd.f32 %v330, %v332
    %v334 = vld [vmem:[%s4] sm:$0xff]
    %v335 = vld [vmem:[%s4 + $0x8] sm:$0xff]
    %v336 = vld [vmem:[%s4 + $0x10] sm:$0xff]
    %v337 = vld [vmem:[%s4 + $0x18] sm:$0xff]
    %v338 = vld [vmem:[%s4 + $0x20] sm:$0xff]
    %v339 = vld [vmem:[%s4 + $0x28] sm:$0xff]
    %v340 = vld [vmem:[%s4 + $0x30] sm:$0xff]
    %v341 = vld [vmem:[%s4 + $0x38] sm:$0xff]
    %v342 = vld [vmem:[%s4 + $0x40] sm:$0xff]
    %v343 = vld [vmem:[%s4 + $0x48] sm:$0xff]
    %v344 = vld [vmem:[%s4 + $0x50] sm:$0xff]
    %v345 = vld [vmem:[%s4 + $0x58] sm:$0xff]
    %v346 = vld [vmem:[%s4 + $0x60] sm:$0xff]
    %v347 = vld [vmem:[%s4 + $0x68] sm:$0xff]
    %v348 = vld [vmem:[%s4 + $0x70] sm:$0xff]
    %v349 = vld [vmem:[%s4 + $0x78] sm:$0xff]
    %v350 = vld [vmem:[%s4 + $0x80] sm:$0xff]
    %v351 = vld [vmem:[%s4 + $0x88] sm:$0xff]
    %v352 = vld [vmem:[%s4 + $0x90] sm:$0xff]
    %v353 = vld [vmem:[%s4 + $0x98] sm:$0xff]
    %v354 = vld [vmem:[%s4 + $0xa0] sm:$0xff]
    %v355 = vld [vmem:[%s4 + $0xa8] sm:$0xff]
    %v356 = vld [vmem:[%s4 + $0xb0] sm:$0xff]
    %v357 = vld [vmem:[%s4 + $0xb8] sm:$0xff]
    %v358 = vld [vmem:[%s4 + $0xc0] sm:$0xff]
    %v359 = vld [vmem:[%s4 + $0xc8] sm:$0xff]
    %v360 = vld [vmem:[%s4 + $0xd0] sm:$0xff]
    %v361 = vld [vmem:[%s4 + $0xd8] sm:$0xff]
    %v362 = vld [vmem:[%s4 + $0xe0] sm:$0xff]
    %v363 = vld [vmem:[%s4 + $0xe8] sm:$0xff]
    %v364 = vld [vmem:[%s4 + $0xf0] sm:$0xff]
    %v365 = vld [vmem:[%s4 + $0xf8] sm:$0xff]
    %v366 = vld [vmem:[%s4 + $0x100] sm:$0xff]
    %v367 = vld [vmem:[%s4 + $0x108] sm:$0xff]
    %v368 = vld [vmem:[%s4 + $0x110] sm:$0xff]
    %v369 = vld [vmem:[%s4 + $0x118] sm:$0xff]
    %v370 = vld [vmem:[%s4 + $0x120] sm:$0xff]
    %v371 = vld [vmem:[%s4 + $0x128] sm:$0xff]
    %v372 = vld [vmem:[%s4 + $0x130] sm:$0xff]
    %v373 = vld [vmem:[%s4 + $0x138] sm:$0xff]
    %v374 = vld [vmem:[%s4 + $0x140] sm:$0xff]
    %v375 = vld [vmem:[%s4 + $0x148] sm:$0xff]
    %v376 = vld [vmem:[%s4 + $0x150] sm:$0xff]
    %v377 = vld [vmem:[%s4 + $0x158] sm:$0xff]
    %v378 = vld [vmem:[%s4 + $0x160] sm:$0xff]
    %v379 = vld [vmem:[%s4 + $0x168] sm:$0xff]
    %v380 = vld [vmem:[%s4 + $0x170] sm:$0xff]
    %v381 = vld [vmem:[%s4 + $0x178] sm:$0xff]
    %382 = vmatpush.msra.mxu0 %v379
    %383 = vmatpush.msra.mxu0 %v376
    %384 = vmatpush.msra.mxu0 %v373
    %385 = vmatpush.msra.mxu0 %v370
    %386 = vmatpush.msra.mxu0 %v367
    %387 = vmatpush.msra.mxu0 %v364
    %388 = vmatpush.msra.mxu0 %v361
    %389 = vmatpush.msra.mxu0 %v358
    %390 = vmatpush.msra.mxu0 %v355
    %391 = vmatpush.msra.mxu0 %v352
    %392 = vmatpush.msra.mxu0 %v349
    %393 = vmatpush.msra.mxu0 %v346
    %394 = vmatpush.msra.mxu0 %v343
    %395 = vmatpush.msra.mxu0 %v340
    %396 = vmatpush.msra.mxu0 %v337
    %397 = vmatpush.msra.mxu0 %v334
    %398 = vmatmul.f32.gmra.mxu0 %v333
    %v399 = vpop.f32.mrf.mxu0
    %v400 = vadd.f32 %v52, %v399
    %401 = vdwg.mxu0
    %402 = vmatpush.msra.mxu0 %v380
    %403 = vmatpush.msra.mxu0 %v377
    %404 = vmatpush.msra.mxu0 %v374
    %405 = vmatpush.msra.mxu0 %v371
    %406 = vmatpush.msra.mxu0 %v368
    %407 = vmatpush.msra.mxu0 %v365
    %408 = vmatpush.msra.mxu0 %v362
    %409 = vmatpush.msra.mxu0 %v359
    %410 = vmatpush.msra.mxu0 %v356
    %411 = vmatpush.msra.mxu0 %v353
    %412 = vmatpush.msra.mxu0 %v350
    %413 = vmatpush.msra.mxu0 %v347
    %414 = vmatpush.msra.mxu0 %v344
    %415 = vmatpush.msra.mxu0 %v341
    %416 = vmatpush.msra.mxu0 %v338
    %417 = vmatpush.msra.mxu0 %v335
    %418 = vmatmul.f32.gmra.mxu0 %v333
    %v419 = vpop.f32.mrf.mxu0
    %v420 = vadd.f32 %v53, %v419
    %421 = vdwg.mxu0
    %422 = vmatpush.msra.mxu0 %v381
    %423 = vmatpush.msra.mxu0 %v378
    %424 = vmatpush.msra.mxu0 %v375
    %425 = vmatpush.msra.mxu0 %v372
    %426 = vmatpush.msra.mxu0 %v369
    %427 = vmatpush.msra.mxu0 %v366
    %428 = vmatpush.msra.mxu0 %v363
    %429 = vmatpush.msra.mxu0 %v360
    %430 = vmatpush.msra.mxu0 %v357
    %431 = vmatpush.msra.mxu0 %v354
    %432 = vmatpush.msra.mxu0 %v351
    %433 = vmatpush.msra.mxu0 %v348
    %434 = vmatpush.msra.mxu0 %v345
    %435 = vmatpush.msra.mxu0 %v342
    %436 = vmatpush.msra.mxu0 %v339
    %437 = vmatpush.msra.mxu0 %v336
    %438 = vmatmul.f32.gmra.mxu0 %v333
    %v439 = vpop.f32.mrf.mxu0
    %v440 = vadd.f32 %v54, %v439
    %441 = vdwg.mxu0
    %v442 = vadd.f32 %v400, %v239
    %v443 = vxor.u32 %v442, 2147483648
    %v444 = vmul.f32 %v443, 1.442695
    %v445 = vpow.pop %v444
    %v446 = vadd.f32 %v445, 1.0
    %v447 = vrcp.pop %v446
    %v448 = vmul.f32 %v446, %v447
    %v449 = vsub.f32 1.0, %v448
    %v450 = vmul.f32 %v447, %v449
    %v451 = vadd.f32 %v447, %v450
    %vm452 = vweird.f32 %v446
    %vm453 = vweird.f32 %v447
    %vm454 = vmor %vm452, %vm453
    %v455 = vsel %vm454, %v447, %v451
    %v456 = vand.u32 2147483647, %v446
    %vm457 = vcmp.eq.f32.partialorder %v456, 8.507059e+37
    %v458 = vand.u32 %v446, 2147483648
    %v459 = vor.u32 1.1754944e-38, %v458
    %v460 = vsel %vm457, %v459, %v455
    %v461 = vmul.f32 1.0, %v460
    %v462 = vadd.f32 %v420, %v259
    %v463 = vxor.u32 %v462, 2147483648
    %v464 = vmul.f32 %v463, 1.442695
    %v465 = vpow.pop %v464
    %v466 = vadd.f32 %v465, 1.0
    %v467 = vrcp.pop %v466
    %v468 = vmul.f32 %v466, %v467
    %v469 = vsub.f32 1.0, %v468
    %v470 = vmul.f32 %v467, %v469
    %v471 = vadd.f32 %v467, %v470
    %vm472 = vweird.f32 %v466
    %vm473 = vweird.f32 %v467
    %vm474 = vmor %vm472, %vm473
    %v475 = vsel %vm474, %v467, %v471
    %v476 = vand.u32 2147483647, %v466
    %vm477 = vcmp.eq.f32.partialorder %v476, 8.507059e+37
    %v478 = vand.u32 %v466, 2147483648
    %v479 = vor.u32 1.1754944e-38, %v478
    %v480 = vsel %vm477, %v479, %v475
    %v481 = vmul.f32 1.0, %v480
    %v482 = vadd.f32 %v279, %v60
    %v483 = vmul.f32 %v461, %v482
    %v484 = vadd.f32 %v440, %v483
    %v485 = vtanh.pop %v484
    %v486 = vmul.f32 %v481, %v64
    %v487 = vsub.f32 1.0, %v481
    %v488 = vmul.f32 %v487, %v485
    %v489 = vadd.f32 %v486, %v488
    %490 = vmatpush.msra.mxu0 %v110
    %491 = vmatpush.msra.mxu0 %v107
    %492 = vmatpush.msra.mxu0 %v104
    %493 = vmatpush.msra.mxu0 %v101
    %494 = vmatpush.msra.mxu0 %v98
    %495 = vmatpush.msra.mxu0 %v95
    %496 = vmatpush.msra.mxu0 %v92
    %497 = vmatpush.msra.mxu0 %v89
    %498 = vmatpush.msra.mxu0 %v86
    %499 = vmatpush.msra.mxu0 %v83
    %500 = vmatpush.msra.mxu0 %v80
    %501 = vmatpush.msra.mxu0 %v77
    %502 = vmatpush.msra.mxu0 %v74
    %503 = vmatpush.msra.mxu0 %v71
    %504 = vmatpush.msra.mxu0 %v68
    %505 = vmatpush.msra.mxu0 %v65
    %506 = vmatmul.f32.gmra.mxu0 %v333
    %v507 = vpop.f32.mrf.mxu0
    %v508 = vadd.f32 0.0, %v507
    %509 = vdwg.mxu0
    %510 = vmatpush.msra.mxu0 %v111
    %511 = vmatpush.msra.mxu0 %v108
    %512 = vmatpush.msra.mxu0 %v105
    %513 = vmatpush.msra.mxu0 %v102
    %514 = vmatpush.msra.mxu0 %v99
    %515 = vmatpush.msra.mxu0 %v96
    %516 = vmatpush.msra.mxu0 %v93
    %517 = vmatpush.msra.mxu0 %v90
    %518 = vmatpush.msra.mxu0 %v87
    %519 = vmatpush.msra.mxu0 %v84
    %520 = vmatpush.msra.mxu0 %v81
    %521 = vmatpush.msra.mxu0 %v78
    %522 = vmatpush.msra.mxu0 %v75
    %523 = vmatpush.msra.mxu0 %v72
    %524 = vmatpush.msra.mxu0 %v69
    %525 = vmatpush.msra.mxu0 %v66
    %526 = vmatmul.f32.gmra.mxu0 %v333
    %v527 = vpop.f32.mrf.mxu0
    %v528 = vadd.f32 0.0, %v527
    %529 = vdwg.mxu0
    %530 = vmatpush.msra.mxu0 %v112
    %531 = vmatpush.msra.mxu0 %v109
    %532 = vmatpush.msra.mxu0 %v106
    %533 = vmatpush.msra.mxu0 %v103
    %534 = vmatpush.msra.mxu0 %v100
    %535 = vmatpush.msra.mxu0 %v97
    %536 = vmatpush.msra.mxu0 %v94
    %537 = vmatpush.msra.mxu0 %v91
    %538 = vmatpush.msra.mxu0 %v88
    %539 = vmatpush.msra.mxu0 %v85
    %540 = vmatpush.msra.mxu0 %v82
    %541 = vmatpush.msra.mxu0 %v79
    %542 = vmatpush.msra.mxu0 %v76
    %543 = vmatpush.msra.mxu0 %v73
    %544 = vmatpush.msra.mxu0 %v70
    %545 = vmatpush.msra.mxu0 %v67
    %546 = vmatmul.f32.gmra.mxu0 %v333
    %v547 = vpop.f32.mrf.mxu0
    %v548 = vadd.f32 0.0, %v547
    %549 = vdwg.mxu0
    %550 = vmatpush.msra.mxu0 %v218
    %551 = vmatpush.msra.mxu0 %v215
    %552 = vmatpush.msra.mxu0 %v212
    %553 = vmatpush.msra.mxu0 %v209
    %554 = vmatpush.msra.mxu0 %v206
    %555 = vmatpush.msra.mxu0 %v203
    %556 = vmatpush.msra.mxu0 %v200
    %557 = vmatpush.msra.mxu0 %v197
    %558 = vmatpush.msra.mxu0 %v194
    %559 = vmatpush.msra.mxu0 %v191
    %560 = vmatpush.msra.mxu0 %v188
    %561 = vmatpush.msra.mxu0 %v185
    %562 = vmatpush.msra.mxu0 %v182
    %563 = vmatpush.msra.mxu0 %v179
    %564 = vmatpush.msra.mxu0 %v176
    %565 = vmatpush.msra.mxu0 %v173
    %566 = vmatmul.f32.gmra.mxu0 %v489
    %v567 = vpop.f32.mrf.mxu0
    %v568 = vadd.f32 0.0, %v567
    %569 = vdwg.mxu0
    %570 = vmatpush.msra.mxu0 %v219
    %571 = vmatpush.msra.mxu0 %v216
    %572 = vmatpush.msra.mxu0 %v213
    %573 = vmatpush.msra.mxu0 %v210
    %574 = vmatpush.msra.mxu0 %v207
    %575 = vmatpush.msra.mxu0 %v204
    %576 = vmatpush.msra.mxu0 %v201
    %577 = vmatpush.msra.mxu0 %v198
    %578 = vmatpush.msra.mxu0 %v195
    %579 = vmatpush.msra.mxu0 %v192
    %580 = vmatpush.msra.mxu0 %v189
    %581 = vmatpush.msra.mxu0 %v186
    %582 = vmatpush.msra.mxu0 %v183
    %583 = vmatpush.msra.mxu0 %v180
    %584 = vmatpush.msra.mxu0 %v177
    %585 = vmatpush.msra.mxu0 %v174
    %586 = vmatmul.f32.gmra.mxu0 %v489
    %v587 = vpop.f32.mrf.mxu0
    %v588 = vadd.f32 0.0, %v587
    %589 = vdwg.mxu0
    %590 = vmatpush.msra.mxu0 %v220
    %591 = vmatpush.msra.mxu0 %v217
    %592 = vmatpush.msra.mxu0 %v214
    %593 = vmatpush.msra.mxu0 %v211
    %594 = vmatpush.msra.mxu0 %v208
    %595 = vmatpush.msra.mxu0 %v205
    %596 = vmatpush.msra.mxu0 %v202
    %597 = vmatpush.msra.mxu0 %v199
    %598 = vmatpush.msra.mxu0 %v196
    %599 = vmatpush.msra.mxu0 %v193
    %600 = vmatpush.msra.mxu0 %v190
    %601 = vmatpush.msra.mxu0 %v187
    %602 = vmatpush.msra.mxu0 %v184
    %603 = vmatpush.msra.mxu0 %v181
    %604 = vmatpush.msra.mxu0 %v178
    %605 = vmatpush.msra.mxu0 %v175
    %606 = vmatmul.f32.gmra.mxu0 %v489
    %v607 = vpop.f32.mrf.mxu0
    %v608 = vadd.f32 0.0, %v607
    %609 = vdwg.mxu0
    %s610 = scalar_lea.vmem %s0, 12
    %v611 = vld [vmem:[%s610] sm:$0xff]
    %v612 = vld [vmem:[%s610 + $0x8] sm:$0xf]
    %v613 = vunpack.c.l.bf16 %v611
    %v614 = vunpack.c.h.bf16 %v611
    %v615 = vunpack.c.l.bf16 %v612
    %v616 = vadd.f32 %v613, %v508
    %v617 = vxor.u32 %v616, 2147483648
    %v618 = vmul.f32 %v617, 1.442695
    %v619 = vpow.pop %v618
    %v620 = vadd.f32 %v619, 1.0
    %v621 = vrcp.pop %v620
    %v622 = vmul.f32 %v620, %v621
    %v623 = vsub.f32 1.0, %v622
    %v624 = vmul.f32 %v621, %v623
    %v625 = vadd.f32 %v621, %v624
    %vm626 = vweird.f32 %v620
    %vm627 = vweird.f32 %v621
    %vm628 = vmor %vm626, %vm627
    %v629 = vsel %vm628, %v621, %v625
    %v630 = vand.u32 2147483647, %v620
    %vm631 = vcmp.eq.f32.partialorder %v630, 8.507059e+37
    %v632 = vand.u32 %v620, 2147483648
    %v633 = vor.u32 1.1754944e-38, %v632
    %v634 = vsel %vm631, %v633, %v629
    %v635 = vmul.f32 1.0, %v634
    %v636 = vadd.f32 %v614, %v528
    %v637 = vxor.u32 %v636, 2147483648
    %v638 = vmul.f32 %v637, 1.442695
    %v639 = vpow.pop %v638
    %v640 = vadd.f32 %v639, 1.0
    %v641 = vrcp.pop %v640
    %v642 = vmul.f32 %v640, %v641
    %v643 = vsub.f32 1.0, %v642
    %v644 = vmul.f32 %v641, %v643
    %v645 = vadd.f32 %v641, %v644
    %vm646 = vweird.f32 %v640
    %vm647 = vweird.f32 %v641
    %vm648 = vmor %vm646, %vm647
    %v649 = vsel %vm648, %v641, %v645
    %v650 = vand.u32 2147483647, %v640
    %vm651 = vcmp.eq.f32.partialorder %v650, 8.507059e+37
    %v652 = vand.u32 %v640, 2147483648
    %v653 = vor.u32 1.1754944e-38, %v652
    %v654 = vsel %vm651, %v653, %v649
    %v655 = vmul.f32 1.0, %v654
    %v656 = vadd.f32 %v548, %v48
    %v657 = vmul.f32 %v635, %v656
    %v658 = vadd.f32 %v615, %v657
    %v659 = vtanh.pop %v658
    %v660 = vmul.f32 %v655, %v333
    %v661 = vsub.f32 1.0, %v655
    %v662 = vmul.f32 %v661, %v659
    %v663 = vadd.f32 %v660, %v662
    %664 = vmatpush.msra.mxu0 %v379
    %665 = vmatpush.msra.mxu0 %v376
    %666 = vmatpush.msra.mxu0 %v373
    %667 = vmatpush.msra.mxu0 %v370
    %668 = vmatpush.msra.mxu0 %v367
    %669 = vmatpush.msra.mxu0 %v364
    %670 = vmatpush.msra.mxu0 %v361
    %671 = vmatpush.msra.mxu0 %v358
    %672 = vmatpush.msra.mxu0 %v355
    %673 = vmatpush.msra.mxu0 %v352
    %674 = vmatpush.msra.mxu0 %v349
    %675 = vmatpush.msra.mxu0 %v346
    %676 = vmatpush.msra.mxu0 %v343
    %677 = vmatpush.msra.mxu0 %v340
    %678 = vmatpush.msra.mxu0 %v337
    %679 = vmatpush.msra.mxu0 %v334
    %680 = vmatmul.f32.gmra.mxu0 %v663
    %v681 = vpop.f32.mrf.mxu0
    %v682 = vadd.f32 %v52, %v681
    %683 = vdwg.mxu0
    %684 = vmatpush.msra.mxu0 %v380
    %685 = vmatpush.msra.mxu0 %v377
    %686 = vmatpush.msra.mxu0 %v374
    %687 = vmatpush.msra.mxu0 %v371
    %688 = vmatpush.msra.mxu0 %v368
    %689 = vmatpush.msra.mxu0 %v365
    %690 = vmatpush.msra.mxu0 %v362
    %691 = vmatpush.msra.mxu0 %v359
    %692 = vmatpush.msra.mxu0 %v356
    %693 = vmatpush.msra.mxu0 %v353
    %694 = vmatpush.msra.mxu0 %v350
    %695 = vmatpush.msra.mxu0 %v347
    %696 = vmatpush.msra.mxu0 %v344
    %697 = vmatpush.msra.mxu0 %v341
    %698 = vmatpush.msra.mxu0 %v338
    %699 = vmatpush.msra.mxu0 %v335
    %700 = vmatmul.f32.gmra.mxu0 %v663
    %v701 = vpop.f32.mrf.mxu0
    %v702 = vadd.f32 %v53, %v701
    %703 = vdwg.mxu0
    %704 = vmatpush.msra.mxu0 %v381
    %705 = vmatpush.msra.mxu0 %v378
    %706 = vmatpush.msra.mxu0 %v375
    %707 = vmatpush.msra.mxu0 %v372
    %708 = vmatpush.msra.mxu0 %v369
    %709 = vmatpush.msra.mxu0 %v366
    %710 = vmatpush.msra.mxu0 %v363
    %711 = vmatpush.msra.mxu0 %v360
    %712 = vmatpush.msra.mxu0 %v357
    %713 = vmatpush.msra.mxu0 %v354
    %714 = vmatpush.msra.mxu0 %v351
    %715 = vmatpush.msra.mxu0 %v348
    %716 = vmatpush.msra.mxu0 %v345
    %717 = vmatpush.msra.mxu0 %v342
    %718 = vmatpush.msra.mxu0 %v339
    %719 = vmatpush.msra.mxu0 %v336
    %720 = vmatmul.f32.gmra.mxu0 %v663
    %v721 = vpop.f32.mrf.mxu0
    %v722 = vadd.f32 %v54, %v721
    %723 = vdwg.mxu0
    %v724 = vadd.f32 %v682, %v568
    %v725 = vxor.u32 %v724, 2147483648
    %v726 = vmul.f32 %v725, 1.442695
    %v727 = vpow.pop %v726
    %v728 = vadd.f32 %v727, 1.0
    %v729 = vrcp.pop %v728
    %v730 = vmul.f32 %v728, %v729
    %v731 = vsub.f32 1.0, %v730
    %v732 = vmul.f32 %v729, %v731
    %v733 = vadd.f32 %v729, %v732
    %vm734 = vweird.f32 %v728
    %vm735 = vweird.f32 %v729
    %vm736 = vmor %vm734, %vm735
    %v737 = vsel %vm736, %v729, %v733
    %v738 = vand.u32 2147483647, %v728
    %vm739 = vcmp.eq.f32.partialorder %v738, 8.507059e+37
    %v740 = vand.u32 %v728, 2147483648
    %v741 = vor.u32 1.1754944e-38, %v740
    %v742 = vsel %vm739, %v741, %v737
    %v743 = vmul.f32 1.0, %v742
    %v744 = vadd.f32 %v702, %v588
    %v745 = vxor.u32 %v744, 2147483648
    %v746 = vmul.f32 %v745, 1.442695
    %v747 = vpow.pop %v746
    %v748 = vadd.f32 %v747, 1.0
    %v749 = vrcp.pop %v748
    %v750 = vmul.f32 %v748, %v749
    %v751 = vsub.f32 1.0, %v750
    %v752 = vmul.f32 %v749, %v751
    %v753 = vadd.f32 %v749, %v752
    %vm754 = vweird.f32 %v748
    %vm755 = vweird.f32 %v749
    %vm756 = vmor %vm754, %vm755
    %v757 = vsel %vm756, %v749, %v753
    %v758 = vand.u32 2147483647, %v748
    %vm759 = vcmp.eq.f32.partialorder %v758, 8.507059e+37
    %v760 = vand.u32 %v748, 2147483648
    %v761 = vor.u32 1.1754944e-38, %v760
    %v762 = vsel %vm759, %v761, %v757
    %v763 = vmul.f32 1.0, %v762
    %v764 = vadd.f32 %v608, %v60
    %v765 = vmul.f32 %v743, %v764
    %v766 = vadd.f32 %v722, %v765
    %v767 = vtanh.pop %v766
    %v768 = vmul.f32 %v763, %v489
    %v769 = vsub.f32 1.0, %v763
    %v770 = vmul.f32 %v769, %v767
    %v771 = vadd.f32 %v768, %v770
    %772 = vmatpush.msra.mxu0 %v110
    %773 = vmatpush.msra.mxu0 %v107
    %774 = vmatpush.msra.mxu0 %v104
    %775 = vmatpush.msra.mxu0 %v101
    %776 = vmatpush.msra.mxu0 %v98
    %777 = vmatpush.msra.mxu0 %v95
    %778 = vmatpush.msra.mxu0 %v92
    %779 = vmatpush.msra.mxu0 %v89
    %780 = vmatpush.msra.mxu0 %v86
    %781 = vmatpush.msra.mxu0 %v83
    %782 = vmatpush.msra.mxu0 %v80
    %783 = vmatpush.msra.mxu0 %v77
    %784 = vmatpush.msra.mxu0 %v74
    %785 = vmatpush.msra.mxu0 %v71
    %786 = vmatpush.msra.mxu0 %v68
    %787 = vmatpush.msra.mxu0 %v65
    %788 = vmatmul.f32.gmra.mxu0 %v663
    %v789 = vpop.f32.mrf.mxu0
    %v790 = vadd.f32 0.0, %v789
    %791 = vdwg.mxu0
    %792 = vmatpush.msra.mxu0 %v111
    %793 = vmatpush.msra.mxu0 %v108
    %794 = vmatpush.msra.mxu0 %v105
    %795 = vmatpush.msra.mxu0 %v102
    %796 = vmatpush.msra.mxu0 %v99
    %797 = vmatpush.msra.mxu0 %v96
    %798 = vmatpush.msra.mxu0 %v93
    %799 = vmatpush.msra.mxu0 %v90
    %800 = vmatpush.msra.mxu0 %v87
    %801 = vmatpush.msra.mxu0 %v84
    %802 = vmatpush.msra.mxu0 %v81
    %803 = vmatpush.msra.mxu0 %v78
    %804 = vmatpush.msra.mxu0 %v75
    %805 = vmatpush.msra.mxu0 %v72
    %806 = vmatpush.msra.mxu0 %v69
    %807 = vmatpush.msra.mxu0 %v66
    %808 = vmatmul.f32.gmra.mxu0 %v663
    %v809 = vpop.f32.mrf.mxu0
    %v810 = vadd.f32 0.0, %v809
    %811 = vdwg.mxu0
    %812 = vmatpush.msra.mxu0 %v112
    %813 = vmatpush.msra.mxu0 %v109
    %814 = vmatpush.msra.mxu0 %v106
    %815 = vmatpush.msra.mxu0 %v103
    %816 = vmatpush.msra.mxu0 %v100
    %817 = vmatpush.msra.mxu0 %v97
    %818 = vmatpush.msra.mxu0 %v94
    %819 = vmatpush.msra.mxu0 %v91
    %820 = vmatpush.msra.mxu0 %v88
    %821 = vmatpush.msra.mxu0 %v85
    %822 = vmatpush.msra.mxu0 %v82
    %823 = vmatpush.msra.mxu0 %v79
    %824 = vmatpush.msra.mxu0 %v76
    %825 = vmatpush.msra.mxu0 %v73
    %826 = vmatpush.msra.mxu0 %v70
    %827 = vmatpush.msra.mxu0 %v67
    %828 = vmatmul.f32.gmra.mxu0 %v663
    %v829 = vpop.f32.mrf.mxu0
    %v830 = vadd.f32 0.0, %v829
    %831 = vdwg.mxu0
    %832 = vmatpush.msra.mxu0 %v218
    %833 = vmatpush.msra.mxu0 %v215
    %834 = vmatpush.msra.mxu0 %v212
    %835 = vmatpush.msra.mxu0 %v209
    %836 = vmatpush.msra.mxu0 %v206
    %837 = vmatpush.msra.mxu0 %v203
    %838 = vmatpush.msra.mxu0 %v200
    %839 = vmatpush.msra.mxu0 %v197
    %840 = vmatpush.msra.mxu0 %v194
    %841 = vmatpush.msra.mxu0 %v191
    %842 = vmatpush.msra.mxu0 %v188
    %843 = vmatpush.msra.mxu0 %v185
    %844 = vmatpush.msra.mxu0 %v182
    %845 = vmatpush.msra.mxu0 %v179
    %846 = vmatpush.msra.mxu0 %v176
    %847 = vmatpush.msra.mxu0 %v173
    %848 = vmatmul.f32.gmra.mxu0 %v771
    %v849 = vpop.f32.mrf.mxu0
    %v850 = vadd.f32 0.0, %v849
    %851 = vdwg.mxu0
    %852 = vmatpush.msra.mxu0 %v219
    %853 = vmatpush.msra.mxu0 %v216
    %854 = vmatpush.msra.mxu0 %v213
    %855 = vmatpush.msra.mxu0 %v210
    %856 = vmatpush.msra.mxu0 %v207
    %857 = vmatpush.msra.mxu0 %v204
    %858 = vmatpush.msra.mxu0 %v201
    %859 = vmatpush.msra.mxu0 %v198
    %860 = vmatpush.msra.mxu0 %v195
    %861 = vmatpush.msra.mxu0 %v192
    %862 = vmatpush.msra.mxu0 %v189
    %863 = vmatpush.msra.mxu0 %v186
    %864 = vmatpush.msra.mxu0 %v183
    %865 = vmatpush.msra.mxu0 %v180
    %866 = vmatpush.msra.mxu0 %v177
    %867 = vmatpush.msra.mxu0 %v174
    %868 = vmatmul.f32.gmra.mxu0 %v771
    %v869 = vpop.f32.mrf.mxu0
    %v870 = vadd.f32 0.0, %v869
    %871 = vdwg.mxu0
    %872 = vmatpush.msra.mxu0 %v220
    %873 = vmatpush.msra.mxu0 %v217
    %874 = vmatpush.msra.mxu0 %v214
    %875 = vmatpush.msra.mxu0 %v211
    %876 = vmatpush.msra.mxu0 %v208
    %877 = vmatpush.msra.mxu0 %v205
    %878 = vmatpush.msra.mxu0 %v202
    %879 = vmatpush.msra.mxu0 %v199
    %880 = vmatpush.msra.mxu0 %v196
    %881 = vmatpush.msra.mxu0 %v193
    %882 = vmatpush.msra.mxu0 %v190
    %883 = vmatpush.msra.mxu0 %v187
    %884 = vmatpush.msra.mxu0 %v184
    %885 = vmatpush.msra.mxu0 %v181
    %886 = vmatpush.msra.mxu0 %v178
    %887 = vmatpush.msra.mxu0 %v175
    %888 = vmatmul.f32.gmra.mxu0 %v771
    %v889 = vpop.f32.mrf.mxu0
    %v890 = vadd.f32 0.0, %v889
    %891 = vdwg.mxu0
    %s892 = scalar_lea.vmem %s0, 24
    %v893 = vld [vmem:[%s892] sm:$0xff]
    %v894 = vld [vmem:[%s892 + $0x8] sm:$0xf]
    %v895 = vunpack.c.l.bf16 %v893
    %v896 = vunpack.c.h.bf16 %v893
    %v897 = vunpack.c.l.bf16 %v894
    %v898 = vadd.f32 %v895, %v790
    %v899 = vxor.u32 %v898, 2147483648
    %v900 = vmul.f32 %v899, 1.442695
    %v901 = vpow.pop %v900
    %v902 = vadd.f32 %v901, 1.0
    %v903 = vrcp.pop %v902
    %v904 = vmul.f32 %v902, %v903
    %v905 = vsub.f32 1.0, %v904
    %v906 = vmul.f32 %v903, %v905
    %v907 = vadd.f32 %v903, %v906
    %vm908 = vweird.f32 %v902
    %vm909 = vweird.f32 %v903
    %vm910 = vmor %vm908, %vm909
    %v911 = vsel %vm910, %v903, %v907
    %v912 = vand.u32 2147483647, %v902
    %vm913 = vcmp.eq.f32.partialorder %v912, 8.507059e+37
    %v914 = vand.u32 %v902, 2147483648
    %v915 = vor.u32 1.1754944e-38, %v914
    %v916 = vsel %vm913, %v915, %v911
    %v917 = vmul.f32 1.0, %v916
    %v918 = vadd.f32 %v896, %v810
    %v919 = vxor.u32 %v918, 2147483648
    %v920 = vmul.f32 %v919, 1.442695
    %v921 = vpow.pop %v920
    %v922 = vadd.f32 %v921, 1.0
    %v923 = vrcp.pop %v922
    %v924 = vmul.f32 %v922, %v923
    %v925 = vsub.f32 1.0, %v924
    %v926 = vmul.f32 %v923, %v925
    %v927 = vadd.f32 %v923, %v926
    %vm928 = vweird.f32 %v922
    %vm929 = vweird.f32 %v923
    %vm930 = vmor %vm928, %vm929
    %v931 = vsel %vm930, %v923, %v927
    %v932 = vand.u32 2147483647, %v922
    %vm933 = vcmp.eq.f32.partialorder %v932, 8.507059e+37
    %v934 = vand.u32 %v922, 2147483648
    %v935 = vor.u32 1.1754944e-38, %v934
    %v936 = vsel %vm933, %v935, %v931
    %v937 = vmul.f32 1.0, %v936
    %v938 = vadd.f32 %v830, %v48
    %v939 = vmul.f32 %v917, %v938
    %v940 = vadd.f32 %v897, %v939
    %v941 = vtanh.pop %v940
    %v942 = vmul.f32 %v937, %v663
    %v943 = vsub.f32 1.0, %v937
    %v944 = vmul.f32 %v943, %v941
    %v945 = vadd.f32 %v942, %v944
    %946 = vmatpush.msra.mxu0 %v379
    %947 = vmatpush.msra.mxu0 %v376
    %948 = vmatpush.msra.mxu0 %v373
    %949 = vmatpush.msra.mxu0 %v370
    %950 = vmatpush.msra.mxu0 %v367
    %951 = vmatpush.msra.mxu0 %v364
    %952 = vmatpush.msra.mxu0 %v361
    %953 = vmatpush.msra.mxu0 %v358
    %954 = vmatpush.msra.mxu0 %v355
    %955 = vmatpush.msra.mxu0 %v352
    %956 = vmatpush.msra.mxu0 %v349
    %957 = vmatpush.msra.mxu0 %v346
    %958 = vmatpush.msra.mxu0 %v343
    %959 = vmatpush.msra.mxu0 %v340
    %960 = vmatpush.msra.mxu0 %v337
    %961 = vmatpush.msra.mxu0 %v334
    %962 = vmatmul.f32.gmra.mxu0 %v945
    %v963 = vpop.f32.mrf.mxu0
    %v964 = vadd.f32 %v52, %v963
    %965 = vdwg.mxu0
    %966 = vmatpush.msra.mxu0 %v380
    %967 = vmatpush.msra.mxu0 %v377
    %968 = vmatpush.msra.mxu0 %v374
    %969 = vmatpush.msra.mxu0 %v371
    %970 = vmatpush.msra.mxu0 %v368
    %971 = vmatpush.msra.mxu0 %v365
    %972 = vmatpush.msra.mxu0 %v362
    %973 = vmatpush.msra.mxu0 %v359
    %974 = vmatpush.msra.mxu0 %v356
    %975 = vmatpush.msra.mxu0 %v353
    %976 = vmatpush.msra.mxu0 %v350
    %977 = vmatpush.msra.mxu0 %v347
    %978 = vmatpush.msra.mxu0 %v344
    %979 = vmatpush.msra.mxu0 %v341
    %980 = vmatpush.msra.mxu0 %v338
    %981 = vmatpush.msra.mxu0 %v335
    %982 = vmatmul.f32.gmra.mxu0 %v945
    %v983 = vpop.f32.mrf.mxu0
    %v984 = vadd.f32 %v53, %v983
    %985 = vdwg.mxu0
    %986 = vmatpush.msra.mxu0 %v381
    %987 = vmatpush.msra.mxu0 %v378
    %988 = vmatpush.msra.mxu0 %v375
    %989 = vmatpush.msra.mxu0 %v372
    %990 = vmatpush.msra.mxu0 %v369
    %991 = vmatpush.msra.mxu0 %v366
    %992 = vmatpush.msra.mxu0 %v363
    %993 = vmatpush.msra.mxu0 %v360
    %994 = vmatpush.msra.mxu0 %v357
    %995 = vmatpush.msra.mxu0 %v354
    %996 = vmatpush.msra.mxu0 %v351
    %997 = vmatpush.msra.mxu0 %v348
    %998 = vmatpush.msra.mxu0 %v345
    %999 = vmatpush.msra.mxu0 %v342
    %1000 = vmatpush.msra.mxu0 %v339
    %1001 = vmatpush.msra.mxu0 %v336
    %1002 = vmatmul.f32.gmra.mxu0 %v945
    %v1003 = vpop.f32.mrf.mxu0
    %v1004 = vadd.f32 %v54, %v1003
    %1005 = vdwg.mxu0
    %v1006 = vadd.f32 %v964, %v850
    %v1007 = vxor.u32 %v1006, 2147483648
    %v1008 = vmul.f32 %v1007, 1.442695
    %v1009 = vpow.pop %v1008
    %v1010 = vadd.f32 %v1009, 1.0
    %v1011 = vrcp.pop %v1010
    %v1012 = vmul.f32 %v1010, %v1011
    %v1013 = vsub.f32 1.0, %v1012
    %v1014 = vmul.f32 %v1011, %v1013
    %v1015 = vadd.f32 %v1011, %v1014
    %vm1016 = vweird.f32 %v1010
    %vm1017 = vweird.f32 %v1011
    %vm1018 = vmor %vm1016, %vm1017
    %v1019 = vsel %vm1018, %v1011, %v1015
    %v1020 = vand.u32 2147483647, %v1010
    %vm1021 = vcmp.eq.f32.partialorder %v1020, 8.507059e+37
    %v1022 = vand.u32 %v1010, 2147483648
    %v1023 = vor.u32 1.1754944e-38, %v1022
    %v1024 = vsel %vm1021, %v1023, %v1019
    %v1025 = vmul.f32 1.0, %v1024
    %v1026 = vadd.f32 %v984, %v870
    %v1027 = vxor.u32 %v1026, 2147483648
    %v1028 = vmul.f32 %v1027, 1.442695
    %v1029 = vpow.pop %v1028
    %v1030 = vadd.f32 %v1029, 1.0
    %v1031 = vrcp.pop %v1030
    %v1032 = vmul.f32 %v1030, %v1031
    %v1033 = vsub.f32 1.0, %v1032
    %v1034 = vmul.f32 %v1031, %v1033
    %v1035 = vadd.f32 %v1031, %v1034
    %vm1036 = vweird.f32 %v1030
    %vm1037 = vweird.f32 %v1031
    %vm1038 = vmor %vm1036, %vm1037
    %v1039 = vsel %vm1038, %v1031, %v1035
    %v1040 = vand.u32 2147483647, %v1030
    %vm1041 = vcmp.eq.f32.partialorder %v1040, 8.507059e+37
    %v1042 = vand.u32 %v1030, 2147483648
    %v1043 = vor.u32 1.1754944e-38, %v1042
    %v1044 = vsel %vm1041, %v1043, %v1039
    %v1045 = vmul.f32 1.0, %v1044
    %v1046 = vadd.f32 %v890, %v60
    %v1047 = vmul.f32 %v1025, %v1046
    %v1048 = vadd.f32 %v1004, %v1047
    %v1049 = vtanh.pop %v1048
    %v1050 = vmul.f32 %v1045, %v771
    %v1051 = vsub.f32 1.0, %v1045
    %v1052 = vmul.f32 %v1051, %v1049
    %v1053 = vadd.f32 %v1050, %v1052
    %1054 = vmatpush.msra.mxu0 %v110
    %1055 = vmatpush.msra.mxu0 %v107
    %1056 = vmatpush.msra.mxu0 %v104
    %1057 = vmatpush.msra.mxu0 %v101
    %1058 = vmatpush.msra.mxu0 %v98
    %1059 = vmatpush.msra.mxu0 %v95
    %1060 = vmatpush.msra.mxu0 %v92
    %1061 = vmatpush.msra.mxu0 %v89
    %1062 = vmatpush.msra.mxu0 %v86
    %1063 = vmatpush.msra.mxu0 %v83
    %1064 = vmatpush.msra.mxu0 %v80
    %1065 = vmatpush.msra.mxu0 %v77
    %1066 = vmatpush.msra.mxu0 %v74
    %1067 = vmatpush.msra.mxu0 %v71
    %1068 = vmatpush.msra.mxu0 %v68
    %1069 = vmatpush.msra.mxu0 %v65
    %1070 = vmatmul.f32.gmra.mxu0 %v945
    %v1071 = vpop.f32.mrf.mxu0
    %v1072 = vadd.f32 0.0, %v1071
    %1073 = vdwg.mxu0
    %1074 = vmatpush.msra.mxu0 %v111
    %1075 = vmatpush.msra.mxu0 %v108
    %1076 = vmatpush.msra.mxu0 %v105
    %1077 = vmatpush.msra.mxu0 %v102
    %1078 = vmatpush.msra.mxu0 %v99
    %1079 = vmatpush.msra.mxu0 %v96
    %1080 = vmatpush.msra.mxu0 %v93
    %1081 = vmatpush.msra.mxu0 %v90
    %1082 = vmatpush.msra.mxu0 %v87
    %1083 = vmatpush.msra.mxu0 %v84
    %1084 = vmatpush.msra.mxu0 %v81
    %1085 = vmatpush.msra.mxu0 %v78
    %1086 = vmatpush.msra.mxu0 %v75
    %1087 = vmatpush.msra.mxu0 %v72
    %1088 = vmatpush.msra.mxu0 %v69
    %1089 = vmatpush.msra.mxu0 %v66
    %1090 = vmatmul.f32.gmra.mxu0 %v945
    %v1091 = vpop.f32.mrf.mxu0
    %v1092 = vadd.f32 0.0, %v1091
    %1093 = vdwg.mxu0
    %1094 = vmatpush.msra.mxu0 %v112
    %1095 = vmatpush.msra.mxu0 %v109
    %1096 = vmatpush.msra.mxu0 %v106
    %1097 = vmatpush.msra.mxu0 %v103
    %1098 = vmatpush.msra.mxu0 %v100
    %1099 = vmatpush.msra.mxu0 %v97
    %1100 = vmatpush.msra.mxu0 %v94
    %1101 = vmatpush.msra.mxu0 %v91
    %1102 = vmatpush.msra.mxu0 %v88
    %1103 = vmatpush.msra.mxu0 %v85
    %1104 = vmatpush.msra.mxu0 %v82
    %1105 = vmatpush.msra.mxu0 %v79
    %1106 = vmatpush.msra.mxu0 %v76
    %1107 = vmatpush.msra.mxu0 %v73
    %1108 = vmatpush.msra.mxu0 %v70
    %1109 = vmatpush.msra.mxu0 %v67
    %1110 = vmatmul.f32.gmra.mxu0 %v945
    %v1111 = vpop.f32.mrf.mxu0
    %v1112 = vadd.f32 0.0, %v1111
    %1113 = vdwg.mxu0
    %1114 = vmatpush.msra.mxu0 %v218
    %1115 = vmatpush.msra.mxu0 %v215
    %1116 = vmatpush.msra.mxu0 %v212
    %1117 = vmatpush.msra.mxu0 %v209
    %1118 = vmatpush.msra.mxu0 %v206
    %1119 = vmatpush.msra.mxu0 %v203
    %1120 = vmatpush.msra.mxu0 %v200
    %1121 = vmatpush.msra.mxu0 %v197
    %1122 = vmatpush.msra.mxu0 %v194
    %1123 = vmatpush.msra.mxu0 %v191
    %1124 = vmatpush.msra.mxu0 %v188
    %1125 = vmatpush.msra.mxu0 %v185
    %1126 = vmatpush.msra.mxu0 %v182
    %1127 = vmatpush.msra.mxu0 %v179
    %1128 = vmatpush.msra.mxu0 %v176
    %1129 = vmatpush.msra.mxu0 %v173
    %1130 = vmatmul.f32.gmra.mxu0 %v1053
    %v1131 = vpop.f32.mrf.mxu0
    %v1132 = vadd.f32 0.0, %v1131
    %1133 = vdwg.mxu0
    %1134 = vmatpush.msra.mxu0 %v219
    %1135 = vmatpush.msra.mxu0 %v216
    %1136 = vmatpush.msra.mxu0 %v213
    %1137 = vmatpush.msra.mxu0 %v210
    %1138 = vmatpush.msra.mxu0 %v207
    %1139 = vmatpush.msra.mxu0 %v204
    %1140 = vmatpush.msra.mxu0 %v201
    %1141 = vmatpush.msra.mxu0 %v198
    %1142 = vmatpush.msra.mxu0 %v195
    %1143 = vmatpush.msra.mxu0 %v192
    %1144 = vmatpush.msra.mxu0 %v189
    %1145 = vmatpush.msra.mxu0 %v186
    %1146 = vmatpush.msra.mxu0 %v183
    %1147 = vmatpush.msra.mxu0 %v180
    %1148 = vmatpush.msra.mxu0 %v177
    %1149 = vmatpush.msra.mxu0 %v174
    %1150 = vmatmul.f32.gmra.mxu0 %v1053
    %v1151 = vpop.f32.mrf.mxu0
    %v1152 = vadd.f32 0.0, %v1151
    %1153 = vdwg.mxu0
    %1154 = vmatpush.msra.mxu0 %v220
    %1155 = vmatpush.msra.mxu0 %v217
    %1156 = vmatpush.msra.mxu0 %v214
    %1157 = vmatpush.msra.mxu0 %v211
    %1158 = vmatpush.msra.mxu0 %v208
    %1159 = vmatpush.msra.mxu0 %v205
    %1160 = vmatpush.msra.mxu0 %v202
    %1161 = vmatpush.msra.mxu0 %v199
    %1162 = vmatpush.msra.mxu0 %v196
    %1163 = vmatpush.msra.mxu0 %v193
    %1164 = vmatpush.msra.mxu0 %v190
    %1165 = vmatpush.msra.mxu0 %v187
    %1166 = vmatpush.msra.mxu0 %v184
    %1167 = vmatpush.msra.mxu0 %v181
    %1168 = vmatpush.msra.mxu0 %v178
    %1169 = vmatpush.msra.mxu0 %v175
    %1170 = vmatmul.f32.gmra.mxu0 %v1053
    %v1171 = vpop.f32.mrf.mxu0
    %v1172 = vadd.f32 0.0, %v1171
    %1173 = vdwg.mxu0
    %s1174 = scalar_lea.vmem %s0, 36
    %v1175 = vld [vmem:[%s1174] sm:$0xff]
    %v1176 = vld [vmem:[%s1174 + $0x8] sm:$0xf]
    %v1177 = vunpack.c.l.bf16 %v1175
    %v1178 = vunpack.c.h.bf16 %v1175
    %v1179 = vunpack.c.l.bf16 %v1176
    %v1180 = vadd.f32 %v1177, %v1072
    %v1181 = vxor.u32 %v1180, 2147483648
    %v1182 = vmul.f32 %v1181, 1.442695
    %v1183 = vpow.pop %v1182
    %v1184 = vadd.f32 %v1183, 1.0
    %v1185 = vrcp.pop %v1184
    %v1186 = vmul.f32 %v1184, %v1185
    %v1187 = vsub.f32 1.0, %v1186
    %v1188 = vmul.f32 %v1185, %v1187
    %v1189 = vadd.f32 %v1185, %v1188
    %vm1190 = vweird.f32 %v1184
    %vm1191 = vweird.f32 %v1185
    %vm1192 = vmor %vm1190, %vm1191
    %v1193 = vsel %vm1192, %v1185, %v1189
    %v1194 = vand.u32 2147483647, %v1184
    %vm1195 = vcmp.eq.f32.partialorder %v1194, 8.507059e+37
    %v1196 = vand.u32 %v1184, 2147483648
    %v1197 = vor.u32 1.1754944e-38, %v1196
    %v1198 = vsel %vm1195, %v1197, %v1193
    %v1199 = vmul.f32 1.0, %v1198
    %v1200 = vadd.f32 %v1178, %v1092
    %v1201 = vxor.u32 %v1200, 2147483648
    %v1202 = vmul.f32 %v1201, 1.442695
    %v1203 = vpow.pop %v1202
    %v1204 = vadd.f32 %v1203, 1.0
    %v1205 = vrcp.pop %v1204
    %v1206 = vmul.f32 %v1204, %v1205
    %v1207 = vsub.f32 1.0, %v1206
    %v1208 = vmul.f32 %v1205, %v1207
    %v1209 = vadd.f32 %v1205, %v1208
    %vm1210 = vweird.f32 %v1204
    %vm1211 = vweird.f32 %v1205
    %vm1212 = vmor %vm1210, %vm1211
    %v1213 = vsel %vm1212, %v1205, %v1209
    %v1214 = vand.u32 2147483647, %v1204
    %vm1215 = vcmp.eq.f32.partialorder %v1214, 8.507059e+37
    %v1216 = vand.u32 %v1204, 2147483648
    %v1217 = vor.u32 1.1754944e-38, %v1216
    %v1218 = vsel %vm1215, %v1217, %v1213
    %v1219 = vmul.f32 1.0, %v1218
    %v1220 = vadd.f32 %v1112, %v48
    %v1221 = vmul.f32 %v1199, %v1220
    %v1222 = vadd.f32 %v1179, %v1221
    %v1223 = vtanh.pop %v1222
    %v1224 = vmul.f32 %v1219, %v945
    %v1225 = vsub.f32 1.0, %v1219
    %v1226 = vmul.f32 %v1225, %v1223
    %v1227 = vadd.f32 %v1224, %v1226
    %1228 = vmatpush.msra.mxu0 %v379
    %1229 = vmatpush.msra.mxu0 %v376
    %1230 = vmatpush.msra.mxu0 %v373
    %1231 = vmatpush.msra.mxu0 %v370
    %1232 = vmatpush.msra.mxu0 %v367
    %1233 = vmatpush.msra.mxu0 %v364
    %1234 = vmatpush.msra.mxu0 %v361
    %1235 = vmatpush.msra.mxu0 %v358
    %1236 = vmatpush.msra.mxu0 %v355
    %1237 = vmatpush.msra.mxu0 %v352
    %1238 = vmatpush.msra.mxu0 %v349
    %1239 = vmatpush.msra.mxu0 %v346
    %1240 = vmatpush.msra.mxu0 %v343
    %1241 = vmatpush.msra.mxu0 %v340
    %1242 = vmatpush.msra.mxu0 %v337
    %1243 = vmatpush.msra.mxu0 %v334
    %1244 = vmatmul.f32.gmra.mxu0 %v1227
    %v1245 = vpop.f32.mrf.mxu0
    %v1246 = vadd.f32 %v52, %v1245
    %1247 = vdwg.mxu0
    %1248 = vmatpush.msra.mxu0 %v380
    %1249 = vmatpush.msra.mxu0 %v377
    %1250 = vmatpush.msra.mxu0 %v374
    %1251 = vmatpush.msra.mxu0 %v371
    %1252 = vmatpush.msra.mxu0 %v368
    %1253 = vmatpush.msra.mxu0 %v365
    %1254 = vmatpush.msra.mxu0 %v362
    %1255 = vmatpush.msra.mxu0 %v359
    %1256 = vmatpush.msra.mxu0 %v356
    %1257 = vmatpush.msra.mxu0 %v353
    %1258 = vmatpush.msra.mxu0 %v350
    %1259 = vmatpush.msra.mxu0 %v347
    %1260 = vmatpush.msra.mxu0 %v344
    %1261 = vmatpush.msra.mxu0 %v341
    %1262 = vmatpush.msra.mxu0 %v338
    %1263 = vmatpush.msra.mxu0 %v335
    %1264 = vmatmul.f32.gmra.mxu0 %v1227
    %v1265 = vpop.f32.mrf.mxu0
    %v1266 = vadd.f32 %v53, %v1265
    %1267 = vdwg.mxu0
    %1268 = vmatpush.msra.mxu0 %v381
    %1269 = vmatpush.msra.mxu0 %v378
    %1270 = vmatpush.msra.mxu0 %v375
    %1271 = vmatpush.msra.mxu0 %v372
    %1272 = vmatpush.msra.mxu0 %v369
    %1273 = vmatpush.msra.mxu0 %v366
    %1274 = vmatpush.msra.mxu0 %v363
    %1275 = vmatpush.msra.mxu0 %v360
    %1276 = vmatpush.msra.mxu0 %v357
    %1277 = vmatpush.msra.mxu0 %v354
    %1278 = vmatpush.msra.mxu0 %v351
    %1279 = vmatpush.msra.mxu0 %v348
    %1280 = vmatpush.msra.mxu0 %v345
    %1281 = vmatpush.msra.mxu0 %v342
    %1282 = vmatpush.msra.mxu0 %v339
    %1283 = vmatpush.msra.mxu0 %v336
    %1284 = vmatmul.f32.gmra.mxu0 %v1227
    %v1285 = vpop.f32.mrf.mxu0
    %v1286 = vadd.f32 %v54, %v1285
    %1287 = vdwg.mxu0
    %v1288 = vadd.f32 %v1246, %v1132
    %v1289 = vxor.u32 %v1288, 2147483648
    %v1290 = vmul.f32 %v1289, 1.442695
    %v1291 = vpow.pop %v1290
    %v1292 = vadd.f32 %v1291, 1.0
    %v1293 = vrcp.pop %v1292
    %v1294 = vmul.f32 %v1292, %v1293
    %v1295 = vsub.f32 1.0, %v1294
    %v1296 = vmul.f32 %v1293, %v1295
    %v1297 = vadd.f32 %v1293, %v1296
    %vm1298 = vweird.f32 %v1292
    %vm1299 = vweird.f32 %v1293
    %vm1300 = vmor %vm1298, %vm1299
    %v1301 = vsel %vm1300, %v1293, %v1297
    %v1302 = vand.u32 2147483647, %v1292
    %vm1303 = vcmp.eq.f32.partialorder %v1302, 8.507059e+37
    %v1304 = vand.u32 %v1292, 2147483648
    %v1305 = vor.u32 1.1754944e-38, %v1304
    %v1306 = vsel %vm1303, %v1305, %v1301
    %v1307 = vmul.f32 1.0, %v1306
    %v1308 = vadd.f32 %v1266, %v1152
    %v1309 = vxor.u32 %v1308, 2147483648
    %v1310 = vmul.f32 %v1309, 1.442695
    %v1311 = vpow.pop %v1310
    %v1312 = vadd.f32 %v1311, 1.0
    %v1313 = vrcp.pop %v1312
    %v1314 = vmul.f32 %v1312, %v1313
    %v1315 = vsub.f32 1.0, %v1314
    %v1316 = vmul.f32 %v1313, %v1315
    %v1317 = vadd.f32 %v1313, %v1316
    %vm1318 = vweird.f32 %v1312
    %vm1319 = vweird.f32 %v1313
    %vm1320 = vmor %vm1318, %vm1319
    %v1321 = vsel %vm1320, %v1313, %v1317
    %v1322 = vand.u32 2147483647, %v1312
    %vm1323 = vcmp.eq.f32.partialorder %v1322, 8.507059e+37
    %v1324 = vand.u32 %v1312, 2147483648
    %v1325 = vor.u32 1.1754944e-38, %v1324
    %v1326 = vsel %vm1323, %v1325, %v1321
    %v1327 = vmul.f32 1.0, %v1326
    %v1328 = vadd.f32 %v1172, %v60
    %v1329 = vmul.f32 %v1307, %v1328
    %v1330 = vadd.f32 %v1286, %v1329
    %v1331 = vtanh.pop %v1330
    %v1332 = vmul.f32 %v1327, %v1053
    %v1333 = vsub.f32 1.0, %v1327
    %v1334 = vmul.f32 %v1333, %v1331
    %v1335 = vadd.f32 %v1332, %v1334
    %1336 = vmatpush.msra.mxu0 %v110
    %1337 = vmatpush.msra.mxu0 %v107
    %1338 = vmatpush.msra.mxu0 %v104
    %1339 = vmatpush.msra.mxu0 %v101
    %1340 = vmatpush.msra.mxu0 %v98
    %1341 = vmatpush.msra.mxu0 %v95
    %1342 = vmatpush.msra.mxu0 %v92
    %1343 = vmatpush.msra.mxu0 %v89
    %1344 = vmatpush.msra.mxu0 %v86
    %1345 = vmatpush.msra.mxu0 %v83
    %1346 = vmatpush.msra.mxu0 %v80
    %1347 = vmatpush.msra.mxu0 %v77
    %1348 = vmatpush.msra.mxu0 %v74
    %1349 = vmatpush.msra.mxu0 %v71
    %1350 = vmatpush.msra.mxu0 %v68
    %1351 = vmatpush.msra.mxu0 %v65
    %1352 = vmatmul.f32.gmra.mxu0 %v1227
    %v1353 = vpop.f32.mrf.mxu0
    %v1354 = vadd.f32 0.0, %v1353
    %1355 = vdwg.mxu0
    %1356 = vmatpush.msra.mxu0 %v111
    %1357 = vmatpush.msra.mxu0 %v108
    %1358 = vmatpush.msra.mxu0 %v105
    %1359 = vmatpush.msra.mxu0 %v102
    %1360 = vmatpush.msra.mxu0 %v99
    %1361 = vmatpush.msra.mxu0 %v96
    %1362 = vmatpush.msra.mxu0 %v93
    %1363 = vmatpush.msra.mxu0 %v90
    %1364 = vmatpush.msra.mxu0 %v87
    %1365 = vmatpush.msra.mxu0 %v84
    %1366 = vmatpush.msra.mxu0 %v81
    %1367 = vmatpush.msra.mxu0 %v78
    %1368 = vmatpush.msra.mxu0 %v75
    %1369 = vmatpush.msra.mxu0 %v72
    %1370 = vmatpush.msra.mxu0 %v69
    %1371 = vmatpush.msra.mxu0 %v66
    %1372 = vmatmul.f32.gmra.mxu0 %v1227
    %v1373 = vpop.f32.mrf.mxu0
    %v1374 = vadd.f32 0.0, %v1373
    %1375 = vdwg.mxu0
    %1376 = vmatpush.msra.mxu0 %v112
    %1377 = vmatpush.msra.mxu0 %v109
    %1378 = vmatpush.msra.mxu0 %v106
    %1379 = vmatpush.msra.mxu0 %v103
    %1380 = vmatpush.msra.mxu0 %v100
    %1381 = vmatpush.msra.mxu0 %v97
    %1382 = vmatpush.msra.mxu0 %v94
    %1383 = vmatpush.msra.mxu0 %v91
    %1384 = vmatpush.msra.mxu0 %v88
    %1385 = vmatpush.msra.mxu0 %v85
    %1386 = vmatpush.msra.mxu0 %v82
    %1387 = vmatpush.msra.mxu0 %v79
    %1388 = vmatpush.msra.mxu0 %v76
    %1389 = vmatpush.msra.mxu0 %v73
    %1390 = vmatpush.msra.mxu0 %v70
    %1391 = vmatpush.msra.mxu0 %v67
    %1392 = vmatmul.f32.gmra.mxu0 %v1227
    %v1393 = vpop.f32.mrf.mxu0
    %v1394 = vadd.f32 0.0, %v1393
    %1395 = vdwg.mxu0
    %1396 = vmatpush.msra.mxu0 %v218
    %1397 = vmatpush.msra.mxu0 %v215
    %1398 = vmatpush.msra.mxu0 %v212
    %1399 = vmatpush.msra.mxu0 %v209
    %1400 = vmatpush.msra.mxu0 %v206
    %1401 = vmatpush.msra.mxu0 %v203
    %1402 = vmatpush.msra.mxu0 %v200
    %1403 = vmatpush.msra.mxu0 %v197
    %1404 = vmatpush.msra.mxu0 %v194
    %1405 = vmatpush.msra.mxu0 %v191
    %1406 = vmatpush.msra.mxu0 %v188
    %1407 = vmatpush.msra.mxu0 %v185
    %1408 = vmatpush.msra.mxu0 %v182
    %1409 = vmatpush.msra.mxu0 %v179
    %1410 = vmatpush.msra.mxu0 %v176
    %1411 = vmatpush.msra.mxu0 %v173
    %1412 = vmatmul.f32.gmra.mxu0 %v1335
    %v1413 = vpop.f32.mrf.mxu0
    %v1414 = vadd.f32 0.0, %v1413
    %1415 = vdwg.mxu0
    %1416 = vmatpush.msra.mxu0 %v219
    %1417 = vmatpush.msra.mxu0 %v216
    %1418 = vmatpush.msra.mxu0 %v213
    %1419 = vmatpush.msra.mxu0 %v210
    %1420 = vmatpush.msra.mxu0 %v207
    %1421 = vmatpush.msra.mxu0 %v204
    %1422 = vmatpush.msra.mxu0 %v201
    %1423 = vmatpush.msra.mxu0 %v198
    %1424 = vmatpush.msra.mxu0 %v195
    %1425 = vmatpush.msra.mxu0 %v192
    %1426 = vmatpush.msra.mxu0 %v189
    %1427 = vmatpush.msra.mxu0 %v186
    %1428 = vmatpush.msra.mxu0 %v183
    %1429 = vmatpush.msra.mxu0 %v180
    %1430 = vmatpush.msra.mxu0 %v177
    %1431 = vmatpush.msra.mxu0 %v174
    %1432 = vmatmul.f32.gmra.mxu0 %v1335
    %v1433 = vpop.f32.mrf.mxu0
    %v1434 = vadd.f32 0.0, %v1433
    %1435 = vdwg.mxu0
    %1436 = vmatpush.msra.mxu0 %v220
    %1437 = vmatpush.msra.mxu0 %v217
    %1438 = vmatpush.msra.mxu0 %v214
    %1439 = vmatpush.msra.mxu0 %v211
    %1440 = vmatpush.msra.mxu0 %v208
    %1441 = vmatpush.msra.mxu0 %v205
    %1442 = vmatpush.msra.mxu0 %v202
    %1443 = vmatpush.msra.mxu0 %v199
    %1444 = vmatpush.msra.mxu0 %v196
    %1445 = vmatpush.msra.mxu0 %v193
    %1446 = vmatpush.msra.mxu0 %v190
    %1447 = vmatpush.msra.mxu0 %v187
    %1448 = vmatpush.msra.mxu0 %v184
    %1449 = vmatpush.msra.mxu0 %v181
    %1450 = vmatpush.msra.mxu0 %v178
    %1451 = vmatpush.msra.mxu0 %v175
    %1452 = vmatmul.f32.gmra.mxu0 %v1335
    %v1453 = vpop.f32.mrf.mxu0
    %v1454 = vadd.f32 0.0, %v1453
    %1455 = vdwg.mxu0
    %s1456 = scalar_lea.vmem %s0, 48
    %v1457 = vld [vmem:[%s1456] sm:$0xff]
    %v1458 = vld [vmem:[%s1456 + $0x8] sm:$0xf]
    %v1459 = vunpack.c.l.bf16 %v1457
    %v1460 = vunpack.c.h.bf16 %v1457
    %v1461 = vunpack.c.l.bf16 %v1458
    %v1462 = vadd.f32 %v1459, %v1354
    %v1463 = vxor.u32 %v1462, 2147483648
    %v1464 = vmul.f32 %v1463, 1.442695
    %v1465 = vpow.pop %v1464
    %v1466 = vadd.f32 %v1465, 1.0
    %v1467 = vrcp.pop %v1466
    %v1468 = vmul.f32 %v1466, %v1467
    %v1469 = vsub.f32 1.0, %v1468
    %v1470 = vmul.f32 %v1467, %v1469
    %v1471 = vadd.f32 %v1467, %v1470
    %vm1472 = vweird.f32 %v1466
    %vm1473 = vweird.f32 %v1467
    %vm1474 = vmor %vm1472, %vm1473
    %v1475 = vsel %vm1474, %v1467, %v1471
    %v1476 = vand.u32 2147483647, %v1466
    %vm1477 = vcmp.eq.f32.partialorder %v1476, 8.507059e+37
    %v1478 = vand.u32 %v1466, 2147483648
    %v1479 = vor.u32 1.1754944e-38, %v1478
    %v1480 = vsel %vm1477, %v1479, %v1475
    %v1481 = vmul.f32 1.0, %v1480
    %v1482 = vadd.f32 %v1460, %v1374
    %v1483 = vxor.u32 %v1482, 2147483648
    %v1484 = vmul.f32 %v1483, 1.442695
    %v1485 = vpow.pop %v1484
    %v1486 = vadd.f32 %v1485, 1.0
    %v1487 = vrcp.pop %v1486
    %v1488 = vmul.f32 %v1486, %v1487
    %v1489 = vsub.f32 1.0, %v1488
    %v1490 = vmul.f32 %v1487, %v1489
    %v1491 = vadd.f32 %v1487, %v1490
    %vm1492 = vweird.f32 %v1486
    %vm1493 = vweird.f32 %v1487
    %vm1494 = vmor %vm1492, %vm1493
    %v1495 = vsel %vm1494, %v1487, %v1491
    %v1496 = vand.u32 2147483647, %v1486
    %vm1497 = vcmp.eq.f32.partialorder %v1496, 8.507059e+37
    %v1498 = vand.u32 %v1486, 2147483648
    %v1499 = vor.u32 1.1754944e-38, %v1498
    %v1500 = vsel %vm1497, %v1499, %v1495
    %v1501 = vmul.f32 1.0, %v1500
    %v1502 = vadd.f32 %v1394, %v48
    %v1503 = vmul.f32 %v1481, %v1502
    %v1504 = vadd.f32 %v1461, %v1503
    %v1505 = vtanh.pop %v1504
    %v1506 = vmul.f32 %v1501, %v1227
    %v1507 = vsub.f32 1.0, %v1501
    %v1508 = vmul.f32 %v1507, %v1505
    %v1509 = vadd.f32 %v1506, %v1508
    %1510 = vmatpush.msra.mxu0 %v379
    %1511 = vmatpush.msra.mxu0 %v376
    %1512 = vmatpush.msra.mxu0 %v373
    %1513 = vmatpush.msra.mxu0 %v370
    %1514 = vmatpush.msra.mxu0 %v367
    %1515 = vmatpush.msra.mxu0 %v364
    %1516 = vmatpush.msra.mxu0 %v361
    %1517 = vmatpush.msra.mxu0 %v358
    %1518 = vmatpush.msra.mxu0 %v355
    %1519 = vmatpush.msra.mxu0 %v352
    %1520 = vmatpush.msra.mxu0 %v349
    %1521 = vmatpush.msra.mxu0 %v346
    %1522 = vmatpush.msra.mxu0 %v343
    %1523 = vmatpush.msra.mxu0 %v340
    %1524 = vmatpush.msra.mxu0 %v337
    %1525 = vmatpush.msra.mxu0 %v334
    %1526 = vmatmul.f32.gmra.mxu0 %v1509
    %v1527 = vpop.f32.mrf.mxu0
    %v1528 = vadd.f32 %v52, %v1527
    %1529 = vdwg.mxu0
    %1530 = vmatpush.msra.mxu0 %v380
    %1531 = vmatpush.msra.mxu0 %v377
    %1532 = vmatpush.msra.mxu0 %v374
    %1533 = vmatpush.msra.mxu0 %v371
    %1534 = vmatpush.msra.mxu0 %v368
    %1535 = vmatpush.msra.mxu0 %v365
    %1536 = vmatpush.msra.mxu0 %v362
    %1537 = vmatpush.msra.mxu0 %v359
    %1538 = vmatpush.msra.mxu0 %v356
    %1539 = vmatpush.msra.mxu0 %v353
    %1540 = vmatpush.msra.mxu0 %v350
    %1541 = vmatpush.msra.mxu0 %v347
    %1542 = vmatpush.msra.mxu0 %v344
    %1543 = vmatpush.msra.mxu0 %v341
    %1544 = vmatpush.msra.mxu0 %v338
    %1545 = vmatpush.msra.mxu0 %v335
    %1546 = vmatmul.f32.gmra.mxu0 %v1509
    %v1547 = vpop.f32.mrf.mxu0
    %v1548 = vadd.f32 %v53, %v1547
    %1549 = vdwg.mxu0
    %1550 = vmatpush.msra.mxu0 %v381
    %1551 = vmatpush.msra.mxu0 %v378
    %1552 = vmatpush.msra.mxu0 %v375
    %1553 = vmatpush.msra.mxu0 %v372
    %1554 = vmatpush.msra.mxu0 %v369
    %1555 = vmatpush.msra.mxu0 %v366
    %1556 = vmatpush.msra.mxu0 %v363
    %1557 = vmatpush.msra.mxu0 %v360
    %1558 = vmatpush.msra.mxu0 %v357
    %1559 = vmatpush.msra.mxu0 %v354
    %1560 = vmatpush.msra.mxu0 %v351
    %1561 = vmatpush.msra.mxu0 %v348
    %1562 = vmatpush.msra.mxu0 %v345
    %1563 = vmatpush.msra.mxu0 %v342
    %1564 = vmatpush.msra.mxu0 %v339
    %1565 = vmatpush.msra.mxu0 %v336
    %1566 = vmatmul.f32.gmra.mxu0 %v1509
    %v1567 = vpop.f32.mrf.mxu0
    %v1568 = vadd.f32 %v54, %v1567
    %1569 = vdwg.mxu0
    %v1570 = vadd.f32 %v1528, %v1414
    %v1571 = vxor.u32 %v1570, 2147483648
    %v1572 = vmul.f32 %v1571, 1.442695
    %v1573 = vpow.pop %v1572
    %v1574 = vadd.f32 %v1573, 1.0
    %v1575 = vrcp.pop %v1574
    %v1576 = vmul.f32 %v1574, %v1575
    %v1577 = vsub.f32 1.0, %v1576
    %v1578 = vmul.f32 %v1575, %v1577
    %v1579 = vadd.f32 %v1575, %v1578
    %vm1580 = vweird.f32 %v1574
    %vm1581 = vweird.f32 %v1575
    %vm1582 = vmor %vm1580, %vm1581
    %v1583 = vsel %vm1582, %v1575, %v1579
    %v1584 = vand.u32 2147483647, %v1574
    %vm1585 = vcmp.eq.f32.partialorder %v1584, 8.507059e+37
    %v1586 = vand.u32 %v1574, 2147483648
    %v1587 = vor.u32 1.1754944e-38, %v1586
    %v1588 = vsel %vm1585, %v1587, %v1583
    %v1589 = vmul.f32 1.0, %v1588
    %v1590 = vadd.f32 %v1548, %v1434
    %v1591 = vxor.u32 %v1590, 2147483648
    %v1592 = vmul.f32 %v1591, 1.442695
    %v1593 = vpow.pop %v1592
    %v1594 = vadd.f32 %v1593, 1.0
    %v1595 = vrcp.pop %v1594
    %v1596 = vmul.f32 %v1594, %v1595
    %v1597 = vsub.f32 1.0, %v1596
    %v1598 = vmul.f32 %v1595, %v1597
    %v1599 = vadd.f32 %v1595, %v1598
    %vm1600 = vweird.f32 %v1594
    %vm1601 = vweird.f32 %v1595
    %vm1602 = vmor %vm1600, %vm1601
    %v1603 = vsel %vm1602, %v1595, %v1599
    %v1604 = vand.u32 2147483647, %v1594
    %vm1605 = vcmp.eq.f32.partialorder %v1604, 8.507059e+37
    %v1606 = vand.u32 %v1594, 2147483648
    %v1607 = vor.u32 1.1754944e-38, %v1606
    %v1608 = vsel %vm1605, %v1607, %v1603
    %v1609 = vmul.f32 1.0, %v1608
    %v1610 = vadd.f32 %v1454, %v60
    %v1611 = vmul.f32 %v1589, %v1610
    %v1612 = vadd.f32 %v1568, %v1611
    %v1613 = vtanh.pop %v1612
    %v1614 = vmul.f32 %v1609, %v1335
    %v1615 = vsub.f32 1.0, %v1609
    %v1616 = vmul.f32 %v1615, %v1613
    %v1617 = vadd.f32 %v1614, %v1616
    %1618 = vmatpush.msra.mxu0 %v110
    %1619 = vmatpush.msra.mxu0 %v107
    %1620 = vmatpush.msra.mxu0 %v104
    %1621 = vmatpush.msra.mxu0 %v101
    %1622 = vmatpush.msra.mxu0 %v98
    %1623 = vmatpush.msra.mxu0 %v95
    %1624 = vmatpush.msra.mxu0 %v92
    %1625 = vmatpush.msra.mxu0 %v89
    %1626 = vmatpush.msra.mxu0 %v86
    %1627 = vmatpush.msra.mxu0 %v83
    %1628 = vmatpush.msra.mxu0 %v80
    %1629 = vmatpush.msra.mxu0 %v77
    %1630 = vmatpush.msra.mxu0 %v74
    %1631 = vmatpush.msra.mxu0 %v71
    %1632 = vmatpush.msra.mxu0 %v68
    %1633 = vmatpush.msra.mxu0 %v65
    %1634 = vmatmul.f32.gmra.mxu0 %v1509
    %v1635 = vpop.f32.mrf.mxu0
    %v1636 = vadd.f32 0.0, %v1635
    %1637 = vdwg.mxu0
    %1638 = vmatpush.msra.mxu0 %v111
    %1639 = vmatpush.msra.mxu0 %v108
    %1640 = vmatpush.msra.mxu0 %v105
    %1641 = vmatpush.msra.mxu0 %v102
    %1642 = vmatpush.msra.mxu0 %v99
    %1643 = vmatpush.msra.mxu0 %v96
    %1644 = vmatpush.msra.mxu0 %v93
    %1645 = vmatpush.msra.mxu0 %v90
    %1646 = vmatpush.msra.mxu0 %v87
    %1647 = vmatpush.msra.mxu0 %v84
    %1648 = vmatpush.msra.mxu0 %v81
    %1649 = vmatpush.msra.mxu0 %v78
    %1650 = vmatpush.msra.mxu0 %v75
    %1651 = vmatpush.msra.mxu0 %v72
    %1652 = vmatpush.msra.mxu0 %v69
    %1653 = vmatpush.msra.mxu0 %v66
    %1654 = vmatmul.f32.gmra.mxu0 %v1509
    %v1655 = vpop.f32.mrf.mxu0
    %v1656 = vadd.f32 0.0, %v1655
    %1657 = vdwg.mxu0
    %1658 = vmatpush.msra.mxu0 %v112
    %1659 = vmatpush.msra.mxu0 %v109
    %1660 = vmatpush.msra.mxu0 %v106
    %1661 = vmatpush.msra.mxu0 %v103
    %1662 = vmatpush.msra.mxu0 %v100
    %1663 = vmatpush.msra.mxu0 %v97
    %1664 = vmatpush.msra.mxu0 %v94
    %1665 = vmatpush.msra.mxu0 %v91
    %1666 = vmatpush.msra.mxu0 %v88
    %1667 = vmatpush.msra.mxu0 %v85
    %1668 = vmatpush.msra.mxu0 %v82
    %1669 = vmatpush.msra.mxu0 %v79
    %1670 = vmatpush.msra.mxu0 %v76
    %1671 = vmatpush.msra.mxu0 %v73
    %1672 = vmatpush.msra.mxu0 %v70
    %1673 = vmatpush.msra.mxu0 %v67
    %1674 = vmatmul.f32.gmra.mxu0 %v1509
    %v1675 = vpop.f32.mrf.mxu0
    %v1676 = vadd.f32 0.0, %v1675
    %1677 = vdwg.mxu0
    %1678 = vmatpush.msra.mxu0 %v218
    %1679 = vmatpush.msra.mxu0 %v215
    %1680 = vmatpush.msra.mxu0 %v212
    %1681 = vmatpush.msra.mxu0 %v209
    %1682 = vmatpush.msra.mxu0 %v206
    %1683 = vmatpush.msra.mxu0 %v203
    %1684 = vmatpush.msra.mxu0 %v200
    %1685 = vmatpush.msra.mxu0 %v197
    %1686 = vmatpush.msra.mxu0 %v194
    %1687 = vmatpush.msra.mxu0 %v191
    %1688 = vmatpush.msra.mxu0 %v188
    %1689 = vmatpush.msra.mxu0 %v185
    %1690 = vmatpush.msra.mxu0 %v182
    %1691 = vmatpush.msra.mxu0 %v179
    %1692 = vmatpush.msra.mxu0 %v176
    %1693 = vmatpush.msra.mxu0 %v173
    %1694 = vmatmul.f32.gmra.mxu0 %v1617
    %v1695 = vpop.f32.mrf.mxu0
    %v1696 = vadd.f32 0.0, %v1695
    %1697 = vdwg.mxu0
    %1698 = vmatpush.msra.mxu0 %v219
    %1699 = vmatpush.msra.mxu0 %v216
    %1700 = vmatpush.msra.mxu0 %v213
    %1701 = vmatpush.msra.mxu0 %v210
    %1702 = vmatpush.msra.mxu0 %v207
    %1703 = vmatpush.msra.mxu0 %v204
    %1704 = vmatpush.msra.mxu0 %v201
    %1705 = vmatpush.msra.mxu0 %v198
    %1706 = vmatpush.msra.mxu0 %v195
    %1707 = vmatpush.msra.mxu0 %v192
    %1708 = vmatpush.msra.mxu0 %v189
    %1709 = vmatpush.msra.mxu0 %v186
    %1710 = vmatpush.msra.mxu0 %v183
    %1711 = vmatpush.msra.mxu0 %v180
    %1712 = vmatpush.msra.mxu0 %v177
    %1713 = vmatpush.msra.mxu0 %v174
    %1714 = vmatmul.f32.gmra.mxu0 %v1617
    %v1715 = vpop.f32.mrf.mxu0
    %v1716 = vadd.f32 0.0, %v1715
    %1717 = vdwg.mxu0
    %1718 = vmatpush.msra.mxu0 %v220
    %1719 = vmatpush.msra.mxu0 %v217
    %1720 = vmatpush.msra.mxu0 %v214
    %1721 = vmatpush.msra.mxu0 %v211
    %1722 = vmatpush.msra.mxu0 %v208
    %1723 = vmatpush.msra.mxu0 %v205
    %1724 = vmatpush.msra.mxu0 %v202
    %1725 = vmatpush.msra.mxu0 %v199
    %1726 = vmatpush.msra.mxu0 %v196
    %1727 = vmatpush.msra.mxu0 %v193
    %1728 = vmatpush.msra.mxu0 %v190
    %1729 = vmatpush.msra.mxu0 %v187
    %1730 = vmatpush.msra.mxu0 %v184
    %1731 = vmatpush.msra.mxu0 %v181
    %1732 = vmatpush.msra.mxu0 %v178
    %1733 = vmatpush.msra.mxu0 %v175
    %1734 = vmatmul.f32.gmra.mxu0 %v1617
    %v1735 = vpop.f32.mrf.mxu0
    %v1736 = vadd.f32 0.0, %v1735
    %1737 = vdwg.mxu0
    %s1738 = scalar_lea.vmem %s0, 60
    %v1739 = vld [vmem:[%s1738] sm:$0xff]
    %v1740 = vld [vmem:[%s1738 + $0x8] sm:$0xf]
    %v1741 = vunpack.c.l.bf16 %v1739
    %v1742 = vunpack.c.h.bf16 %v1739
    %v1743 = vunpack.c.l.bf16 %v1740
    %v1744 = vadd.f32 %v1741, %v1636
    %v1745 = vxor.u32 %v1744, 2147483648
    %v1746 = vmul.f32 %v1745, 1.442695
    %v1747 = vpow.pop %v1746
    %v1748 = vadd.f32 %v1747, 1.0
    %v1749 = vrcp.pop %v1748
    %v1750 = vmul.f32 %v1748, %v1749
    %v1751 = vsub.f32 1.0, %v1750
    %v1752 = vmul.f32 %v1749, %v1751
    %v1753 = vadd.f32 %v1749, %v1752
    %vm1754 = vweird.f32 %v1748
    %vm1755 = vweird.f32 %v1749
    %vm1756 = vmor %vm1754, %vm1755
    %v1757 = vsel %vm1756, %v1749, %v1753
    %v1758 = vand.u32 2147483647, %v1748
    %vm1759 = vcmp.eq.f32.partialorder %v1758, 8.507059e+37
    %v1760 = vand.u32 %v1748, 2147483648
    %v1761 = vor.u32 1.1754944e-38, %v1760
    %v1762 = vsel %vm1759, %v1761, %v1757
    %v1763 = vmul.f32 1.0, %v1762
    %v1764 = vadd.f32 %v1742, %v1656
    %v1765 = vxor.u32 %v1764, 2147483648
    %v1766 = vmul.f32 %v1765, 1.442695
    %v1767 = vpow.pop %v1766
    %v1768 = vadd.f32 %v1767, 1.0
    %v1769 = vrcp.pop %v1768
    %v1770 = vmul.f32 %v1768, %v1769
    %v1771 = vsub.f32 1.0, %v1770
    %v1772 = vmul.f32 %v1769, %v1771
    %v1773 = vadd.f32 %v1769, %v1772
    %vm1774 = vweird.f32 %v1768
    %vm1775 = vweird.f32 %v1769
    %vm1776 = vmor %vm1774, %vm1775
    %v1777 = vsel %vm1776, %v1769, %v1773
    %v1778 = vand.u32 2147483647, %v1768
    %vm1779 = vcmp.eq.f32.partialorder %v1778, 8.507059e+37
    %v1780 = vand.u32 %v1768, 2147483648
    %v1781 = vor.u32 1.1754944e-38, %v1780
    %v1782 = vsel %vm1779, %v1781, %v1777
    %v1783 = vmul.f32 1.0, %v1782
    %v1784 = vadd.f32 %v1676, %v48
    %v1785 = vmul.f32 %v1763, %v1784
    %v1786 = vadd.f32 %v1743, %v1785
    %v1787 = vtanh.pop %v1786
    %v1788 = vmul.f32 %v1783, %v1509
    %v1789 = vsub.f32 1.0, %v1783
    %v1790 = vmul.f32 %v1789, %v1787
    %v1791 = vadd.f32 %v1788, %v1790
    %1792 = vmatpush.msra.mxu0 %v379
    %1793 = vmatpush.msra.mxu0 %v376
    %1794 = vmatpush.msra.mxu0 %v373
    %1795 = vmatpush.msra.mxu0 %v370
    %1796 = vmatpush.msra.mxu0 %v367
    %1797 = vmatpush.msra.mxu0 %v364
    %1798 = vmatpush.msra.mxu0 %v361
    %1799 = vmatpush.msra.mxu0 %v358
    %1800 = vmatpush.msra.mxu0 %v355
    %1801 = vmatpush.msra.mxu0 %v352
    %1802 = vmatpush.msra.mxu0 %v349
    %1803 = vmatpush.msra.mxu0 %v346
    %1804 = vmatpush.msra.mxu0 %v343
    %1805 = vmatpush.msra.mxu0 %v340
    %1806 = vmatpush.msra.mxu0 %v337
    %1807 = vmatpush.msra.mxu0 %v334
    %1808 = vmatmul.f32.gmra.mxu0 %v1791
    %v1809 = vpop.f32.mrf.mxu0
    %v1810 = vadd.f32 %v52, %v1809
    %1811 = vdwg.mxu0
    %1812 = vmatpush.msra.mxu0 %v380
    %1813 = vmatpush.msra.mxu0 %v377
    %1814 = vmatpush.msra.mxu0 %v374
    %1815 = vmatpush.msra.mxu0 %v371
    %1816 = vmatpush.msra.mxu0 %v368
    %1817 = vmatpush.msra.mxu0 %v365
    %1818 = vmatpush.msra.mxu0 %v362
    %1819 = vmatpush.msra.mxu0 %v359
    %1820 = vmatpush.msra.mxu0 %v356
    %1821 = vmatpush.msra.mxu0 %v353
    %1822 = vmatpush.msra.mxu0 %v350
    %1823 = vmatpush.msra.mxu0 %v347
    %1824 = vmatpush.msra.mxu0 %v344
    %1825 = vmatpush.msra.mxu0 %v341
    %1826 = vmatpush.msra.mxu0 %v338
    %1827 = vmatpush.msra.mxu0 %v335
    %1828 = vmatmul.f32.gmra.mxu0 %v1791
    %v1829 = vpop.f32.mrf.mxu0
    %v1830 = vadd.f32 %v53, %v1829
    %1831 = vdwg.mxu0
    %1832 = vmatpush.msra.mxu0 %v381
    %1833 = vmatpush.msra.mxu0 %v378
    %1834 = vmatpush.msra.mxu0 %v375
    %1835 = vmatpush.msra.mxu0 %v372
    %1836 = vmatpush.msra.mxu0 %v369
    %1837 = vmatpush.msra.mxu0 %v366
    %1838 = vmatpush.msra.mxu0 %v363
    %1839 = vmatpush.msra.mxu0 %v360
    %1840 = vmatpush.msra.mxu0 %v357
    %1841 = vmatpush.msra.mxu0 %v354
    %1842 = vmatpush.msra.mxu0 %v351
    %1843 = vmatpush.msra.mxu0 %v348
    %1844 = vmatpush.msra.mxu0 %v345
    %1845 = vmatpush.msra.mxu0 %v342
    %1846 = vmatpush.msra.mxu0 %v339
    %1847 = vmatpush.msra.mxu0 %v336
    %1848 = vmatmul.f32.gmra.mxu0 %v1791
    %v1849 = vpop.f32.mrf.mxu0
    %v1850 = vadd.f32 %v54, %v1849
    %1851 = vdwg.mxu0
    %v1852 = vadd.f32 %v1810, %v1696
    %v1853 = vxor.u32 %v1852, 2147483648
    %v1854 = vmul.f32 %v1853, 1.442695
    %v1855 = vpow.pop %v1854
    %v1856 = vadd.f32 %v1855, 1.0
    %v1857 = vrcp.pop %v1856
    %v1858 = vmul.f32 %v1856, %v1857
    %v1859 = vsub.f32 1.0, %v1858
    %v1860 = vmul.f32 %v1857, %v1859
    %v1861 = vadd.f32 %v1857, %v1860
    %vm1862 = vweird.f32 %v1856
    %vm1863 = vweird.f32 %v1857
    %vm1864 = vmor %vm1862, %vm1863
    %v1865 = vsel %vm1864, %v1857, %v1861
    %v1866 = vand.u32 2147483647, %v1856
    %vm1867 = vcmp.eq.f32.partialorder %v1866, 8.507059e+37
    %v1868 = vand.u32 %v1856, 2147483648
    %v1869 = vor.u32 1.1754944e-38, %v1868
    %v1870 = vsel %vm1867, %v1869, %v1865
    %v1871 = vmul.f32 1.0, %v1870
    %v1872 = vadd.f32 %v1830, %v1716
    %v1873 = vxor.u32 %v1872, 2147483648
    %v1874 = vmul.f32 %v1873, 1.442695
    %v1875 = vpow.pop %v1874
    %v1876 = vadd.f32 %v1875, 1.0
    %v1877 = vrcp.pop %v1876
    %v1878 = vmul.f32 %v1876, %v1877
    %v1879 = vsub.f32 1.0, %v1878
    %v1880 = vmul.f32 %v1877, %v1879
    %v1881 = vadd.f32 %v1877, %v1880
    %vm1882 = vweird.f32 %v1876
    %vm1883 = vweird.f32 %v1877
    %vm1884 = vmor %vm1882, %vm1883
    %v1885 = vsel %vm1884, %v1877, %v1881
    %v1886 = vand.u32 2147483647, %v1876
    %vm1887 = vcmp.eq.f32.partialorder %v1886, 8.507059e+37
    %v1888 = vand.u32 %v1876, 2147483648
    %v1889 = vor.u32 1.1754944e-38, %v1888
    %v1890 = vsel %vm1887, %v1889, %v1885
    %v1891 = vmul.f32 1.0, %v1890
    %v1892 = vadd.f32 %v1736, %v60
    %v1893 = vmul.f32 %v1871, %v1892
    %v1894 = vadd.f32 %v1850, %v1893
    %v1895 = vtanh.pop %v1894
    %v1896 = vmul.f32 %v1891, %v1617
    %v1897 = vsub.f32 1.0, %v1891
    %v1898 = vmul.f32 %v1897, %v1895
    %v1899 = vadd.f32 %v1896, %v1898
    %1900 = vmatpush.msra.mxu0 %v110
    %1901 = vmatpush.msra.mxu0 %v107
    %1902 = vmatpush.msra.mxu0 %v104
    %1903 = vmatpush.msra.mxu0 %v101
    %1904 = vmatpush.msra.mxu0 %v98
    %1905 = vmatpush.msra.mxu0 %v95
    %1906 = vmatpush.msra.mxu0 %v92
    %1907 = vmatpush.msra.mxu0 %v89
    %1908 = vmatpush.msra.mxu0 %v86
    %1909 = vmatpush.msra.mxu0 %v83
    %1910 = vmatpush.msra.mxu0 %v80
    %1911 = vmatpush.msra.mxu0 %v77
    %1912 = vmatpush.msra.mxu0 %v74
    %1913 = vmatpush.msra.mxu0 %v71
    %1914 = vmatpush.msra.mxu0 %v68
    %1915 = vmatpush.msra.mxu0 %v65
    %1916 = vmatmul.f32.gmra.mxu0 %v1791
    %v1917 = vpop.f32.mrf.mxu0
    %v1918 = vadd.f32 0.0, %v1917
    %1919 = vdwg.mxu0
    %1920 = vmatpush.msra.mxu0 %v111
    %1921 = vmatpush.msra.mxu0 %v108
    %1922 = vmatpush.msra.mxu0 %v105
    %1923 = vmatpush.msra.mxu0 %v102
    %1924 = vmatpush.msra.mxu0 %v99
    %1925 = vmatpush.msra.mxu0 %v96
    %1926 = vmatpush.msra.mxu0 %v93
    %1927 = vmatpush.msra.mxu0 %v90
    %1928 = vmatpush.msra.mxu0 %v87
    %1929 = vmatpush.msra.mxu0 %v84
    %1930 = vmatpush.msra.mxu0 %v81
    %1931 = vmatpush.msra.mxu0 %v78
    %1932 = vmatpush.msra.mxu0 %v75
    %1933 = vmatpush.msra.mxu0 %v72
    %1934 = vmatpush.msra.mxu0 %v69
    %1935 = vmatpush.msra.mxu0 %v66
    %1936 = vmatmul.f32.gmra.mxu0 %v1791
    %v1937 = vpop.f32.mrf.mxu0
    %v1938 = vadd.f32 0.0, %v1937
    %1939 = vdwg.mxu0
    %1940 = vmatpush.msra.mxu0 %v112
    %1941 = vmatpush.msra.mxu0 %v109
    %1942 = vmatpush.msra.mxu0 %v106
    %1943 = vmatpush.msra.mxu0 %v103
    %1944 = vmatpush.msra.mxu0 %v100
    %1945 = vmatpush.msra.mxu0 %v97
    %1946 = vmatpush.msra.mxu0 %v94
    %1947 = vmatpush.msra.mxu0 %v91
    %1948 = vmatpush.msra.mxu0 %v88
    %1949 = vmatpush.msra.mxu0 %v85
    %1950 = vmatpush.msra.mxu0 %v82
    %1951 = vmatpush.msra.mxu0 %v79
    %1952 = vmatpush.msra.mxu0 %v76
    %1953 = vmatpush.msra.mxu0 %v73
    %1954 = vmatpush.msra.mxu0 %v70
    %1955 = vmatpush.msra.mxu0 %v67
    %1956 = vmatmul.f32.gmra.mxu0 %v1791
    %v1957 = vpop.f32.mrf.mxu0
    %v1958 = vadd.f32 0.0, %v1957
    %1959 = vdwg.mxu0
    %1960 = vmatpush.msra.mxu0 %v218
    %1961 = vmatpush.msra.mxu0 %v215
    %1962 = vmatpush.msra.mxu0 %v212
    %1963 = vmatpush.msra.mxu0 %v209
    %1964 = vmatpush.msra.mxu0 %v206
    %1965 = vmatpush.msra.mxu0 %v203
    %1966 = vmatpush.msra.mxu0 %v200
    %1967 = vmatpush.msra.mxu0 %v197
    %1968 = vmatpush.msra.mxu0 %v194
    %1969 = vmatpush.msra.mxu0 %v191
    %1970 = vmatpush.msra.mxu0 %v188
    %1971 = vmatpush.msra.mxu0 %v185
    %1972 = vmatpush.msra.mxu0 %v182
    %1973 = vmatpush.msra.mxu0 %v179
    %1974 = vmatpush.msra.mxu0 %v176
    %1975 = vmatpush.msra.mxu0 %v173
    %1976 = vmatmul.f32.gmra.mxu0 %v1899
    %v1977 = vpop.f32.mrf.mxu0
    %v1978 = vadd.f32 0.0, %v1977
    %1979 = vdwg.mxu0
    %1980 = vmatpush.msra.mxu0 %v219
    %1981 = vmatpush.msra.mxu0 %v216
    %1982 = vmatpush.msra.mxu0 %v213
    %1983 = vmatpush.msra.mxu0 %v210
    %1984 = vmatpush.msra.mxu0 %v207
    %1985 = vmatpush.msra.mxu0 %v204
    %1986 = vmatpush.msra.mxu0 %v201
    %1987 = vmatpush.msra.mxu0 %v198
    %1988 = vmatpush.msra.mxu0 %v195
    %1989 = vmatpush.msra.mxu0 %v192
    %1990 = vmatpush.msra.mxu0 %v189
    %1991 = vmatpush.msra.mxu0 %v186
    %1992 = vmatpush.msra.mxu0 %v183
    %1993 = vmatpush.msra.mxu0 %v180
    %1994 = vmatpush.msra.mxu0 %v177
    %1995 = vmatpush.msra.mxu0 %v174
    %1996 = vmatmul.f32.gmra.mxu0 %v1899
    %v1997 = vpop.f32.mrf.mxu0
    %v1998 = vadd.f32 0.0, %v1997
    %1999 = vdwg.mxu0
    %2000 = vmatpush.msra.mxu0 %v220
    %2001 = vmatpush.msra.mxu0 %v217
    %2002 = vmatpush.msra.mxu0 %v214
    %2003 = vmatpush.msra.mxu0 %v211
    %2004 = vmatpush.msra.mxu0 %v208
    %2005 = vmatpush.msra.mxu0 %v205
    %2006 = vmatpush.msra.mxu0 %v202
    %2007 = vmatpush.msra.mxu0 %v199
    %2008 = vmatpush.msra.mxu0 %v196
    %2009 = vmatpush.msra.mxu0 %v193
    %2010 = vmatpush.msra.mxu0 %v190
    %2011 = vmatpush.msra.mxu0 %v187
    %2012 = vmatpush.msra.mxu0 %v184
    %2013 = vmatpush.msra.mxu0 %v181
    %2014 = vmatpush.msra.mxu0 %v178
    %2015 = vmatpush.msra.mxu0 %v175
    %2016 = vmatmul.f32.gmra.mxu0 %v1899
    %v2017 = vpop.f32.mrf.mxu0
    %v2018 = vadd.f32 0.0, %v2017
    %2019 = vdwg.mxu0
    %s2020 = scalar_lea.vmem %s0, 72
    %v2021 = vld [vmem:[%s2020] sm:$0xff]
    %v2022 = vld [vmem:[%s2020 + $0x8] sm:$0xf]
    %v2023 = vunpack.c.l.bf16 %v2021
    %v2024 = vunpack.c.h.bf16 %v2021
    %v2025 = vunpack.c.l.bf16 %v2022
    %v2026 = vadd.f32 %v2023, %v1918
    %v2027 = vxor.u32 %v2026, 2147483648
    %v2028 = vmul.f32 %v2027, 1.442695
    %v2029 = vpow.pop %v2028
    %v2030 = vadd.f32 %v2029, 1.0
    %v2031 = vrcp.pop %v2030
    %v2032 = vmul.f32 %v2030, %v2031
    %v2033 = vsub.f32 1.0, %v2032
    %v2034 = vmul.f32 %v2031, %v2033
    %v2035 = vadd.f32 %v2031, %v2034
    %vm2036 = vweird.f32 %v2030
    %vm2037 = vweird.f32 %v2031
    %vm2038 = vmor %vm2036, %vm2037
    %v2039 = vsel %vm2038, %v2031, %v2035
    %v2040 = vand.u32 2147483647, %v2030
    %vm2041 = vcmp.eq.f32.partialorder %v2040, 8.507059e+37
    %v2042 = vand.u32 %v2030, 2147483648
    %v2043 = vor.u32 1.1754944e-38, %v2042
    %v2044 = vsel %vm2041, %v2043, %v2039
    %v2045 = vmul.f32 1.0, %v2044
    %v2046 = vadd.f32 %v2024, %v1938
    %v2047 = vxor.u32 %v2046, 2147483648
    %v2048 = vmul.f32 %v2047, 1.442695
    %v2049 = vpow.pop %v2048
    %v2050 = vadd.f32 %v2049, 1.0
    %v2051 = vrcp.pop %v2050
    %v2052 = vmul.f32 %v2050, %v2051
    %v2053 = vsub.f32 1.0, %v2052
    %v2054 = vmul.f32 %v2051, %v2053
    %v2055 = vadd.f32 %v2051, %v2054
    %vm2056 = vweird.f32 %v2050
    %vm2057 = vweird.f32 %v2051
    %vm2058 = vmor %vm2056, %vm2057
    %v2059 = vsel %vm2058, %v2051, %v2055
    %v2060 = vand.u32 2147483647, %v2050
    %vm2061 = vcmp.eq.f32.partialorder %v2060, 8.507059e+37
    %v2062 = vand.u32 %v2050, 2147483648
    %v2063 = vor.u32 1.1754944e-38, %v2062
    %v2064 = vsel %vm2061, %v2063, %v2059
    %v2065 = vmul.f32 1.0, %v2064
    %v2066 = vadd.f32 %v1958, %v48
    %v2067 = vmul.f32 %v2045, %v2066
    %v2068 = vadd.f32 %v2025, %v2067
    %v2069 = vtanh.pop %v2068
    %v2070 = vmul.f32 %v2065, %v1791
    %v2071 = vsub.f32 1.0, %v2065
    %v2072 = vmul.f32 %v2071, %v2069
    %v2073 = vadd.f32 %v2070, %v2072
    %2074 = vmatpush.msra.mxu0 %v379
    %2075 = vmatpush.msra.mxu0 %v376
    %2076 = vmatpush.msra.mxu0 %v373
    %2077 = vmatpush.msra.mxu0 %v370
    %2078 = vmatpush.msra.mxu0 %v367
    %2079 = vmatpush.msra.mxu0 %v364
    %2080 = vmatpush.msra.mxu0 %v361
    %2081 = vmatpush.msra.mxu0 %v358
    %2082 = vmatpush.msra.mxu0 %v355
    %2083 = vmatpush.msra.mxu0 %v352
    %2084 = vmatpush.msra.mxu0 %v349
    %2085 = vmatpush.msra.mxu0 %v346
    %2086 = vmatpush.msra.mxu0 %v343
    %2087 = vmatpush.msra.mxu0 %v340
    %2088 = vmatpush.msra.mxu0 %v337
    %2089 = vmatpush.msra.mxu0 %v334
    %2090 = vmatmul.f32.gmra.mxu0 %v2073
    %v2091 = vpop.f32.mrf.mxu0
    %v2092 = vadd.f32 %v52, %v2091
    %2093 = vdwg.mxu0
    %2094 = vmatpush.msra.mxu0 %v380
    %2095 = vmatpush.msra.mxu0 %v377
    %2096 = vmatpush.msra.mxu0 %v374
    %2097 = vmatpush.msra.mxu0 %v371
    %2098 = vmatpush.msra.mxu0 %v368
    %2099 = vmatpush.msra.mxu0 %v365
    %2100 = vmatpush.msra.mxu0 %v362
    %2101 = vmatpush.msra.mxu0 %v359
    %2102 = vmatpush.msra.mxu0 %v356
    %2103 = vmatpush.msra.mxu0 %v353
    %2104 = vmatpush.msra.mxu0 %v350
    %2105 = vmatpush.msra.mxu0 %v347
    %2106 = vmatpush.msra.mxu0 %v344
    %2107 = vmatpush.msra.mxu0 %v341
    %2108 = vmatpush.msra.mxu0 %v338
    %2109 = vmatpush.msra.mxu0 %v335
    %2110 = vmatmul.f32.gmra.mxu0 %v2073
    %v2111 = vpop.f32.mrf.mxu0
    %v2112 = vadd.f32 %v53, %v2111
    %2113 = vdwg.mxu0
    %2114 = vmatpush.msra.mxu0 %v381
    %2115 = vmatpush.msra.mxu0 %v378
    %2116 = vmatpush.msra.mxu0 %v375
    %2117 = vmatpush.msra.mxu0 %v372
    %2118 = vmatpush.msra.mxu0 %v369
    %2119 = vmatpush.msra.mxu0 %v366
    %2120 = vmatpush.msra.mxu0 %v363
    %2121 = vmatpush.msra.mxu0 %v360
    %2122 = vmatpush.msra.mxu0 %v357
    %2123 = vmatpush.msra.mxu0 %v354
    %2124 = vmatpush.msra.mxu0 %v351
    %2125 = vmatpush.msra.mxu0 %v348
    %2126 = vmatpush.msra.mxu0 %v345
    %2127 = vmatpush.msra.mxu0 %v342
    %2128 = vmatpush.msra.mxu0 %v339
    %2129 = vmatpush.msra.mxu0 %v336
    %2130 = vmatmul.f32.gmra.mxu0 %v2073
    %v2131 = vpop.f32.mrf.mxu0
    %v2132 = vadd.f32 %v54, %v2131
    %2133 = vdwg.mxu0
    %v2134 = vadd.f32 %v2092, %v1978
    %v2135 = vxor.u32 %v2134, 2147483648
    %v2136 = vmul.f32 %v2135, 1.442695
    %v2137 = vpow.pop %v2136
    %v2138 = vadd.f32 %v2137, 1.0
    %v2139 = vrcp.pop %v2138
    %v2140 = vmul.f32 %v2138, %v2139
    %v2141 = vsub.f32 1.0, %v2140
    %v2142 = vmul.f32 %v2139, %v2141
    %v2143 = vadd.f32 %v2139, %v2142
    %vm2144 = vweird.f32 %v2138
    %vm2145 = vweird.f32 %v2139
    %vm2146 = vmor %vm2144, %vm2145
    %v2147 = vsel %vm2146, %v2139, %v2143
    %v2148 = vand.u32 2147483647, %v2138
    %vm2149 = vcmp.eq.f32.partialorder %v2148, 8.507059e+37
    %v2150 = vand.u32 %v2138, 2147483648
    %v2151 = vor.u32 1.1754944e-38, %v2150
    %v2152 = vsel %vm2149, %v2151, %v2147
    %v2153 = vmul.f32 1.0, %v2152
    %v2154 = vadd.f32 %v2112, %v1998
    %v2155 = vxor.u32 %v2154, 2147483648
    %v2156 = vmul.f32 %v2155, 1.442695
    %v2157 = vpow.pop %v2156
    %v2158 = vadd.f32 %v2157, 1.0
    %v2159 = vrcp.pop %v2158
    %v2160 = vmul.f32 %v2158, %v2159
    %v2161 = vsub.f32 1.0, %v2160
    %v2162 = vmul.f32 %v2159, %v2161
    %v2163 = vadd.f32 %v2159, %v2162
    %vm2164 = vweird.f32 %v2158
    %vm2165 = vweird.f32 %v2159
    %vm2166 = vmor %vm2164, %vm2165
    %v2167 = vsel %vm2166, %v2159, %v2163
    %v2168 = vand.u32 2147483647, %v2158
    %vm2169 = vcmp.eq.f32.partialorder %v2168, 8.507059e+37
    %v2170 = vand.u32 %v2158, 2147483648
    %v2171 = vor.u32 1.1754944e-38, %v2170
    %v2172 = vsel %vm2169, %v2171, %v2167
    %v2173 = vmul.f32 1.0, %v2172
    %v2174 = vadd.f32 %v2018, %v60
    %v2175 = vmul.f32 %v2153, %v2174
    %v2176 = vadd.f32 %v2132, %v2175
    %v2177 = vtanh.pop %v2176
    %v2178 = vmul.f32 %v2173, %v1899
    %v2179 = vsub.f32 1.0, %v2173
    %v2180 = vmul.f32 %v2179, %v2177
    %v2181 = vadd.f32 %v2178, %v2180
    %2182 = vmatpush.msra.mxu0 %v110
    %2183 = vmatpush.msra.mxu0 %v107
    %2184 = vmatpush.msra.mxu0 %v104
    %2185 = vmatpush.msra.mxu0 %v101
    %2186 = vmatpush.msra.mxu0 %v98
    %2187 = vmatpush.msra.mxu0 %v95
    %2188 = vmatpush.msra.mxu0 %v92
    %2189 = vmatpush.msra.mxu0 %v89
    %2190 = vmatpush.msra.mxu0 %v86
    %2191 = vmatpush.msra.mxu0 %v83
    %2192 = vmatpush.msra.mxu0 %v80
    %2193 = vmatpush.msra.mxu0 %v77
    %2194 = vmatpush.msra.mxu0 %v74
    %2195 = vmatpush.msra.mxu0 %v71
    %2196 = vmatpush.msra.mxu0 %v68
    %2197 = vmatpush.msra.mxu0 %v65
    %2198 = vmatmul.f32.gmra.mxu0 %v2073
    %v2199 = vpop.f32.mrf.mxu0
    %v2200 = vadd.f32 0.0, %v2199
    %2201 = vdwg.mxu0
    %2202 = vmatpush.msra.mxu0 %v111
    %2203 = vmatpush.msra.mxu0 %v108
    %2204 = vmatpush.msra.mxu0 %v105
    %2205 = vmatpush.msra.mxu0 %v102
    %2206 = vmatpush.msra.mxu0 %v99
    %2207 = vmatpush.msra.mxu0 %v96
    %2208 = vmatpush.msra.mxu0 %v93
    %2209 = vmatpush.msra.mxu0 %v90
    %2210 = vmatpush.msra.mxu0 %v87
    %2211 = vmatpush.msra.mxu0 %v84
    %2212 = vmatpush.msra.mxu0 %v81
    %2213 = vmatpush.msra.mxu0 %v78
    %2214 = vmatpush.msra.mxu0 %v75
    %2215 = vmatpush.msra.mxu0 %v72
    %2216 = vmatpush.msra.mxu0 %v69
    %2217 = vmatpush.msra.mxu0 %v66
    %2218 = vmatmul.f32.gmra.mxu0 %v2073
    %v2219 = vpop.f32.mrf.mxu0
    %v2220 = vadd.f32 0.0, %v2219
    %2221 = vdwg.mxu0
    %2222 = vmatpush.msra.mxu0 %v112
    %2223 = vmatpush.msra.mxu0 %v109
    %2224 = vmatpush.msra.mxu0 %v106
    %2225 = vmatpush.msra.mxu0 %v103
    %2226 = vmatpush.msra.mxu0 %v100
    %2227 = vmatpush.msra.mxu0 %v97
    %2228 = vmatpush.msra.mxu0 %v94
    %2229 = vmatpush.msra.mxu0 %v91
    %2230 = vmatpush.msra.mxu0 %v88
    %2231 = vmatpush.msra.mxu0 %v85
    %2232 = vmatpush.msra.mxu0 %v82
    %2233 = vmatpush.msra.mxu0 %v79
    %2234 = vmatpush.msra.mxu0 %v76
    %2235 = vmatpush.msra.mxu0 %v73
    %2236 = vmatpush.msra.mxu0 %v70
    %2237 = vmatpush.msra.mxu0 %v67
    %2238 = vmatmul.f32.gmra.mxu0 %v2073
    %v2239 = vpop.f32.mrf.mxu0
    %v2240 = vadd.f32 0.0, %v2239
    %2241 = vdwg.mxu0
    %2242 = vmatpush.msra.mxu0 %v218
    %2243 = vmatpush.msra.mxu0 %v215
    %2244 = vmatpush.msra.mxu0 %v212
    %2245 = vmatpush.msra.mxu0 %v209
    %2246 = vmatpush.msra.mxu0 %v206
    %2247 = vmatpush.msra.mxu0 %v203
    %2248 = vmatpush.msra.mxu0 %v200
    %2249 = vmatpush.msra.mxu0 %v197
    %2250 = vmatpush.msra.mxu0 %v194
    %2251 = vmatpush.msra.mxu0 %v191
    %2252 = vmatpush.msra.mxu0 %v188
    %2253 = vmatpush.msra.mxu0 %v185
    %2254 = vmatpush.msra.mxu0 %v182
    %2255 = vmatpush.msra.mxu0 %v179
    %2256 = vmatpush.msra.mxu0 %v176
    %2257 = vmatpush.msra.mxu0 %v173
    %2258 = vmatmul.f32.gmra.mxu0 %v2181
    %v2259 = vpop.f32.mrf.mxu0
    %v2260 = vadd.f32 0.0, %v2259
    %2261 = vdwg.mxu0
    %2262 = vmatpush.msra.mxu0 %v219
    %2263 = vmatpush.msra.mxu0 %v216
    %2264 = vmatpush.msra.mxu0 %v213
    %2265 = vmatpush.msra.mxu0 %v210
    %2266 = vmatpush.msra.mxu0 %v207
    %2267 = vmatpush.msra.mxu0 %v204
    %2268 = vmatpush.msra.mxu0 %v201
    %2269 = vmatpush.msra.mxu0 %v198
    %2270 = vmatpush.msra.mxu0 %v195
    %2271 = vmatpush.msra.mxu0 %v192
    %2272 = vmatpush.msra.mxu0 %v189
    %2273 = vmatpush.msra.mxu0 %v186
    %2274 = vmatpush.msra.mxu0 %v183
    %2275 = vmatpush.msra.mxu0 %v180
    %2276 = vmatpush.msra.mxu0 %v177
    %2277 = vmatpush.msra.mxu0 %v174
    %2278 = vmatmul.f32.gmra.mxu0 %v2181
    %v2279 = vpop.f32.mrf.mxu0
    %v2280 = vadd.f32 0.0, %v2279
    %2281 = vdwg.mxu0
    %2282 = vmatpush.msra.mxu0 %v220
    %2283 = vmatpush.msra.mxu0 %v217
    %2284 = vmatpush.msra.mxu0 %v214
    %2285 = vmatpush.msra.mxu0 %v211
    %2286 = vmatpush.msra.mxu0 %v208
    %2287 = vmatpush.msra.mxu0 %v205
    %2288 = vmatpush.msra.mxu0 %v202
    %2289 = vmatpush.msra.mxu0 %v199
    %2290 = vmatpush.msra.mxu0 %v196
    %2291 = vmatpush.msra.mxu0 %v193
    %2292 = vmatpush.msra.mxu0 %v190
    %2293 = vmatpush.msra.mxu0 %v187
    %2294 = vmatpush.msra.mxu0 %v184
    %2295 = vmatpush.msra.mxu0 %v181
    %2296 = vmatpush.msra.mxu0 %v178
    %2297 = vmatpush.msra.mxu0 %v175
    %2298 = vmatmul.f32.gmra.mxu0 %v2181
    %v2299 = vpop.f32.mrf.mxu0
    %v2300 = vadd.f32 0.0, %v2299
    %2301 = vdwg.mxu0
    %s2302 = scalar_lea.vmem %s0, 84
    %v2303 = vld [vmem:[%s2302] sm:$0xff]
    %v2304 = vld [vmem:[%s2302 + $0x8] sm:$0xf]
    %v2305 = vunpack.c.l.bf16 %v2303
    %v2306 = vunpack.c.h.bf16 %v2303
    %v2307 = vunpack.c.l.bf16 %v2304
    %v2308 = vadd.f32 %v2305, %v2200
    %v2309 = vxor.u32 %v2308, 2147483648
    %v2310 = vmul.f32 %v2309, 1.442695
    %v2311 = vpow.pop %v2310
    %v2312 = vadd.f32 %v2311, 1.0
    %v2313 = vrcp.pop %v2312
    %v2314 = vmul.f32 %v2312, %v2313
    %v2315 = vsub.f32 1.0, %v2314
    %v2316 = vmul.f32 %v2313, %v2315
    %v2317 = vadd.f32 %v2313, %v2316
    %vm2318 = vweird.f32 %v2312
    %vm2319 = vweird.f32 %v2313
    %vm2320 = vmor %vm2318, %vm2319
    %v2321 = vsel %vm2320, %v2313, %v2317
    %v2322 = vand.u32 2147483647, %v2312
    %vm2323 = vcmp.eq.f32.partialorder %v2322, 8.507059e+37
    %v2324 = vand.u32 %v2312, 2147483648
    %v2325 = vor.u32 1.1754944e-38, %v2324
    %v2326 = vsel %vm2323, %v2325, %v2321
    %v2327 = vmul.f32 1.0, %v2326
    %v2328 = vadd.f32 %v2306, %v2220
    %v2329 = vxor.u32 %v2328, 2147483648
    %v2330 = vmul.f32 %v2329, 1.442695
    %v2331 = vpow.pop %v2330
    %v2332 = vadd.f32 %v2331, 1.0
    %v2333 = vrcp.pop %v2332
    %v2334 = vmul.f32 %v2332, %v2333
    %v2335 = vsub.f32 1.0, %v2334
    %v2336 = vmul.f32 %v2333, %v2335
    %v2337 = vadd.f32 %v2333, %v2336
    %vm2338 = vweird.f32 %v2332
    %vm2339 = vweird.f32 %v2333
    %vm2340 = vmor %vm2338, %vm2339
    %v2341 = vsel %vm2340, %v2333, %v2337
    %v2342 = vand.u32 2147483647, %v2332
    %vm2343 = vcmp.eq.f32.partialorder %v2342, 8.507059e+37
    %v2344 = vand.u32 %v2332, 2147483648
    %v2345 = vor.u32 1.1754944e-38, %v2344
    %v2346 = vsel %vm2343, %v2345, %v2341
    %v2347 = vmul.f32 1.0, %v2346
    %v2348 = vadd.f32 %v2240, %v48
    %v2349 = vmul.f32 %v2327, %v2348
    %v2350 = vadd.f32 %v2307, %v2349
    %v2351 = vtanh.pop %v2350
    %v2352 = vmul.f32 %v2347, %v2073
    %v2353 = vsub.f32 1.0, %v2347
    %v2354 = vmul.f32 %v2353, %v2351
    %v2355 = vadd.f32 %v2352, %v2354
    %2356 = vmatpush.msra.mxu0 %v379
    %2357 = vmatpush.msra.mxu0 %v376
    %2358 = vmatpush.msra.mxu0 %v373
    %2359 = vmatpush.msra.mxu0 %v370
    %2360 = vmatpush.msra.mxu0 %v367
    %2361 = vmatpush.msra.mxu0 %v364
    %2362 = vmatpush.msra.mxu0 %v361
    %2363 = vmatpush.msra.mxu0 %v358
    %2364 = vmatpush.msra.mxu0 %v355
    %2365 = vmatpush.msra.mxu0 %v352
    %2366 = vmatpush.msra.mxu0 %v349
    %2367 = vmatpush.msra.mxu0 %v346
    %2368 = vmatpush.msra.mxu0 %v343
    %2369 = vmatpush.msra.mxu0 %v340
    %2370 = vmatpush.msra.mxu0 %v337
    %2371 = vmatpush.msra.mxu0 %v334
    %2372 = vmatmul.f32.gmra.mxu0 %v2355
    %v2373 = vpop.f32.mrf.mxu0
    %v2374 = vadd.f32 %v52, %v2373
    %2375 = vdwg.mxu0
    %2376 = vmatpush.msra.mxu0 %v380
    %2377 = vmatpush.msra.mxu0 %v377
    %2378 = vmatpush.msra.mxu0 %v374
    %2379 = vmatpush.msra.mxu0 %v371
    %2380 = vmatpush.msra.mxu0 %v368
    %2381 = vmatpush.msra.mxu0 %v365
    %2382 = vmatpush.msra.mxu0 %v362
    %2383 = vmatpush.msra.mxu0 %v359
    %2384 = vmatpush.msra.mxu0 %v356
    %2385 = vmatpush.msra.mxu0 %v353
    %2386 = vmatpush.msra.mxu0 %v350
    %2387 = vmatpush.msra.mxu0 %v347
    %2388 = vmatpush.msra.mxu0 %v344
    %2389 = vmatpush.msra.mxu0 %v341
    %2390 = vmatpush.msra.mxu0 %v338
    %2391 = vmatpush.msra.mxu0 %v335
    %2392 = vmatmul.f32.gmra.mxu0 %v2355
    %v2393 = vpop.f32.mrf.mxu0
    %v2394 = vadd.f32 %v53, %v2393
    %2395 = vdwg.mxu0
    %2396 = vmatpush.msra.mxu0 %v381
    %2397 = vmatpush.msra.mxu0 %v378
    %2398 = vmatpush.msra.mxu0 %v375
    %2399 = vmatpush.msra.mxu0 %v372
    %2400 = vmatpush.msra.mxu0 %v369
    %2401 = vmatpush.msra.mxu0 %v366
    %2402 = vmatpush.msra.mxu0 %v363
    %2403 = vmatpush.msra.mxu0 %v360
    %2404 = vmatpush.msra.mxu0 %v357
    %2405 = vmatpush.msra.mxu0 %v354
    %2406 = vmatpush.msra.mxu0 %v351
    %2407 = vmatpush.msra.mxu0 %v348
    %2408 = vmatpush.msra.mxu0 %v345
    %2409 = vmatpush.msra.mxu0 %v342
    %2410 = vmatpush.msra.mxu0 %v339
    %2411 = vmatpush.msra.mxu0 %v336
    %2412 = vmatmul.f32.gmra.mxu0 %v2355
    %v2413 = vpop.f32.mrf.mxu0
    %v2414 = vadd.f32 %v54, %v2413
    %2415 = vdwg.mxu0
    %v2416 = vadd.f32 %v2374, %v2260
    %v2417 = vxor.u32 %v2416, 2147483648
    %v2418 = vmul.f32 %v2417, 1.442695
    %v2419 = vpow.pop %v2418
    %v2420 = vadd.f32 %v2419, 1.0
    %v2421 = vrcp.pop %v2420
    %v2422 = vmul.f32 %v2420, %v2421
    %v2423 = vsub.f32 1.0, %v2422
    %v2424 = vmul.f32 %v2421, %v2423
    %v2425 = vadd.f32 %v2421, %v2424
    %vm2426 = vweird.f32 %v2420
    %vm2427 = vweird.f32 %v2421
    %vm2428 = vmor %vm2426, %vm2427
    %v2429 = vsel %vm2428, %v2421, %v2425
    %v2430 = vand.u32 2147483647, %v2420
    %vm2431 = vcmp.eq.f32.partialorder %v2430, 8.507059e+37
    %v2432 = vand.u32 %v2420, 2147483648
    %v2433 = vor.u32 1.1754944e-38, %v2432
    %v2434 = vsel %vm2431, %v2433, %v2429
    %v2435 = vmul.f32 1.0, %v2434
    %v2436 = vadd.f32 %v2394, %v2280
    %v2437 = vxor.u32 %v2436, 2147483648
    %v2438 = vmul.f32 %v2437, 1.442695
    %v2439 = vpow.pop %v2438
    %v2440 = vadd.f32 %v2439, 1.0
    %v2441 = vrcp.pop %v2440
    %v2442 = vmul.f32 %v2440, %v2441
    %v2443 = vsub.f32 1.0, %v2442
    %v2444 = vmul.f32 %v2441, %v2443
    %v2445 = vadd.f32 %v2441, %v2444
    %vm2446 = vweird.f32 %v2440
    %vm2447 = vweird.f32 %v2441
    %vm2448 = vmor %vm2446, %vm2447
    %v2449 = vsel %vm2448, %v2441, %v2445
    %v2450 = vand.u32 2147483647, %v2440
    %vm2451 = vcmp.eq.f32.partialorder %v2450, 8.507059e+37
    %v2452 = vand.u32 %v2440, 2147483648
    %v2453 = vor.u32 1.1754944e-38, %v2452
    %v2454 = vsel %vm2451, %v2453, %v2449
    %v2455 = vmul.f32 1.0, %v2454
    %v2456 = vadd.f32 %v2300, %v60
    %v2457 = vmul.f32 %v2435, %v2456
    %v2458 = vadd.f32 %v2414, %v2457
    %v2459 = vtanh.pop %v2458
    %v2460 = vmul.f32 %v2455, %v2181
    %v2461 = vsub.f32 1.0, %v2455
    %v2462 = vmul.f32 %v2461, %v2459
    %v2463 = vadd.f32 %v2460, %v2462
    %2464 = vst [vmem:[#allocation2] sm:$0xff] %v2355
    %2465 = vst [vmem:[%s63] sm:$0xff] %v2463
    // Predicated region
    $region46: #{gru_pallas.1} parent=1 // pred_check
      %p2466 = pneg %p38
    $region47: #{gru_pallas.1} parent=1 // pred_check_branch
      %2468 = sbr.rel (%p2466) target = $region49
    $region48: #{gru_pallas.1} parent=1 // pred_region
      %v2469 = vld [vmem:[%s8] sm:$0xff]
      %v2470 = vld [vmem:[%s8 + $0x8] sm:$0xff]
      %v2471 = vld [vmem:[%s8 + $0x10] sm:$0xff]
      %v2472 = vld [vmem:[%s8 + $0x18] sm:$0xff]
      %v2473 = vld [vmem:[%s8 + $0x20] sm:$0xff]
      %v2474 = vld [vmem:[%s8 + $0x28] sm:$0xff]
      %v2475 = vld [vmem:[%s8 + $0x30] sm:$0xff]
      %v2476 = vld [vmem:[%s8 + $0x38] sm:$0xff]
      %v2477 = vld [vmem:[%s8 + $0x40] sm:$0xff]
      %v2478 = vld [vmem:[%s8 + $0x48] sm:$0xff]
      %v2479 = vld [vmem:[%s8 + $0x50] sm:$0xff]
      %v2480 = vld [vmem:[%s8 + $0x58] sm:$0xff]
      %v2481 = vld [vmem:[%s8 + $0x60] sm:$0xff]
      %v2482 = vld [vmem:[%s8 + $0x68] sm:$0xff]
      %v2483 = vld [vmem:[%s8 + $0x70] sm:$0xff]
      %v2484 = vld [vmem:[%s8 + $0x78] sm:$0xff]
      %v2485 = vld [vmem:[%s9] sm:$0x1]
      %v2487 = vperm.slane %v2485, 0
      %2489 = vmatpush.msra.mxu0 %v2484
      %2490 = vmatpush.msra.mxu0 %v2483
      %2491 = vmatpush.msra.mxu0 %v2482
      %2492 = vmatpush.msra.mxu0 %v2481
      %2493 = vmatpush.msra.mxu0 %v2480
      %2494 = vmatpush.msra.mxu0 %v2479
      %2495 = vmatpush.msra.mxu0 %v2478
      %2496 = vmatpush.msra.mxu0 %v2477
      %2497 = vmatpush.msra.mxu0 %v2476
      %2498 = vmatpush.msra.mxu0 %v2475
      %2499 = vmatpush.msra.mxu0 %v2474
      %2500 = vmatpush.msra.mxu0 %v2473
      %2501 = vmatpush.msra.mxu0 %v2472
      %2502 = vmatpush.msra.mxu0 %v2471
      %2503 = vmatpush.msra.mxu0 %v2470
      %2504 = vmatpush.msra.mxu0 %v2469
      %2505 = vmatmul.f32.gmra.mxu0 %v2463
      %v2506 = vpop.f32.mrf.mxu0
      %v2507 = vadd.f32 %v2487, %v2506
      %2508 = vdwg.mxu0
      %vm2509 = vcmask 31744
      %2510 = vst.msk [vmem:[%s10] sm:$0xff] %vm2509, %v2507
    $region49: #{gru_pallas.1} parent=1 // pred_fallthru
      _
    // Predicated region
    $region50: #{gru_pallas.1} parent=1 // pred_check
      _
    $region51: #{gru_pallas.1} parent=1 // pred_check_branch
      %2512 = sbr.rel (0) target = $region53
    $region52: #{gru_pallas.1} parent=1 // pred_region
      _
    $region53: #{gru_pallas.1} parent=1 // pred_fallthru
      _
    // Predicated region
    $region54: #{gru_pallas.1} parent=1 // pred_check
      _
    $region55: #{gru_pallas.1} parent=1 // pred_check_branch
      %2514 = sbr.rel (0) target = $region57
    $region56: #{gru_pallas.1} parent=1 // pred_region
      %2516 = vsyncadd [#allocation3], 0
      %s2517 = sshll.u32 [#allocation2], 4
      %s2518 = int_to_ptr.vmem [resolvable:$true] %s2517
      %s2519 = sshll.u32 %s11, 4
      %s2520 = int_to_ptr.hbm [resolvable:$true] %s2519
      %2525 = dma.vmem_to_hbm [thread:$0]  %s2518, 256, %s2520, [#allocation3], 128, 128, 8
    $region57: #{gru_pallas.1} parent=1 // pred_fallthru
      _
    // Predicated region
    $region58: #{gru_pallas.1} parent=1 // pred_check
      _
    $region59: #{gru_pallas.1} parent=1 // pred_check_branch
      %2527 = sbr.rel (0) target = $region61
    $region60: #{gru_pallas.1} parent=1 // pred_region
      _
    $region61: #{gru_pallas.1} parent=1 // pred_fallthru
      _
    // Predicated region
    $region62: #{gru_pallas.1} parent=1 // pred_check
      _
    $region63: #{gru_pallas.1} parent=1 // pred_check_branch
      %2529 = sbr.rel (0) target = $region65
    $region64: #{gru_pallas.1} parent=1 // pred_region
      %2531 = dma.done [#allocation3], 256
    $region65: #{gru_pallas.1} parent=1 // pred_fallthru
      _
    %2532 = vsyncpa [#allocation3], 1

</llo_original>
